<compile_context>
chip_gen: v5e
topology: v5e:2x2
jax: 0.10.0
libtpu: 0.0.40
codegen_flags: <defaults>
</compile_context>

<pallas_src>
from functools import partial

import jax
import jax.numpy as jnp
from jax.experimental import pallas as pl
from jax.experimental.pallas import tpu as pltpu

EPS = 1e-5


def _cond_crp_kernel(x_ref, w_ref, g_ref, b_ref, out_ref,
                     path_ref, padf_ref, padc_ref, *, H, W, C):
    """One grid step = one (batch element, stage) pair.

    Grid = (N, n_stages); the stage axis is sequential ("arbitrary") and the
    output block is resident across it, acting as the running `x` accumulator.
    `path_ref` (VMEM scratch) carries the `path` tensor between stages;
    `padf_ref` / `padc_ref` are persistent H-padded buffers whose zero borders
    are written once per batch element.
    """
    b = pl.program_id(0)
    s = pl.program_id(1)

    # Stage 0: x = relu(x_in); path = x; zero the persistent padding borders.
    @pl.when(s == 0)
    def _init():
        xr = jnp.maximum(x_ref[0], 0.0)
        out_ref[0] = xr
        path_ref[...] = xr
        padf_ref[0:2] = jnp.zeros((2, W, C), jnp.float32)
        padf_ref[H + 2:H + 4] = jnp.zeros((2, W, C), jnp.float32)
        padc_ref[0:1] = jnp.zeros((1, W, 3 * C), jnp.bfloat16)
        padc_ref[H + 1:H + 2] = jnp.zeros((1, W, 3 * C), jnp.bfloat16)

    path = path_ref[...]                       # (H, W, C) f32

    # ---- normalizer: conditional instance norm (two-pass variance) ----
    idx = s * pl.num_programs(0) + b           # flat (stage, batch) index
    g = g_ref[idx].reshape(1, 1, C)
    bet = b_ref[idx].reshape(1, 1, C)
    mean = jnp.mean(path, axis=(0, 1), keepdims=True)
    cen = path - mean
    var = jnp.mean(cen * cen, axis=(0, 1), keepdims=True)
    normed = cen * jax.lax.rsqrt(var + EPS) * g + bet

    # W-border masks, hoisted once and shared between pooling and conv.
    w_idx = jax.lax.broadcasted_iota(jnp.int32, (1, W, 1), 1)
    m_ge1 = w_idx >= 1
    m_ge2 = w_idx >= 2
    m_lt1 = w_idx < (W - 1)
    m_lt2 = w_idx < (W - 2)

    # ---- AvgPool2d(kernel=5, stride=1, padding=2), count_include_pad=True ----
    # Separable: H-direction via the persistent padded scratch (free major-dim
    # slices), W-direction via XLU rolls + border masks.
    padf_ref[2:2 + H] = normed
    hsum = (padf_ref[0:H] + padf_ref[1:1 + H] + padf_ref[2:2 + H]
            + padf_ref[3:3 + H] + padf_ref[4:4 + H])            # (H, W, C)

    pooled = hsum
    pooled = pooled + jnp.where(m_ge1, pltpu.roll(hsum, shift=1, axis=1), 0.0)
    pooled = pooled + jnp.where(m_lt1, pltpu.roll(hsum, shift=W - 1, axis=1), 0.0)
    pooled = pooled + jnp.where(m_ge2, pltpu.roll(hsum, shift=2, axis=1), 0.0)
    pooled = pooled + jnp.where(m_lt2, pltpu.roll(hsum, shift=W - 2, axis=1), 0.0)
    pooled = pooled * (1.0 / 25.0)

    # ---- 3x3 conv, stride 1, padding 1, bias=False ----
    # Fold the W taps into the contraction: wcat[h, w, kw*C + c] = pooled[h, w+kw-1, c].
    # Rolls/selects in f32, im2col buffer stored in bf16 (MXU operands).
    left1 = jnp.where(m_ge1, pltpu.roll(pooled, shift=1, axis=1), 0.0)
    right1 = jnp.where(m_lt1, pltpu.roll(pooled, shift=W - 1, axis=1), 0.0)
    padc_ref[1:1 + H] = jnp.concatenate(
        [left1.astype(jnp.bfloat16),
         pooled.astype(jnp.bfloat16),
         right1.astype(jnp.bfloat16)], axis=-1)                 # (H, W, 3C) bf16

    w_s = w_ref[s]                                              # (3, 3C, C) bf16
    acc = jnp.dot(padc_ref[0:H].reshape(H * W, 3 * C), w_s[0],
                  preferred_element_type=jnp.float32)
    acc = acc + jnp.dot(padc_ref[1:1 + H].reshape(H * W, 3 * C), w_s[1],
                        preferred_element_type=jnp.float32)
    acc = acc + jnp.dot(padc_ref[2:2 + H].reshape(H * W, 3 * C), w_s[2],
                        preferred_element_type=jnp.float32)
    conv = acc.reshape(H, W, C)

    # path = conv(path); x = path + x
    path_ref[...] = conv
    out_ref[0] = conv + out_ref[0]


def _vmem_limit_bytes(H, W, C, N, n_stages):
    """Generation-aware VMEM budget: actual working set + headroom, capped
    below physical VMEM so Mosaic internal scratch still fits."""
    phys = 128 * 1024 * 1024
    try:
        info = pltpu.get_tpu_info()
        v = int(getattr(info, "vmem_capacity_bytes", 0) or 0)
        if v >= 32 * 1024 * 1024:
            phys = v
    except Exception:
        pass

    frame = H * W * C * 4
    io_blocks = 2 * (2 * frame)                          # double-buffered x-in + out
    resident = ((H + 4) * W * C * 4                      # padf (f32)
                + (H + 2) * W * 3 * C * 2                # padc (bf16)
                + frame                                  # path carry (f32)
                + n_stages * 3 * 3 * C * C * 2           # conv weights (bf16)
                + 2 * n_stages * N * C * 4)              # gamma/beta (f32)
    temps = 7 * frame + H * W * 3 * C * 2                # normed/hsum/pooled/rolls/acc/conv + bf16 im2col
    needed = io_blocks + resident + temps

    cap = (phys * 25) // 32                              # ~78% of physical (48/100 MiB on v7x/v6e)
    return int(min(max(int(needed * 1.25), 32 * 1024 * 1024), cap))


@jax.jit
def cond_crp_block(x_nchw, y, conv_w_oihw, gamma_emb, beta_emb):
    """Forward pass of CondCRPBlock.

    x_nchw:      (N, C, H, W) float32
    y:           (N,) int32 class labels
    conv_w_oihw: (n_stages, C, C, 3, 3) float32   (torch Conv2d weight layout)
    gamma_emb:   (n_stages, num_classes, C) float32
    beta_emb:    (n_stages, num_classes, C) float32
    returns:     (N, C, H, W) float32
    """
    N, C, H, W = x_nchw.shape
    n_stages = conv_w_oihw.shape[0]

    x = jnp.transpose(x_nchw, (0, 2, 3, 1)).astype(jnp.float32)          # NHWC
    # OIHW -> (stage, kh, kw, I, O) -> (stage, kh, kw*I, O), bf16 MXU operands.
    w = jnp.transpose(conv_w_oihw, (0, 3, 4, 2, 1))
    w = w.reshape(n_stages, 3, 3 * C, C).astype(jnp.bfloat16)
    # Per-(stage, batch) affine params, flattened so the kernel indexes with
    # idx = s * N + b; whole array resident in VMEM.
    gamma = gamma_emb[:, y, :].reshape(n_stages * N, 1, C).astype(jnp.float32)
    beta = beta_emb[:, y, :].reshape(n_stages * N, 1, C).astype(jnp.float32)

    kernel = partial(_cond_crp_kernel, H=H, W=W, C=C)
    vmem_limit = _vmem_limit_bytes(H, W, C, N, n_stages)

    out = pl.pallas_call(
        kernel,
        out_shape=jax.ShapeDtypeStruct((N, H, W, C), jnp.float32),
        grid_spec=pltpu.PrefetchScalarGridSpec(
            num_scalar_prefetch=0,
            grid=(N, n_stages),
            in_specs=[
                pl.BlockSpec((1, H, W, C), lambda b, s: (b, 0, 0, 0)),            # x
                pl.BlockSpec((n_stages, 3, 3 * C, C), lambda b, s: (0, 0, 0, 0)), # conv w (resident)
                pl.BlockSpec((n_stages * N, 1, C), lambda b, s: (0, 0, 0)),       # gamma  (resident)
                pl.BlockSpec((n_stages * N, 1, C), lambda b, s: (0, 0, 0)),       # beta   (resident)
            ],
            out_specs=pl.BlockSpec((1, H, W, C), lambda b, s: (b, 0, 0, 0)),      # x acc
            scratch_shapes=[
                pltpu.VMEM((H, W, C), jnp.float32),              # path carry between stages
                pltpu.VMEM((H + 4, W, C), jnp.float32),          # H-padded pool input
                pltpu.VMEM((H + 2, W, 3 * C), jnp.bfloat16),     # H-padded im2col (bf16)
            ],
        ),
        # Safe: x is read only at s==0 per batch; the aliased output block is
        # written back only after the last stage of that batch.
        input_output_aliases={0: 0},
        compiler_params=pltpu.CompilerParams(
            dimension_semantics=("parallel", "arbitrary"),
            vmem_limit_bytes=vmem_limit),
    )(x, w, gamma, beta)

    return jnp.transpose(out, (0, 3, 1, 2))  # back to NCHW


def cond_crp_reference(x_nchw, y, conv_w_oihw, gamma_emb, beta_emb):
    """Pure-JAX reference mirroring the kernel's numerics (bf16 conv operands,
    f32 accumulation; everything else f32)."""
    x = jnp.maximum(x_nchw.astype(jnp.float32), 0.0)
    n_stages = conv_w_oihw.shape[0]
    path = x
    for s in range(n_stages):
        mean = jnp.mean(path, axis=(2, 3), keepdims=True)
        var = jnp.mean((path - mean) ** 2, axis=(2, 3), keepdims=True)
        normed = (path - mean) * jax.lax.rsqrt(var + EPS)
        g = gamma_emb[s][y][:, :, None, None]
        b = beta_emb[s][y][:, :, None, None]
        normed = normed * g + b
        pooled = jax.lax.reduce_window(
            normed, 0.0, jax.lax.add,
            window_dimensions=(1, 1, 5, 5), window_strides=(1, 1, 1, 1),
            padding=[(0, 0), (0, 0), (2, 2), (2, 2)]) / 25.0
        conv = jax.lax.conv_general_dilated(
            pooled.astype(jnp.bfloat16),
            conv_w_oihw[s].astype(jnp.bfloat16),
            window_strides=(1, 1), padding=[(1, 1), (1, 1)],
            dimension_numbers=("NCHW", "OIHW", "NCHW"),
            preferred_element_type=jnp.float32)
        path = conv
        x = path + x
    return x


if __name__ == "__main__":
    N, C, H, W = 2, 4, 16, 16
    n_stages = 2
    num_classes = 10

    key = jax.random.PRNGKey(0)
    k_x, k_y, k_w, k_g, k_b = jax.random.split(key, 5)

    x = jax.random.normal(k_x, (N, C, H, W), dtype=jnp.float32)
    y = jax.random.randint(k_y, (N,), 0, num_classes, dtype=jnp.int32)
    conv_w = 0.1 * jax.random.normal(k_w, (n_stages, C, C, 3, 3), dtype=jnp.float32)
    gamma_emb = 1.0 + 0.1 * jax.random.normal(k_g, (n_stages, num_classes, C),
                                              dtype=jnp.float32)
    beta_emb = 0.1 * jax.random.normal(k_b, (n_stages, num_classes, C),
                                       dtype=jnp.float32)

    out = cond_crp_block(x, y, conv_w, gamma_emb, beta_emb)
    out = jax.block_until_ready(out)

    ref = cond_crp_reference(x, y, conv_w, gamma_emb, beta_emb)
    ref = jax.block_until_ready(ref)

    assert out.shape == (N, C, H, W)
    # Tolerance accounts for bf16 MXU operands (f32 accumulation) on both sides.
    assert jnp.allclose(out, ref, atol=1e-3, rtol=1e-3), (
        f"max abs err = {jnp.max(jnp.abs(out - ref))}")

    print("KERNEL_OK")
</pallas_src>

<mosaic_0001>
module attributes {stable_mosaic.version = 11 : i64} {
  func.func @_cond_crp_kernel(%arg0: i32, %arg1: i32, %arg2: memref<1x16x16x4xf32, #tpu.memory_space<vmem>>, %arg3: memref<2x3x12x4xbf16, #tpu.memory_space<vmem>>, %arg4: memref<4x1x4xf32, #tpu.memory_space<vmem>>, %arg5: memref<4x1x4xf32, #tpu.memory_space<vmem>>, %arg6: memref<1x16x16x4xf32, #tpu.memory_space<vmem>>, %arg7: memref<16x16x4xf32, #tpu.memory_space<vmem>>, %arg8: memref<20x16x4xf32, #tpu.memory_space<vmem>>, %arg9: memref<18x16x12xbf16, #tpu.memory_space<vmem>>) attributes {dimension_semantics = [#tpu.dimension_semantics<parallel>, #tpu.dimension_semantics<arbitrary>], iteration_bounds = array<i64: 2, 2>, scalar_prefetch = 0 : i64, scratch_operands = 3 : i64, tpu.core_type = #tpu.core_type<tc>, window_params = [{transform_indices = @transform_0, window_bounds = array<i64: 1, 16, 16, 4>}, {pipeline_mode = #tpu.pipeline_mode<synchronous>, transform_indices = @transform_1, window_bounds = array<i64: 2, 3, 12, 4>}, {pipeline_mode = #tpu.pipeline_mode<synchronous>, transform_indices = @transform_2, window_bounds = array<i64: 4, 1, 4>}, {pipeline_mode = #tpu.pipeline_mode<synchronous>, transform_indices = @transform_3, window_bounds = array<i64: 4, 1, 4>}, {transform_indices = @transform_4, window_bounds = array<i64: 1, 16, 16, 4>}]} {
    %c0_i32 = arith.constant 0 : i32
    %0 = arith.cmpi eq, %arg1, %c0_i32 : i32
    %1 = arith.extui %0 : i1 to i32
    %c0_i32_0 = arith.constant 0 : i32
    %2 = arith.cmpi ne, %1, %c0_i32_0 : i32
    scf.if %2 {
      %c0_68 = arith.constant 0 : index
      %c0_69 = arith.constant 0 : index
      %c0_70 = arith.constant 0 : index
      %c0_71 = arith.constant 0 : index
      %122 = vector.load %arg2[%c0_68, %c0_69, %c0_70, %c0_71] : memref<1x16x16x4xf32, #tpu.memory_space<vmem>>, vector<1x16x16x4xf32>
      %123 = vector.shape_cast %122 : vector<1x16x16x4xf32> to vector<16x16x4xf32>
      %cst_72 = arith.constant 0.000000e+00 : f32
      %124 = vector.broadcast %cst_72 : f32 to vector<16x16x4xf32>
      %125 = arith.maximumf %123, %124 : vector<16x16x4xf32>
      %c0_73 = arith.constant 0 : index
      %c0_74 = arith.constant 0 : index
      %c0_75 = arith.constant 0 : index
      %c0_76 = arith.constant 0 : index
      %126 = vector.load %arg6[%c0_73, %c0_74, %c0_75, %c0_76] : memref<1x16x16x4xf32, #tpu.memory_space<vmem>>, vector<1x16x16x4xf32>
      %127 = vector.shape_cast %126 : vector<1x16x16x4xf32> to vector<16x16x4xf32>
      %128 = vector.shape_cast %125 : vector<16x16x4xf32> to vector<1x16x16x4xf32>
      tpu.vector_store %arg6[%c0_73, %c0_74, %c0_75, %c0_76], %128 {strides = array<i32>} : memref<1x16x16x4xf32, #tpu.memory_space<vmem>>, vector<1x16x16x4xf32>,
      %c0_77 = arith.constant 0 : index
      %c0_78 = arith.constant 0 : index
      %c0_79 = arith.constant 0 : index
      %129 = vector.load %arg7[%c0_77, %c0_78, %c0_79] : memref<16x16x4xf32, #tpu.memory_space<vmem>>, vector<16x16x4xf32>
      tpu.vector_store %arg7[%c0_77, %c0_78, %c0_79], %125 {strides = array<i32>} : memref<16x16x4xf32, #tpu.memory_space<vmem>>, vector<16x16x4xf32>,
      %cst_80 = arith.constant 0.000000e+00 : f32
      %130 = vector.broadcast %cst_80 : f32 to vector<2x16x4xf32>
      %c0_81 = arith.constant 0 : index
      %c0_82 = arith.constant 0 : index
      %c0_83 = arith.constant 0 : index
      %131 = vector.load %arg8[%c0_81, %c0_82, %c0_83] : memref<20x16x4xf32, #tpu.memory_space<vmem>>, vector<2x16x4xf32>
      tpu.vector_store %arg8[%c0_81, %c0_82, %c0_83], %130 {strides = array<i32>} : memref<20x16x4xf32, #tpu.memory_space<vmem>>, vector<2x16x4xf32>,
      %cst_84 = arith.constant 0.000000e+00 : f32
      %132 = vector.broadcast %cst_84 : f32 to vector<2x16x4xf32>
      %c18 = arith.constant 18 : index
      %c0_85 = arith.constant 0 : index
      %c0_86 = arith.constant 0 : index
      %133 = vector.load %arg8[%c18, %c0_85, %c0_86] : memref<20x16x4xf32, #tpu.memory_space<vmem>>, vector<2x16x4xf32>
      tpu.vector_store %arg8[%c18, %c0_85, %c0_86], %132 {strides = array<i32>} : memref<20x16x4xf32, #tpu.memory_space<vmem>>, vector<2x16x4xf32>,
      %cst_87 = arith.constant 0.000000e+00 : bf16
      %134 = vector.broadcast %cst_87 : bf16 to vector<1x16x12xbf16>
      %c0_88 = arith.constant 0 : index
      %c0_89 = arith.constant 0 : index
      %c0_90 = arith.constant 0 : index
      %135 = vector.load %arg9[%c0_88, %c0_89, %c0_90] : memref<18x16x12xbf16, #tpu.memory_space<vmem>>, vector<1x16x12xbf16>
      tpu.vector_store %arg9[%c0_88, %c0_89, %c0_90], %134 {strides = array<i32>} : memref<18x16x12xbf16, #tpu.memory_space<vmem>>, vector<1x16x12xbf16>,
      %cst_91 = arith.constant 0.000000e+00 : bf16
      %136 = vector.broadcast %cst_91 : bf16 to vector<1x16x12xbf16>
      %c17 = arith.constant 17 : index
      %c0_92 = arith.constant 0 : index
      %c0_93 = arith.constant 0 : index
      %137 = vector.load %arg9[%c17, %c0_92, %c0_93] : memref<18x16x12xbf16, #tpu.memory_space<vmem>>, vector<1x16x12xbf16>
      tpu.vector_store %arg9[%c17, %c0_92, %c0_93], %136 {strides = array<i32>} : memref<18x16x12xbf16, #tpu.memory_space<vmem>>, vector<1x16x12xbf16>,
    } else {
    }
    %c0 = arith.constant 0 : index
    %c0_1 = arith.constant 0 : index
    %c0_2 = arith.constant 0 : index
    %3 = vector.load %arg7[%c0, %c0_1, %c0_2] : memref<16x16x4xf32, #tpu.memory_space<vmem>>, vector<16x16x4xf32>
    %c2_i32 = arith.constant 2 : i32
    %4 = arith.muli %arg1, %c2_i32 : i32
    %5 = arith.addi %4, %arg0 : i32
    %6 = arith.index_cast %5 : i32 to index
    %c0_3 = arith.constant 0 : index
    %c0_4 = arith.constant 0 : index
    %7 = vector.load %arg4[%6, %c0_3, %c0_4] : memref<4x1x4xf32, #tpu.memory_space<vmem>>, vector<1x1x4xf32>
    %8 = vector.shape_cast %7 : vector<1x1x4xf32> to vector<1x4xf32>
    %9 = vector.shape_cast %8 : vector<1x4xf32> to vector<1x1x4xf32>
    %10 = arith.index_cast %5 : i32 to index
    %c0_5 = arith.constant 0 : index
    %c0_6 = arith.constant 0 : index
    %11 = vector.load %arg5[%10, %c0_5, %c0_6] : memref<4x1x4xf32, #tpu.memory_space<vmem>>, vector<1x1x4xf32>
    %12 = vector.shape_cast %11 : vector<1x1x4xf32> to vector<1x4xf32>
    %13 = vector.shape_cast %12 : vector<1x4xf32> to vector<1x1x4xf32>
    %cst = arith.constant dense<0.000000e+00> : vector<4xf32>
    %14 = vector.multi_reduction <add>, %3, %cst [0, 1] : vector<16x16x4xf32> to vector<4xf32>
    %15 = vector.shape_cast %14 : vector<4xf32> to vector<1x1x4xf32>
    %cst_7 = arith.constant 2.560000e+02 : f32
    %16 = vector.broadcast %cst_7 : f32 to vector<1x1x4xf32>
    %17 = arith.divf %15, %16 : vector<1x1x4xf32>
    %18 = vector.broadcast %17 : vector<1x1x4xf32> to vector<16x16x4xf32>
    %19 = arith.subf %3, %18 : vector<16x16x4xf32>
    %20 = arith.mulf %19, %19 : vector<16x16x4xf32>
    %cst_8 = arith.constant dense<0.000000e+00> : vector<4xf32>
    %21 = vector.multi_reduction <add>, %20, %cst_8 [0, 1] : vector<16x16x4xf32> to vector<4xf32>
    %22 = vector.shape_cast %21 : vector<4xf32> to vector<1x1x4xf32>
    %cst_9 = arith.constant 2.560000e+02 : f32
    %23 = vector.broadcast %cst_9 : f32 to vector<1x1x4xf32>
    %24 = arith.divf %22, %23 : vector<1x1x4xf32>
    %cst_10 = arith.constant 9.99999974E-6 : f32
    %25 = vector.broadcast %cst_10 : f32 to vector<1x1x4xf32>
    %26 = arith.addf %24, %25 : vector<1x1x4xf32>
    %27 = math.rsqrt %26 : vector<1x1x4xf32>
    %28 = vector.broadcast %27 : vector<1x1x4xf32> to vector<16x16x4xf32>
    %29 = arith.mulf %19, %28 : vector<16x16x4xf32>
    %30 = vector.broadcast %9 : vector<1x1x4xf32> to vector<16x16x4xf32>
    %31 = arith.mulf %29, %30 : vector<16x16x4xf32>
    %32 = vector.broadcast %13 : vector<1x1x4xf32> to vector<16x16x4xf32>
    %33 = arith.addf %31, %32 : vector<16x16x4xf32>
    %34 = tpu.iota {dimensions = array<i32: 1>} : vector<1x16x1xi32>
    %c1_i32 = arith.constant 1 : i32
    %35 = vector.broadcast %c1_i32 : i32 to vector<1x16x1xi32>
    %36 = arith.cmpi sge, %34, %35 : vector<1x16x1xi32>
    %c2_i32_11 = arith.constant 2 : i32
    %37 = vector.broadcast %c2_i32_11 : i32 to vector<1x16x1xi32>
    %38 = arith.cmpi sge, %34, %37 : vector<1x16x1xi32>
    %c15_i32 = arith.constant 15 : i32
    %39 = vector.broadcast %c15_i32 : i32 to vector<1x16x1xi32>
    %40 = arith.cmpi slt, %34, %39 : vector<1x16x1xi32>
    %c14_i32 = arith.constant 14 : i32
    %41 = vector.broadcast %c14_i32 : i32 to vector<1x16x1xi32>
    %42 = arith.cmpi slt, %34, %41 : vector<1x16x1xi32>
    %c2 = arith.constant 2 : index
    %c0_12 = arith.constant 0 : index
    %c0_13 = arith.constant 0 : index
    %43 = vector.load %arg8[%c2, %c0_12, %c0_13] : memref<20x16x4xf32, #tpu.memory_space<vmem>>, vector<16x16x4xf32>
    tpu.vector_store %arg8[%c2, %c0_12, %c0_13], %33 {strides = array<i32>} : memref<20x16x4xf32, #tpu.memory_space<vmem>>, vector<16x16x4xf32>,
    %c0_14 = arith.constant 0 : index
    %c0_15 = arith.constant 0 : index
    %c0_16 = arith.constant 0 : index
    %44 = vector.load %arg8[%c0_14, %c0_15, %c0_16] : memref<20x16x4xf32, #tpu.memory_space<vmem>>, vector<16x16x4xf32>
    %c1 = arith.constant 1 : index
    %c0_17 = arith.constant 0 : index
    %c0_18 = arith.constant 0 : index
    %45 = vector.load %arg8[%c1, %c0_17, %c0_18] : memref<20x16x4xf32, #tpu.memory_space<vmem>>, vector<16x16x4xf32>
    %46 = arith.addf %44, %45 : vector<16x16x4xf32>
    %c2_19 = arith.constant 2 : index
    %c0_20 = arith.constant 0 : index
    %c0_21 = arith.constant 0 : index
    %47 = vector.load %arg8[%c2_19, %c0_20, %c0_21] : memref<20x16x4xf32, #tpu.memory_space<vmem>>, vector<16x16x4xf32>
    %48 = arith.addf %46, %47 : vector<16x16x4xf32>
    %c3 = arith.constant 3 : index
    %c0_22 = arith.constant 0 : index
    %c0_23 = arith.constant 0 : index
    %49 = vector.load %arg8[%c3, %c0_22, %c0_23] : memref<20x16x4xf32, #tpu.memory_space<vmem>>, vector<16x16x4xf32>
    %50 = arith.addf %48, %49 : vector<16x16x4xf32>
    %c4 = arith.constant 4 : index
    %c0_24 = arith.constant 0 : index
    %c0_25 = arith.constant 0 : index
    %51 = vector.load %arg8[%c4, %c0_24, %c0_25] : memref<20x16x4xf32, #tpu.memory_space<vmem>>, vector<16x16x4xf32>
    %52 = arith.addf %50, %51 : vector<16x16x4xf32>
    %c1_i32_26 = arith.constant 1 : i32
    %53 = tpu.dynamic_rotate %52 by %c1_i32_26 dim 1 : vector<16x16x4xf32>, i32 -> vector<16x16x4xf32>
    %cst_27 = arith.constant 0.000000e+00 : f32
    %54 = vector.shape_cast %36 : vector<1x16x1xi1> to vector<1x16x1xi1>
    %55 = vector.broadcast %54 : vector<1x16x1xi1> to vector<16x16x4xi1>
    %56 = vector.broadcast %cst_27 : f32 to vector<16x16x4xf32>
    %57 = arith.select %55, %53, %56 : vector<16x16x4xi1>, vector<16x16x4xf32>
    %58 = arith.addf %52, %57 : vector<16x16x4xf32>
    %c15_i32_28 = arith.constant 15 : i32
    %59 = tpu.dynamic_rotate %52 by %c15_i32_28 dim 1 : vector<16x16x4xf32>, i32 -> vector<16x16x4xf32>
    %cst_29 = arith.constant 0.000000e+00 : f32
    %60 = vector.shape_cast %40 : vector<1x16x1xi1> to vector<1x16x1xi1>
    %61 = vector.broadcast %60 : vector<1x16x1xi1> to vector<16x16x4xi1>
    %62 = vector.broadcast %cst_29 : f32 to vector<16x16x4xf32>
    %63 = arith.select %61, %59, %62 : vector<16x16x4xi1>, vector<16x16x4xf32>
    %64 = arith.addf %58, %63 : vector<16x16x4xf32>
    %c2_i32_30 = arith.constant 2 : i32
    %65 = tpu.dynamic_rotate %52 by %c2_i32_30 dim 1 : vector<16x16x4xf32>, i32 -> vector<16x16x4xf32>
    %cst_31 = arith.constant 0.000000e+00 : f32
    %66 = vector.shape_cast %38 : vector<1x16x1xi1> to vector<1x16x1xi1>
    %67 = vector.broadcast %66 : vector<1x16x1xi1> to vector<16x16x4xi1>
    %68 = vector.broadcast %cst_31 : f32 to vector<16x16x4xf32>
    %69 = arith.select %67, %65, %68 : vector<16x16x4xi1>, vector<16x16x4xf32>
    %70 = arith.addf %64, %69 : vector<16x16x4xf32>
    %c14_i32_32 = arith.constant 14 : i32
    %71 = tpu.dynamic_rotate %52 by %c14_i32_32 dim 1 : vector<16x16x4xf32>, i32 -> vector<16x16x4xf32>
    %cst_33 = arith.constant 0.000000e+00 : f32
    %72 = vector.shape_cast %42 : vector<1x16x1xi1> to vector<1x16x1xi1>
    %73 = vector.broadcast %72 : vector<1x16x1xi1> to vector<16x16x4xi1>
    %74 = vector.broadcast %cst_33 : f32 to vector<16x16x4xf32>
    %75 = arith.select %73, %71, %74 : vector<16x16x4xi1>, vector<16x16x4xf32>
    %76 = arith.addf %70, %75 : vector<16x16x4xf32>
    %cst_34 = arith.constant 4.000000e-02 : f32
    %77 = vector.broadcast %cst_34 : f32 to vector<16x16x4xf32>
    %78 = arith.mulf %76, %77 : vector<16x16x4xf32>
    %c1_i32_35 = arith.constant 1 : i32
    %79 = tpu.dynamic_rotate %78 by %c1_i32_35 dim 1 : vector<16x16x4xf32>, i32 -> vector<16x16x4xf32>
    %cst_36 = arith.constant 0.000000e+00 : f32
    %80 = vector.shape_cast %36 : vector<1x16x1xi1> to vector<1x16x1xi1>
    %81 = vector.broadcast %80 : vector<1x16x1xi1> to vector<16x16x4xi1>
    %82 = vector.broadcast %cst_36 : f32 to vector<16x16x4xf32>
    %83 = arith.select %81, %79, %82 : vector<16x16x4xi1>, vector<16x16x4xf32>
    %c15_i32_37 = arith.constant 15 : i32
    %84 = tpu.dynamic_rotate %78 by %c15_i32_37 dim 1 : vector<16x16x4xf32>, i32 -> vector<16x16x4xf32>
    %cst_38 = arith.constant 0.000000e+00 : f32
    %85 = vector.shape_cast %40 : vector<1x16x1xi1> to vector<1x16x1xi1>
    %86 = vector.broadcast %85 : vector<1x16x1xi1> to vector<16x16x4xi1>
    %87 = vector.broadcast %cst_38 : f32 to vector<16x16x4xf32>
    %88 = arith.select %86, %84, %87 : vector<16x16x4xi1>, vector<16x16x4xf32>
    %89 = arith.truncf %83 : vector<16x16x4xf32> to vector<16x16x4xbf16>
    %90 = arith.truncf %78 : vector<16x16x4xf32> to vector<16x16x4xbf16>
    %91 = arith.truncf %88 : vector<16x16x4xf32> to vector<16x16x4xbf16>
    %92 = tpu.concatenate %89, %90, %91 in 2 : vector<16x16x4xbf16>, vector<16x16x4xbf16>, vector<16x16x4xbf16> -> vector<16x16x12xbf16>
    %c1_39 = arith.constant 1 : index
    %c0_40 = arith.constant 0 : index
    %c0_41 = arith.constant 0 : index
    %93 = vector.load %arg9[%c1_39, %c0_40, %c0_41] : memref<18x16x12xbf16, #tpu.memory_space<vmem>>, vector<16x16x12xbf16>
    tpu.vector_store %arg9[%c1_39, %c0_40, %c0_41], %92 {strides = array<i32>} : memref<18x16x12xbf16, #tpu.memory_space<vmem>>, vector<16x16x12xbf16>,
    %94 = arith.index_cast %arg1 : i32 to index
    %c0_42 = arith.constant 0 : index
    %c0_43 = arith.constant 0 : index
    %c0_44 = arith.constant 0 : index
    %95 = vector.load %arg3[%94, %c0_42, %c0_43, %c0_44] : memref<2x3x12x4xbf16, #tpu.memory_space<vmem>>, vector<1x3x12x4xbf16>
    %96 = vector.shape_cast %95 : vector<1x3x12x4xbf16> to vector<3x12x4xbf16>
    %c0_45 = arith.constant 0 : index
    %c0_46 = arith.constant 0 : index
    %c0_47 = arith.constant 0 : index
    %97 = vector.load %arg9[%c0_45, %c0_46, %c0_47] : memref<18x16x12xbf16, #tpu.memory_space<vmem>>, vector<16x16x12xbf16>
    %98 = vector.shape_cast %97 : vector<16x16x12xbf16> to vector<256x12xbf16>
    %99 = vector.extract_strided_slice %96 {offsets = [0, 0, 0], sizes = [1, 12, 4], strides = [1, 1, 1]} : vector<3x12x4xbf16> to vector<1x12x4xbf16>
    %100 = vector.shape_cast %99 : vector<1x12x4xbf16> to vector<12x4xbf16>
    %cst_48 = arith.constant dense<0.000000e+00> : vector<256x4xf32>
    %101 = tpu.matmul %98, %100, %cst_48 {dimension_numbers = #tpu.dot_dimension_numbers<[1], [0], [0], [1], [0, 0, 1, 1], [], []>} : vector<256x12xbf16>, vector<12x4xbf16>, vector<256x4xf32> -> vector<256x4xf32>
    %c1_49 = arith.constant 1 : index
    %c0_50 = arith.constant 0 : index
    %c0_51 = arith.constant 0 : index
    %102 = vector.load %arg9[%c1_49, %c0_50, %c0_51] : memref<18x16x12xbf16, #tpu.memory_space<vmem>>, vector<16x16x12xbf16>
    %103 = vector.shape_cast %102 : vector<16x16x12xbf16> to vector<256x12xbf16>
    %104 = vector.extract_strided_slice %96 {offsets = [1, 0, 0], sizes = [1, 12, 4], strides = [1, 1, 1]} : vector<3x12x4xbf16> to vector<1x12x4xbf16>
    %105 = vector.shape_cast %104 : vector<1x12x4xbf16> to vector<12x4xbf16>
    %cst_52 = arith.constant dense<0.000000e+00> : vector<256x4xf32>
    %106 = tpu.matmul %103, %105, %cst_52 {dimension_numbers = #tpu.dot_dimension_numbers<[1], [0], [0], [1], [0, 0, 1, 1], [], []>} : vector<256x12xbf16>, vector<12x4xbf16>, vector<256x4xf32> -> vector<256x4xf32>
    %107 = arith.addf %101, %106 : vector<256x4xf32>
    %c2_53 = arith.constant 2 : index
    %c0_54 = arith.constant 0 : index
    %c0_55 = arith.constant 0 : index
    %108 = vector.load %arg9[%c2_53, %c0_54, %c0_55] : memref<18x16x12xbf16, #tpu.memory_space<vmem>>, vector<16x16x12xbf16>
    %109 = vector.shape_cast %108 : vector<16x16x12xbf16> to vector<256x12xbf16>
    %110 = vector.extract_strided_slice %96 {offsets = [2, 0, 0], sizes = [1, 12, 4], strides = [1, 1, 1]} : vector<3x12x4xbf16> to vector<1x12x4xbf16>
    %111 = vector.shape_cast %110 : vector<1x12x4xbf16> to vector<12x4xbf16>
    %cst_56 = arith.constant dense<0.000000e+00> : vector<256x4xf32>
    %112 = tpu.matmul %109, %111, %cst_56 {dimension_numbers = #tpu.dot_dimension_numbers<[1], [0], [0], [1], [0, 0, 1, 1], [], []>} : vector<256x12xbf16>, vector<12x4xbf16>, vector<256x4xf32> -> vector<256x4xf32>
    %113 = arith.addf %107, %112 : vector<256x4xf32>
    %114 = vector.shape_cast %113 : vector<256x4xf32> to vector<16x16x4xf32>
    %c0_57 = arith.constant 0 : index
    %c0_58 = arith.constant 0 : index
    %c0_59 = arith.constant 0 : index
    %115 = vector.load %arg7[%c0_57, %c0_58, %c0_59] : memref<16x16x4xf32, #tpu.memory_space<vmem>>, vector<16x16x4xf32>
    tpu.vector_store %arg7[%c0_57, %c0_58, %c0_59], %114 {strides = array<i32>} : memref<16x16x4xf32, #tpu.memory_space<vmem>>, vector<16x16x4xf32>,
    %c0_60 = arith.constant 0 : index
    %c0_61 = arith.constant 0 : index
    %c0_62 = arith.constant 0 : index
    %c0_63 = arith.constant 0 : index
    %116 = vector.load %arg6[%c0_60, %c0_61, %c0_62, %c0_63] : memref<1x16x16x4xf32, #tpu.memory_space<vmem>>, vector<1x16x16x4xf32>
    %117 = vector.shape_cast %116 : vector<1x16x16x4xf32> to vector<16x16x4xf32>
    %118 = arith.addf %114, %117 : vector<16x16x4xf32>
    %c0_64 = arith.constant 0 : index
    %c0_65 = arith.constant 0 : index
    %c0_66 = arith.constant 0 : index
    %c0_67 = arith.constant 0 : index
    %119 = vector.load %arg6[%c0_64, %c0_65, %c0_66, %c0_67] : memref<1x16x16x4xf32, #tpu.memory_space<vmem>>, vector<1x16x16x4xf32>
    %120 = vector.shape_cast %119 : vector<1x16x16x4xf32> to vector<16x16x4xf32>
    %121 = vector.shape_cast %118 : vector<16x16x4xf32> to vector<1x16x16x4xf32>
    tpu.vector_store %arg6[%c0_64, %c0_65, %c0_66, %c0_67], %121 {strides = array<i32>} : memref<1x16x16x4xf32, #tpu.memory_space<vmem>>, vector<1x16x16x4xf32>,
    return
  }
  func.func @transform_0(%arg0: i32, %arg1: i32) -> (i32, i32, i32, i32) {
    %c0_i32 = arith.constant 0 : i32
    %c0_i32_0 = arith.constant 0 : i32
    %c0_i32_1 = arith.constant 0 : i32
    %c0_i32_2 = arith.constant 0 : i32
    return %arg0, %c0_i32, %c0_i32_0, %c0_i32_1 : i32, i32, i32, i32
  }
  func.func @transform_1(%arg0: i32, %arg1: i32) -> (i32, i32, i32, i32) {
    %c0_i32 = arith.constant 0 : i32
    %c0_i32_0 = arith.constant 0 : i32
    %c0_i32_1 = arith.constant 0 : i32
    %c0_i32_2 = arith.constant 0 : i32
    %c0_i32_3 = arith.constant 0 : i32
    return %c0_i32, %c0_i32_0, %c0_i32_1, %c0_i32_2 : i32, i32, i32, i32
  }
  func.func @transform_2(%arg0: i32, %arg1: i32) -> (i32, i32, i32) {
    %c0_i32 = arith.constant 0 : i32
    %c0_i32_0 = arith.constant 0 : i32
    %c0_i32_1 = arith.constant 0 : i32
    %c0_i32_2 = arith.constant 0 : i32
    return %c0_i32, %c0_i32_0, %c0_i32_1 : i32, i32, i32
  }
  func.func @transform_3(%arg0: i32, %arg1: i32) -> (i32, i32, i32) {
    %c0_i32 = arith.constant 0 : i32
    %c0_i32_0 = arith.constant 0 : i32
    %c0_i32_1 = arith.constant 0 : i32
    %c0_i32_2 = arith.constant 0 : i32
    return %c0_i32, %c0_i32_0, %c0_i32_1 : i32, i32, i32
  }
  func.func @transform_4(%arg0: i32, %arg1: i32) -> (i32, i32, i32, i32) {
    %c0_i32 = arith.constant 0 : i32
    %c0_i32_0 = arith.constant 0 : i32
    %c0_i32_1 = arith.constant 0 : i32
    %c0_i32_2 = arith.constant 0 : i32
    return %arg0, %c0_i32, %c0_i32_0, %c0_i32_1 : i32, i32, i32, i32
  }
}

</mosaic_0001>

<llo_original>
// kernel: cond_crp_block.1
$region0: #{cond_crp_block.1}
  #allocation0 [shape = 'u32[]', space=smem, size = 0x4, offset = 0x4, fixed_abs, tag = 'smem constant byte address 0x4 - core index']
  #allocation1 [shape = 'u32[72,128]{1,0:T(1,128)}', space=vmem, size = 0x9000, scoped, tag = 'internal scratch']
  #allocation2 [shape = 'f32[16,16,4]{2,1,0:T(8,128)}', space=vmem, size = 0x20000, scoped, tag = 'scratch operand']
  #allocation3 [shape = 'f32[20,16,4]{2,1,0:T(8,128)}', space=vmem, size = 0x28000, scoped, tag = 'scratch operand']
  #allocation4 [shape = 'bf16[18,16,12]{2,1,0:T(8,128)(2,1)}', space=vmem, size = 0x12000, scoped, tag = 'scratch operand']
  %s0 = inlined_call_operand.vmem [shape: f32[2,16,16,4], index: 0, kind: input, shape index: {}, may-alias: {0,4}]
  %s1 = inlined_call_operand.vmem [shape: bf16[2,3,12,4], index: 1, kind: input, shape index: {}]
  %s2 = inlined_call_operand.vmem [shape: f32[4,1,4], index: 2, kind: input, shape index: {}]
  %s3 = inlined_call_operand.vmem [shape: f32[4,1,4], index: 3, kind: input, shape index: {}]
  %s4 = inlined_call_operand.vmem [shape: f32[2,16,16,4], index: 4, kind: output, shape index: {}, may-alias: {0,4}]
  %s5 = sld [smem:[#allocation0]]
  $region53: #{cond_crp_block.1} parent=0
    _
  %s7 = ssub.s32 1, %s5
  %s8 = scalar_select 0, %s7, %s5
  loop: start=0, step=1, limit=6
  $region2: #{cond_crp_block.1} parent=0 // loop_pre_header
    _
  $region3: #{cond_crp_block.1} parent=0 // loop_header
    %s10 = sphi 0, %s14
    %p11 = scmp.ge.s32.totalorder %s10, 6
    %s17 = sphi 0, %s29
    %s18 = sphi 0, %s25
    %s19 = sphi 0, %s17
    %s20 = sphi 0, %s18
    %s21 = sphi 0, %s19
    %s22 = sphi 0, %s20
    %s32 = sphi 0, %s34
    %s35 = sphi 0, %s32
    %s36 = sphi 0, %s35
    %s52 = sphi 0, %s36
    %s56 = sphi 0, %s56
    %s58 = sphi 0, %s56
    %s59 = sphi 0, %s58
    %s73 = sphi 0, %s59
    %s77 = sphi 0, %s77
    %s79 = sphi 0, %s77
    %s80 = sphi 0, %s79
    %s94 = sphi 0, %s80
    %s98 = sphi 0, %s98
    %s100 = sphi 0, %s98
    %s101 = sphi 0, %s100
    %s115 = sphi 0, %s101
    %s121 = sphi 0, %s123
    %s124 = sphi 0, %s121
    %s125 = sphi 0, %s124
    %s141 = sphi 0, %s125
  $region4: #{cond_crp_block.1} parent=0 // loop_header_branch
    %13 = sbr.rel (%p11) target = $region8
  $region5: #{cond_crp_block.1} parent=0 // loop_body
    %s15 = ssub.s32 %s10, 1
    %s16 = ssub.s32 %s10, 2
    %s23 = sadd.s32 1, %s18
    %p24 = scmp.ge.s32.totalorder %s23, 2
    %s25 = scalar_select %p24, 0, %s23
    %s26 = sadd.s32 1, %s17
    %s27 = scalar_select %p24, %s26, %s17
    %p28 = scmp.ge.s32.totalorder %s27, 2
    %s29 = scalar_select %p28, 0, %s27
    %s30 = ssub.s32 %s17, %s29
    %p31 = scmp.eq.s32.totalorder %s30, 0
    %s33 = sadd.s32 %s32, 1
    %s34 = scalar_select %p31, %s32, %s33
    %p37 = pneg %p31
    %p38 = scmp.eq.s32.totalorder %s10, 3
    %p39 = por %p37, %p38
    %p40 = scmp.ne.s32.totalorder %s32, %s35
    %p41 = scmp.eq.s32.totalorder %s10, 0
    %p42 = por %p40, %p41
    %p43 = scmp.ne.s32.totalorder %s32, %s35
    %p44 = scmp.eq.s32.totalorder %s15, 3
    %p45 = por %p43, %p44
    %p46 = scmp.ne.s32.totalorder %s35, %s36
    %p47 = scmp.eq.s32.totalorder %s15, 0
    %p48 = por %p46, %p47
    %p49 = scmp.ne.s32.totalorder %s35, %s36
    %p50 = scmp.eq.s32.totalorder %s16, 3
    %p51 = por %p49, %p50
    %p53 = scmp.ne.s32.totalorder %s36, %s52
    %p54 = scmp.eq.s32.totalorder %s16, 0
    %p55 = por %p53, %p54
    %s57 = sadd.s32 %s56, 1
    %p60 = scmp.eq.s32.totalorder %s10, 3
    %p61 = scmp.ne.s32.totalorder %s56, %s58
    %p62 = scmp.eq.s32.totalorder %s10, 0
    %p63 = por %p61, %p62
    %p64 = scmp.ne.s32.totalorder %s56, %s58
    %p65 = scmp.eq.s32.totalorder %s15, 3
    %p66 = por %p64, %p65
    %p67 = scmp.ne.s32.totalorder %s58, %s59
    %p68 = scmp.eq.s32.totalorder %s15, 0
    %p69 = por %p67, %p68
    %p70 = scmp.ne.s32.totalorder %s58, %s59
    %p71 = scmp.eq.s32.totalorder %s16, 3
    %p72 = por %p70, %p71
    %p74 = scmp.ne.s32.totalorder %s59, %s73
    %p75 = scmp.eq.s32.totalorder %s16, 0
    %p76 = por %p74, %p75
    %s78 = sadd.s32 %s77, 1
    %p81 = scmp.eq.s32.totalorder %s10, 3
    %p82 = scmp.ne.s32.totalorder %s77, %s79
    %p83 = scmp.eq.s32.totalorder %s10, 0
    %p84 = por %p82, %p83
    %p85 = scmp.ne.s32.totalorder %s77, %s79
    %p86 = scmp.eq.s32.totalorder %s15, 3
    %p87 = por %p85, %p86
    %p88 = scmp.ne.s32.totalorder %s79, %s80
    %p89 = scmp.eq.s32.totalorder %s15, 0
    %p90 = por %p88, %p89
    %p91 = scmp.ne.s32.totalorder %s79, %s80
    %p92 = scmp.eq.s32.totalorder %s16, 3
    %p93 = por %p91, %p92
    %p95 = scmp.ne.s32.totalorder %s80, %s94
    %p96 = scmp.eq.s32.totalorder %s16, 0
    %p97 = por %p95, %p96
    %s99 = sadd.s32 %s98, 1
    %p102 = scmp.eq.s32.totalorder %s10, 3
    %p103 = scmp.ne.s32.totalorder %s98, %s100
    %p104 = scmp.eq.s32.totalorder %s10, 0
    %p105 = por %p103, %p104
    %p106 = scmp.ne.s32.totalorder %s98, %s100
    %p107 = scmp.eq.s32.totalorder %s15, 3
    %p108 = por %p106, %p107
    %p109 = scmp.ne.s32.totalorder %s100, %s101
    %p110 = scmp.eq.s32.totalorder %s15, 0
    %p111 = por %p109, %p110
    %p112 = scmp.ne.s32.totalorder %s100, %s101
    %p113 = scmp.eq.s32.totalorder %s16, 3
    %p114 = por %p112, %p113
    %p116 = scmp.ne.s32.totalorder %s101, %s115
    %p117 = scmp.eq.s32.totalorder %s16, 0
    %p118 = por %p116, %p117
    %s119 = ssub.s32 %s17, %s29
    %p120 = scmp.eq.s32.totalorder %s119, 0
    %s122 = sadd.s32 %s121, 1
    %s123 = scalar_select %p120, %s121, %s122
    %p126 = pneg %p120
    %p127 = scmp.eq.s32.totalorder %s10, 3
    %p128 = por %p126, %p127
    %p129 = scmp.ne.s32.totalorder %s121, %s124
    %p130 = scmp.eq.s32.totalorder %s10, 0
    %p131 = por %p129, %p130
    %p132 = scmp.ne.s32.totalorder %s121, %s124
    %p133 = scmp.eq.s32.totalorder %s15, 3
    %p134 = por %p132, %p133
    %p135 = scmp.ne.s32.totalorder %s124, %s125
    %p136 = scmp.eq.s32.totalorder %s15, 0
    %p137 = por %p135, %p136
    %p138 = scmp.ne.s32.totalorder %s124, %s125
    %p139 = scmp.eq.s32.totalorder %s16, 3
    %p140 = por %p138, %p139
    %p142 = scmp.ne.s32.totalorder %s125, %s141
    %p143 = scmp.eq.s32.totalorder %s16, 0
    %p144 = por %p142, %p143
    %p145 = scmp.le.s32.totalorder 1, %s10
    %p146 = scmp.lt.s32.totalorder %s10, 5
    %p147 = pnand %p145, %p146
    %p148 = pneg %p147
    // Predicated region
    $region9: #{cond_crp_block.1} parent=5 // pred_check
      _
    $region10: #{cond_crp_block.1} parent=5 // pred_check_branch
      %150 = sbr.rel (%p147) target = $region12
    $region11: #{cond_crp_block.1} parent=5 // pred_region
      %s151 = ssub.s32 %s10, 1
      // Predicated region
      $region13: #{cond_crp_block.1} parent=11 // pred_check
        %p152 = pneg %p69
      $region14: #{cond_crp_block.1} parent=11 // pred_check_branch
        %154 = sbr.rel (%p152) target = $region16
      $region15: #{cond_crp_block.1} parent=11 // pred_region
        _
      $region16: #{cond_crp_block.1} parent=11 // pred_fallthru
        _
      // Predicated region
      $region17: #{cond_crp_block.1} parent=11 // pred_check
        %p155 = pneg %p90
      $region18: #{cond_crp_block.1} parent=11 // pred_check_branch
        %157 = sbr.rel (%p155) target = $region20
      $region19: #{cond_crp_block.1} parent=11 // pred_region
        _
      $region20: #{cond_crp_block.1} parent=11 // pred_fallthru
        _
      // Predicated region
      $region21: #{cond_crp_block.1} parent=11 // pred_check
        %p158 = pneg %p111
      $region22: #{cond_crp_block.1} parent=11 // pred_check_branch
        %160 = sbr.rel (%p158) target = $region24
      $region23: #{cond_crp_block.1} parent=11 // pred_region
        _
      $region24: #{cond_crp_block.1} parent=11 // pred_fallthru
        _
    $region12: #{cond_crp_block.1} parent=5 // pred_fallthru
      _
    %p161 = scmp.lt.s32.totalorder %s10, 4
    // Predicated region
    $region25: #{cond_crp_block.1} parent=5 // pred_check
      %p162 = pneg %p161
    $region26: #{cond_crp_block.1} parent=5 // pred_check_branch
      %164 = sbr.rel (%p162) target = $region28
    $region27: #{cond_crp_block.1} parent=5 // pred_region
      // Predicated region
      $region29: #{cond_crp_block.1} parent=27 // pred_check
        %p165 = pneg %p42
      $region30: #{cond_crp_block.1} parent=27 // pred_check_branch
        %167 = sbr.rel (%p165) target = $region32
      $region31: #{cond_crp_block.1} parent=27 // pred_region
        %p168 = scmp.lt.s32.totalorder %s17, 1
        %s169 = scalar_select %p168, %s17, 1
        %s170 = smul.addr %s169, 32
        %s171 = smul.addr %s170, 8
        %s172 = scalar_lea.vmem %s0, %s171
      $region32: #{cond_crp_block.1} parent=27 // pred_fallthru
        _
    $region28: #{cond_crp_block.1} parent=5 // pred_fallthru
      _
    %p173 = scmp.le.s32.totalorder 1, %s10
    %p174 = scmp.lt.s32.totalorder %s10, 5
    %p175 = pnand %p173, %p174
    %p176 = pneg %p175
    // Predicated region
    $region33: #{cond_crp_block.1} parent=5 // pred_check
      _
    $region34: #{cond_crp_block.1} parent=5 // pred_check_branch
      %178 = sbr.rel (%p175) target = $region36
    $region35: #{cond_crp_block.1} parent=5 // pred_region
      %s179 = ssub.s32 %s10, 1
      %p180 = scmp.lt.s32.totalorder %s19, 1
      %s181 = scalar_select %p180, %s19, 1
      %s182 = smul.addr %s181, 32
      %s183 = smul.addr %s182, 8
      %s184 = scalar_lea.vmem %s0, %s183
      %p185 = pneg %p48
      %p186 = pneg %p45
      %p187 = pneg %p69
      %p188 = pneg %p66
      %p189 = pneg %p90
      %p190 = pneg %p87
      %p191 = pneg %p111
      %p192 = pneg %p108
      %p193 = pneg %p137
      %p194 = pneg %p134
      %p195 = scmp.lt.s32.totalorder %s19, 1
      %s196 = scalar_select %p195, %s19, 1
      %s197 = smul.addr %s196, 32
      %s198 = smul.addr %s197, 8
      %s199 = scalar_lea.vmem %s4, %s198
      %p200 = scmp.lt.s32.totalorder %s19, 1
      %s201 = scalar_select %p200, %s19, 1
      %s202 = smul.addr %s201, 32
      %s203 = smul.addr %s202, 8
      %s204 = scalar_lea.vmem %s0, %s203
      %p205 = scmp.lt.s32.totalorder %s19, 1
      %s206 = scalar_select %p205, %s19, 1
      %s207 = smul.addr %s206, 32
      %s208 = smul.addr %s207, 8
      %s209 = scalar_lea.vmem %s4, %s208
      %p211 = scmp.eq.s32.totalorder %s20, 0
      // Predicated region
      $region37: #{cond_crp_block.1} parent=35 // pred_check
        %p212 = pneg %p211
      $region38: #{cond_crp_block.1} parent=35 // pred_check_branch
        %214 = sbr.rel (%p212) target = $region40
      $region39: #{cond_crp_block.1} parent=35 // pred_region
        %v215 = vld [vmem:[%s204] sm:$0xff]
        %v216 = vld [vmem:[%s204 + $0x8] sm:$0xff]
        %v217 = vld [vmem:[%s204 + $0x10] sm:$0xff]
        %v218 = vld [vmem:[%s204 + $0x18] sm:$0xff]
        %v219 = vld [vmem:[%s204 + $0x20] sm:$0xff]
        %v220 = vld [vmem:[%s204 + $0x28] sm:$0xff]
        %v221 = vld [vmem:[%s204 + $0x30] sm:$0xff]
        %v222 = vld [vmem:[%s204 + $0x38] sm:$0xff]
        %v223 = vld [vmem:[%s204 + $0x40] sm:$0xff]
        %v224 = vld [vmem:[%s204 + $0x48] sm:$0xff]
        %v225 = vld [vmem:[%s204 + $0x50] sm:$0xff]
        %v226 = vld [vmem:[%s204 + $0x58] sm:$0xff]
        %v227 = vld [vmem:[%s204 + $0x60] sm:$0xff]
        %v228 = vld [vmem:[%s204 + $0x68] sm:$0xff]
        %v229 = vld [vmem:[%s204 + $0x70] sm:$0xff]
        %v230 = vld [vmem:[%s204 + $0x78] sm:$0xff]
        %v231 = vld [vmem:[%s204 + $0x80] sm:$0xff]
        %v232 = vld [vmem:[%s204 + $0x88] sm:$0xff]
        %v233 = vld [vmem:[%s204 + $0x90] sm:$0xff]
        %v234 = vld [vmem:[%s204 + $0x98] sm:$0xff]
        %v235 = vld [vmem:[%s204 + $0xa0] sm:$0xff]
        %v236 = vld [vmem:[%s204 + $0xa8] sm:$0xff]
        %v237 = vld [vmem:[%s204 + $0xb0] sm:$0xff]
        %v238 = vld [vmem:[%s204 + $0xb8] sm:$0xff]
        %v239 = vld [vmem:[%s204 + $0xc0] sm:$0xff]
        %v240 = vld [vmem:[%s204 + $0xc8] sm:$0xff]
        %v241 = vld [vmem:[%s204 + $0xd0] sm:$0xff]
        %v242 = vld [vmem:[%s204 + $0xd8] sm:$0xff]
        %v243 = vld [vmem:[%s204 + $0xe0] sm:$0xff]
        %v244 = vld [vmem:[%s204 + $0xe8] sm:$0xff]
        %v245 = vld [vmem:[%s204 + $0xf0] sm:$0xff]
        %v246 = vld [vmem:[%s204 + $0xf8] sm:$0xff]
        %v247 = vmax.f32 %v215, 0.0
        %v248 = vmax.f32 %v216, 0.0
        %v249 = vmax.f32 %v217, 0.0
        %v250 = vmax.f32 %v218, 0.0
        %v251 = vmax.f32 %v219, 0.0
        %v252 = vmax.f32 %v220, 0.0
        %v253 = vmax.f32 %v221, 0.0
        %v254 = vmax.f32 %v222, 0.0
        %v255 = vmax.f32 %v223, 0.0
        %v256 = vmax.f32 %v224, 0.0
        %v257 = vmax.f32 %v225, 0.0
        %v258 = vmax.f32 %v226, 0.0
        %v259 = vmax.f32 %v227, 0.0
        %v260 = vmax.f32 %v228, 0.0
        %v261 = vmax.f32 %v229, 0.0
        %v262 = vmax.f32 %v230, 0.0
        %v263 = vmax.f32 %v231, 0.0
        %v264 = vmax.f32 %v232, 0.0
        %v265 = vmax.f32 %v233, 0.0
        %v266 = vmax.f32 %v234, 0.0
        %v267 = vmax.f32 %v235, 0.0
        %v268 = vmax.f32 %v236, 0.0
        %v269 = vmax.f32 %v237, 0.0
        %v270 = vmax.f32 %v238, 0.0
        %v271 = vmax.f32 %v239, 0.0
        %v272 = vmax.f32 %v240, 0.0
        %v273 = vmax.f32 %v241, 0.0
        %v274 = vmax.f32 %v242, 0.0
        %v275 = vmax.f32 %v243, 0.0
        %v276 = vmax.f32 %v244, 0.0
        %v277 = vmax.f32 %v245, 0.0
        %v278 = vmax.f32 %v246, 0.0
        %vm279 = vcmask 31744
        %280 = vst.msk [vmem:[%s209] sm:$0xff] %vm279, %v247
        %281 = vst.msk [vmem:[%s209 + $0x8] sm:$0xff] %vm279, %v248
        %282 = vst.msk [vmem:[%s209 + $0x10] sm:$0xff] %vm279, %v249
        %283 = vst.msk [vmem:[%s209 + $0x18] sm:$0xff] %vm279, %v250
        %284 = vst.msk [vmem:[%s209 + $0x20] sm:$0xff] %vm279, %v251
        %285 = vst.msk [vmem:[%s209 + $0x28] sm:$0xff] %vm279, %v252
        %286 = vst.msk [vmem:[%s209 + $0x30] sm:$0xff] %vm279, %v253
        %287 = vst.msk [vmem:[%s209 + $0x38] sm:$0xff] %vm279, %v254
        %288 = vst.msk [vmem:[%s209 + $0x40] sm:$0xff] %vm279, %v255
        %289 = vst.msk [vmem:[%s209 + $0x48] sm:$0xff] %vm279, %v256
        %290 = vst.msk [vmem:[%s209 + $0x50] sm:$0xff] %vm279, %v257
        %291 = vst.msk [vmem:[%s209 + $0x58] sm:$0xff] %vm279, %v258
        %292 = vst.msk [vmem:[%s209 + $0x60] sm:$0xff] %vm279, %v259
        %293 = vst.msk [vmem:[%s209 + $0x68] sm:$0xff] %vm279, %v260
        %294 = vst.msk [vmem:[%s209 + $0x70] sm:$0xff] %vm279, %v261
        %295 = vst.msk [vmem:[%s209 + $0x78] sm:$0xff] %vm279, %v262
        %296 = vst.msk [vmem:[%s209 + $0x80] sm:$0xff] %vm279, %v263
        %297 = vst.msk [vmem:[%s209 + $0x88] sm:$0xff] %vm279, %v264
        %298 = vst.msk [vmem:[%s209 + $0x90] sm:$0xff] %vm279, %v265
        %299 = vst.msk [vmem:[%s209 + $0x98] sm:$0xff] %vm279, %v266
        %300 = vst.msk [vmem:[%s209 + $0xa0] sm:$0xff] %vm279, %v267
        %301 = vst.msk [vmem:[%s209 + $0xa8] sm:$0xff] %vm279, %v268
        %302 = vst.msk [vmem:[%s209 + $0xb0] sm:$0xff] %vm279, %v269
        %303 = vst.msk [vmem:[%s209 + $0xb8] sm:$0xff] %vm279, %v270
        %304 = vst.msk [vmem:[%s209 + $0xc0] sm:$0xff] %vm279, %v271
        %305 = vst.msk [vmem:[%s209 + $0xc8] sm:$0xff] %vm279, %v272
        %306 = vst.msk [vmem:[%s209 + $0xd0] sm:$0xff] %vm279, %v273
        %307 = vst.msk [vmem:[%s209 + $0xd8] sm:$0xff] %vm279, %v274
        %308 = vst.msk [vmem:[%s209 + $0xe0] sm:$0xff] %vm279, %v275
        %309 = vst.msk [vmem:[%s209 + $0xe8] sm:$0xff] %vm279, %v276
        %310 = vst.msk [vmem:[%s209 + $0xf0] sm:$0xff] %vm279, %v277
        %311 = vst.msk [vmem:[%s209 + $0xf8] sm:$0xff] %vm279, %v278
        %312 = vst.msk [vmem:[#allocation2] sm:$0xff] %vm279, %v247
        %313 = vst.msk [vmem:[#allocation2 + $0x8] sm:$0xff] %vm279, %v248
        %314 = vst.msk [vmem:[#allocation2 + $0x10] sm:$0xff] %vm279, %v249
        %315 = vst.msk [vmem:[#allocation2 + $0x18] sm:$0xff] %vm279, %v250
        %316 = vst.msk [vmem:[#allocation2 + $0x20] sm:$0xff] %vm279, %v251
        %317 = vst.msk [vmem:[#allocation2 + $0x28] sm:$0xff] %vm279, %v252
        %318 = vst.msk [vmem:[#allocation2 + $0x30] sm:$0xff] %vm279, %v253
        %319 = vst.msk [vmem:[#allocation2 + $0x38] sm:$0xff] %vm279, %v254
        %320 = vst.msk [vmem:[#allocation2 + $0x40] sm:$0xff] %vm279, %v255
        %321 = vst.msk [vmem:[#allocation2 + $0x48] sm:$0xff] %vm279, %v256
        %322 = vst.msk [vmem:[#allocation2 + $0x50] sm:$0xff] %vm279, %v257
        %323 = vst.msk [vmem:[#allocation2 + $0x58] sm:$0xff] %vm279, %v258
        %324 = vst.msk [vmem:[#allocation2 + $0x60] sm:$0xff] %vm279, %v259
        %325 = vst.msk [vmem:[#allocation2 + $0x68] sm:$0xff] %vm279, %v260
        %326 = vst.msk [vmem:[#allocation2 + $0x70] sm:$0xff] %vm279, %v261
        %327 = vst.msk [vmem:[#allocation2 + $0x78] sm:$0xff] %vm279, %v262
        %328 = vst.msk [vmem:[#allocation2 + $0x80] sm:$0xff] %vm279, %v263
        %329 = vst.msk [vmem:[#allocation2 + $0x88] sm:$0xff] %vm279, %v264
        %330 = vst.msk [vmem:[#allocation2 + $0x90] sm:$0xff] %vm279, %v265
        %331 = vst.msk [vmem:[#allocation2 + $0x98] sm:$0xff] %vm279, %v266
        %332 = vst.msk [vmem:[#allocation2 + $0xa0] sm:$0xff] %vm279, %v267
        %333 = vst.msk [vmem:[#allocation2 + $0xa8] sm:$0xff] %vm279, %v268
        %334 = vst.msk [vmem:[#allocation2 + $0xb0] sm:$0xff] %vm279, %v269
        %335 = vst.msk [vmem:[#allocation2 + $0xb8] sm:$0xff] %vm279, %v270
        %336 = vst.msk [vmem:[#allocation2 + $0xc0] sm:$0xff] %vm279, %v271
        %337 = vst.msk [vmem:[#allocation2 + $0xc8] sm:$0xff] %vm279, %v272
        %338 = vst.msk [vmem:[#allocation2 + $0xd0] sm:$0xff] %vm279, %v273
        %339 = vst.msk [vmem:[#allocation2 + $0xd8] sm:$0xff] %vm279, %v274
        %340 = vst.msk [vmem:[#allocation2 + $0xe0] sm:$0xff] %vm279, %v275
        %341 = vst.msk [vmem:[#allocation2 + $0xe8] sm:$0xff] %vm279, %v276
        %342 = vst.msk [vmem:[#allocation2 + $0xf0] sm:$0xff] %vm279, %v277
        %343 = vst.msk [vmem:[#allocation2 + $0xf8] sm:$0xff] %vm279, %v278
        %344 = vst.msk [vmem:[#allocation3] sm:$0xff] %vm279, 0.0
        %345 = vst.msk [vmem:[#allocation3 + $0x8] sm:$0xff] %vm279, 0.0
        %346 = vst.msk [vmem:[#allocation3 + $0x10] sm:$0xff] %vm279, 0.0
        %347 = vst.msk [vmem:[#allocation3 + $0x18] sm:$0xff] %vm279, 0.0
        %s348 = scalar_lea.vmem [#allocation3], 288
        %349 = vst.msk [vmem:[%s348] sm:$0xff] %vm279, 0.0
        %350 = vst.msk [vmem:[%s348 + $0x8] sm:$0xff] %vm279, 0.0
        %351 = vst.msk [vmem:[%s348 + $0x10] sm:$0xff] %vm279, 0.0
        %352 = vst.msk [vmem:[%s348 + $0x18] sm:$0xff] %vm279, 0.0
        %vm353 = vcmask 93184
        %354 = vst.msk [vmem:[#allocation4] sm:$0xf] %vm353, 0
        %355 = vst.msk [vmem:[#allocation4 + $0x4] sm:$0xf] %vm353, 0
        %s356 = scalar_lea.vmem [#allocation4], 136
        %357 = vst.msk [vmem:[%s356] sm:$0xf] %vm353, 0
        %358 = vst.msk [vmem:[%s356 + $0x4] sm:$0xf] %vm353, 0
      $region40: #{cond_crp_block.1} parent=35 // pred_fallthru
        _
      %v359 = vld [vmem:[#allocation2] sm:$0xff]
      %v360 = vld [vmem:[#allocation2 + $0x8] sm:$0xff]
      %v361 = vld [vmem:[#allocation2 + $0x10] sm:$0xff]
      %v362 = vld [vmem:[#allocation2 + $0x18] sm:$0xff]
      %v363 = vld [vmem:[#allocation2 + $0x20] sm:$0xff]
      %v364 = vld [vmem:[#allocation2 + $0x28] sm:$0xff]
      %v365 = vld [vmem:[#allocation2 + $0x30] sm:$0xff]
      %v366 = vld [vmem:[#allocation2 + $0x38] sm:$0xff]
      %v367 = vld [vmem:[#allocation2 + $0x40] sm:$0xff]
      %v368 = vld [vmem:[#allocation2 + $0x48] sm:$0xff]
      %v369 = vld [vmem:[#allocation2 + $0x50] sm:$0xff]
      %v370 = vld [vmem:[#allocation2 + $0x58] sm:$0xff]
      %v371 = vld [vmem:[#allocation2 + $0x60] sm:$0xff]
      %v372 = vld [vmem:[#allocation2 + $0x68] sm:$0xff]
      %v373 = vld [vmem:[#allocation2 + $0x70] sm:$0xff]
      %v374 = vld [vmem:[#allocation2 + $0x78] sm:$0xff]
      %v375 = vld [vmem:[#allocation2 + $0x80] sm:$0xff]
      %v376 = vld [vmem:[#allocation2 + $0x88] sm:$0xff]
      %v377 = vld [vmem:[#allocation2 + $0x90] sm:$0xff]
      %v378 = vld [vmem:[#allocation2 + $0x98] sm:$0xff]
      %v379 = vld [vmem:[#allocation2 + $0xa0] sm:$0xff]
      %v380 = vld [vmem:[#allocation2 + $0xa8] sm:$0xff]
      %v381 = vld [vmem:[#allocation2 + $0xb0] sm:$0xff]
      %v382 = vld [vmem:[#allocation2 + $0xb8] sm:$0xff]
      %v383 = vld [vmem:[#allocation2 + $0xc0] sm:$0xff]
      %v384 = vld [vmem:[#allocation2 + $0xc8] sm:$0xff]
      %v385 = vld [vmem:[#allocation2 + $0xd0] sm:$0xff]
      %v386 = vld [vmem:[#allocation2 + $0xd8] sm:$0xff]
      %v387 = vld [vmem:[#allocation2 + $0xe0] sm:$0xff]
      %v388 = vld [vmem:[#allocation2 + $0xe8] sm:$0xff]
      %v389 = vld [vmem:[#allocation2 + $0xf0] sm:$0xff]
      %v390 = vld [vmem:[#allocation2 + $0xf8] sm:$0xff]
      %s391 = smul.u32 %s20, 2
      %s392 = sadd.s32 %s391, %s19
      %s393 = scalar_lea.vmem %s2, %s392
      %v394 = vld [vmem:[%s393] sm:$0x1]
      %s395 = scalar_lea.vmem %s3, %s392
      %v396 = vld [vmem:[%s395] sm:$0x1]
      %vm397 = vcmask 31744
      %v398 = vsel %vm397, %v359, 0.0
      %v399 = vsel %vm397, %v360, 0.0
      %v400 = vadd.f32 %v398, %v399
      %v401 = vsel %vm397, %v361, 0.0
      %v402 = vadd.f32 %v400, %v401
      %v403 = vsel %vm397, %v362, 0.0
      %v404 = vadd.f32 %v402, %v403
      %v405 = vsel %vm397, %v363, 0.0
      %v406 = vadd.f32 %v404, %v405
      %v407 = vsel %vm397, %v364, 0.0
      %v408 = vadd.f32 %v406, %v407
      %v409 = vsel %vm397, %v365, 0.0
      %v410 = vadd.f32 %v408, %v409
      %v411 = vsel %vm397, %v366, 0.0
      %v412 = vadd.f32 %v410, %v411
      %v413 = vsel %vm397, %v367, 0.0
      %v414 = vadd.f32 %v412, %v413
      %v415 = vsel %vm397, %v368, 0.0
      %v416 = vadd.f32 %v414, %v415
      %v417 = vsel %vm397, %v369, 0.0
      %v418 = vadd.f32 %v416, %v417
      %v419 = vsel %vm397, %v370, 0.0
      %v420 = vadd.f32 %v418, %v419
      %v421 = vsel %vm397, %v371, 0.0
      %v422 = vadd.f32 %v420, %v421
      %v423 = vsel %vm397, %v372, 0.0
      %v424 = vadd.f32 %v422, %v423
      %v425 = vsel %vm397, %v373, 0.0
      %v426 = vadd.f32 %v424, %v425
      %v427 = vsel %vm397, %v374, 0.0
      %v428 = vadd.f32 %v426, %v427
      %v429 = vsel %vm397, %v375, 0.0
      %v430 = vadd.f32 %v428, %v429
      %v431 = vsel %vm397, %v376, 0.0
      %v432 = vadd.f32 %v430, %v431
      %v433 = vsel %vm397, %v377, 0.0
      %v434 = vadd.f32 %v432, %v433
      %v435 = vsel %vm397, %v378, 0.0
      %v436 = vadd.f32 %v434, %v435
      %v437 = vsel %vm397, %v379, 0.0
      %v438 = vadd.f32 %v436, %v437
      %v439 = vsel %vm397, %v380, 0.0
      %v440 = vadd.f32 %v438, %v439
      %v441 = vsel %vm397, %v381, 0.0
      %v442 = vadd.f32 %v440, %v441
      %v443 = vsel %vm397, %v382, 0.0
      %v444 = vadd.f32 %v442, %v443
      %v445 = vsel %vm397, %v383, 0.0
      %v446 = vadd.f32 %v444, %v445
      %v447 = vsel %vm397, %v384, 0.0
      %v448 = vadd.f32 %v446, %v447
      %v449 = vsel %vm397, %v385, 0.0
      %v450 = vadd.f32 %v448, %v449
      %v451 = vsel %vm397, %v386, 0.0
      %v452 = vadd.f32 %v450, %v451
      %v453 = vsel %vm397, %v387, 0.0
      %v454 = vadd.f32 %v452, %v453
      %v455 = vsel %vm397, %v388, 0.0
      %v456 = vadd.f32 %v454, %v455
      %v457 = vsel %vm397, %v389, 0.0
      %v458 = vadd.f32 %v456, %v457
      %v459 = vsel %vm397, %v390, 0.0
      %v460 = vadd.f32 %v458, %v459
      %v461 = vrot.slane %v460, 4
      %v462 = vadd.f32 %v460, %v461
      %v463 = vrot.slane %v462, 2
      %v464 = vadd.f32 %v462, %v463
      %v465 = vrot.slane %v464, 1
      %v466 = vadd.f32 %v464, %v465
      %v467 = vrcp.pop 256.0
      %v468 = vmul.f32 256.0, %v467
      %v469 = vsub.f32 1.0, %v468
      %v470 = vmul.f32 %v467, %v469
      %v471 = vadd.f32 %v467, %v470
      %vm472 = vweird.f32 %v467
      %v473 = vsel %vm472, %v467, %v471
      %v474 = vmul.f32 %v466, %v473
      %v475 = vsub.f32 %v359, %v474
      %v476 = vsub.f32 %v360, %v474
      %v477 = vsub.f32 %v361, %v474
      %v478 = vsub.f32 %v362, %v474
      %v479 = vsub.f32 %v363, %v474
      %v480 = vsub.f32 %v364, %v474
      %v481 = vsub.f32 %v365, %v474
      %v482 = vsub.f32 %v366, %v474
      %v483 = vsub.f32 %v367, %v474
      %v484 = vsub.f32 %v368, %v474
      %v485 = vsub.f32 %v369, %v474
      %v486 = vsub.f32 %v370, %v474
      %v487 = vsub.f32 %v371, %v474
      %v488 = vsub.f32 %v372, %v474
      %v489 = vsub.f32 %v373, %v474
      %v490 = vsub.f32 %v374, %v474
      %v491 = vsub.f32 %v375, %v474
      %v492 = vsub.f32 %v376, %v474
      %v493 = vsub.f32 %v377, %v474
      %v494 = vsub.f32 %v378, %v474
      %v495 = vsub.f32 %v379, %v474
      %v496 = vsub.f32 %v380, %v474
      %v497 = vsub.f32 %v381, %v474
      %v498 = vsub.f32 %v382, %v474
      %v499 = vsub.f32 %v383, %v474
      %v500 = vsub.f32 %v384, %v474
      %v501 = vsub.f32 %v385, %v474
      %v502 = vsub.f32 %v386, %v474
      %v503 = vsub.f32 %v387, %v474
      %v504 = vsub.f32 %v388, %v474
      %v505 = vsub.f32 %v389, %v474
      %v506 = vsub.f32 %v390, %v474
      %v507 = vmul.f32 %v475, %v475
      %v508 = vmul.f32 %v476, %v476
      %v509 = vmul.f32 %v477, %v477
      %v510 = vmul.f32 %v478, %v478
      %v511 = vmul.f32 %v479, %v479
      %v512 = vmul.f32 %v480, %v480
      %v513 = vmul.f32 %v481, %v481
      %v514 = vmul.f32 %v482, %v482
      %v515 = vmul.f32 %v483, %v483
      %v516 = vmul.f32 %v484, %v484
      %v517 = vmul.f32 %v485, %v485
      %v518 = vmul.f32 %v486, %v486
      %v519 = vmul.f32 %v487, %v487
      %v520 = vmul.f32 %v488, %v488
      %v521 = vmul.f32 %v489, %v489
      %v522 = vmul.f32 %v490, %v490
      %v523 = vmul.f32 %v491, %v491
      %v524 = vmul.f32 %v492, %v492
      %v525 = vmul.f32 %v493, %v493
      %v526 = vmul.f32 %v494, %v494
      %v527 = vmul.f32 %v495, %v495
      %v528 = vmul.f32 %v496, %v496
      %v529 = vmul.f32 %v497, %v497
      %v530 = vmul.f32 %v498, %v498
      %v531 = vmul.f32 %v499, %v499
      %v532 = vmul.f32 %v500, %v500
      %v533 = vmul.f32 %v501, %v501
      %v534 = vmul.f32 %v502, %v502
      %v535 = vmul.f32 %v503, %v503
      %v536 = vmul.f32 %v504, %v504
      %v537 = vmul.f32 %v505, %v505
      %v538 = vmul.f32 %v506, %v506
      %v539 = vsel %vm397, %v507, 0.0
      %v540 = vsel %vm397, %v508, 0.0
      %v541 = vadd.f32 %v539, %v540
      %v542 = vsel %vm397, %v509, 0.0
      %v543 = vadd.f32 %v541, %v542
      %v544 = vsel %vm397, %v510, 0.0
      %v545 = vadd.f32 %v543, %v544
      %v546 = vsel %vm397, %v511, 0.0
      %v547 = vadd.f32 %v545, %v546
      %v548 = vsel %vm397, %v512, 0.0
      %v549 = vadd.f32 %v547, %v548
      %v550 = vsel %vm397, %v513, 0.0
      %v551 = vadd.f32 %v549, %v550
      %v552 = vsel %vm397, %v514, 0.0
      %v553 = vadd.f32 %v551, %v552
      %v554 = vsel %vm397, %v515, 0.0
      %v555 = vadd.f32 %v553, %v554
      %v556 = vsel %vm397, %v516, 0.0
      %v557 = vadd.f32 %v555, %v556
      %v558 = vsel %vm397, %v517, 0.0
      %v559 = vadd.f32 %v557, %v558
      %v560 = vsel %vm397, %v518, 0.0
      %v561 = vadd.f32 %v559, %v560
      %v562 = vsel %vm397, %v519, 0.0
      %v563 = vadd.f32 %v561, %v562
      %v564 = vsel %vm397, %v520, 0.0
      %v565 = vadd.f32 %v563, %v564
      %v566 = vsel %vm397, %v521, 0.0
      %v567 = vadd.f32 %v565, %v566
      %v568 = vsel %vm397, %v522, 0.0
      %v569 = vadd.f32 %v567, %v568
      %v570 = vsel %vm397, %v523, 0.0
      %v571 = vadd.f32 %v569, %v570
      %v572 = vsel %vm397, %v524, 0.0
      %v573 = vadd.f32 %v571, %v572
      %v574 = vsel %vm397, %v525, 0.0
      %v575 = vadd.f32 %v573, %v574
      %v576 = vsel %vm397, %v526, 0.0
      %v577 = vadd.f32 %v575, %v576
      %v578 = vsel %vm397, %v527, 0.0
      %v579 = vadd.f32 %v577, %v578
      %v580 = vsel %vm397, %v528, 0.0
      %v581 = vadd.f32 %v579, %v580
      %v582 = vsel %vm397, %v529, 0.0
      %v583 = vadd.f32 %v581, %v582
      %v584 = vsel %vm397, %v530, 0.0
      %v585 = vadd.f32 %v583, %v584
      %v586 = vsel %vm397, %v531, 0.0
      %v587 = vadd.f32 %v585, %v586
      %v588 = vsel %vm397, %v532, 0.0
      %v589 = vadd.f32 %v587, %v588
      %v590 = vsel %vm397, %v533, 0.0
      %v591 = vadd.f32 %v589, %v590
      %v592 = vsel %vm397, %v534, 0.0
      %v593 = vadd.f32 %v591, %v592
      %v594 = vsel %vm397, %v535, 0.0
      %v595 = vadd.f32 %v593, %v594
      %v596 = vsel %vm397, %v536, 0.0
      %v597 = vadd.f32 %v595, %v596
      %v598 = vsel %vm397, %v537, 0.0
      %v599 = vadd.f32 %v597, %v598
      %v600 = vsel %vm397, %v538, 0.0
      %v601 = vadd.f32 %v599, %v600
      %v602 = vrot.slane %v601, 4
      %v603 = vadd.f32 %v601, %v602
      %v604 = vrot.slane %v603, 2
      %v605 = vadd.f32 %v603, %v604
      %v606 = vrot.slane %v605, 1
      %v607 = vadd.f32 %v605, %v606
      %v608 = vmul.f32 %v607, %v473
      %v609 = vadd.f32 %v608, 1e-05
      %v610 = vrsqrt.pop %v609
      %v611 = vmul.f32 %v610, %v609
      %v612 = vmul.f32 %v611, %v610
      %v613 = vmul.f32 0.5, %v612
      %v614 = vsub.f32 1.5, %v613
      %v615 = vmul.f32 %v610, %v614
      %vm616 = vweird.f32 %v609
      %vm617 = vweird.f32 %v610
      %vm618 = vmor %vm616, %vm617
      %v619 = vsel %vm618, %v610, %v615
      %v620 = vmul.f32 %v475, %v619
      %v621 = vmul.f32 %v476, %v619
      %v622 = vmul.f32 %v477, %v619
      %v623 = vmul.f32 %v478, %v619
      %v624 = vmul.f32 %v479, %v619
      %v625 = vmul.f32 %v480, %v619
      %v626 = vmul.f32 %v481, %v619
      %v627 = vmul.f32 %v482, %v619
      %v628 = vmul.f32 %v483, %v619
      %v629 = vmul.f32 %v484, %v619
      %v630 = vmul.f32 %v485, %v619
      %v631 = vmul.f32 %v486, %v619
      %v632 = vmul.f32 %v487, %v619
      %v633 = vmul.f32 %v488, %v619
      %v634 = vmul.f32 %v489, %v619
      %v635 = vmul.f32 %v490, %v619
      %v636 = vmul.f32 %v491, %v619
      %v637 = vmul.f32 %v492, %v619
      %v638 = vmul.f32 %v493, %v619
      %v639 = vmul.f32 %v494, %v619
      %v640 = vmul.f32 %v495, %v619
      %v641 = vmul.f32 %v496, %v619
      %v642 = vmul.f32 %v497, %v619
      %v643 = vmul.f32 %v498, %v619
      %v644 = vmul.f32 %v499, %v619
      %v645 = vmul.f32 %v500, %v619
      %v646 = vmul.f32 %v501, %v619
      %v647 = vmul.f32 %v502, %v619
      %v648 = vmul.f32 %v503, %v619
      %v649 = vmul.f32 %v504, %v619
      %v650 = vmul.f32 %v505, %v619
      %v651 = vmul.f32 %v506, %v619
      %v653 = vperm.slane %v394, 0
      %v655 = vmul.f32 %v620, %v653
      %v656 = vmul.f32 %v621, %v653
      %v657 = vmul.f32 %v622, %v653
      %v658 = vmul.f32 %v623, %v653
      %v659 = vmul.f32 %v624, %v653
      %v660 = vmul.f32 %v625, %v653
      %v661 = vmul.f32 %v626, %v653
      %v662 = vmul.f32 %v627, %v653
      %v663 = vmul.f32 %v628, %v653
      %v664 = vmul.f32 %v629, %v653
      %v665 = vmul.f32 %v630, %v653
      %v666 = vmul.f32 %v631, %v653
      %v667 = vmul.f32 %v632, %v653
      %v668 = vmul.f32 %v633, %v653
      %v669 = vmul.f32 %v634, %v653
      %v670 = vmul.f32 %v635, %v653
      %v671 = vmul.f32 %v636, %v653
      %v672 = vmul.f32 %v637, %v653
      %v673 = vmul.f32 %v638, %v653
      %v674 = vmul.f32 %v639, %v653
      %v675 = vmul.f32 %v640, %v653
      %v676 = vmul.f32 %v641, %v653
      %v677 = vmul.f32 %v642, %v653
      %v678 = vmul.f32 %v643, %v653
      %v679 = vmul.f32 %v644, %v653
      %v680 = vmul.f32 %v645, %v653
      %v681 = vmul.f32 %v646, %v653
      %v682 = vmul.f32 %v647, %v653
      %v683 = vmul.f32 %v648, %v653
      %v684 = vmul.f32 %v649, %v653
      %v685 = vmul.f32 %v650, %v653
      %v686 = vmul.f32 %v651, %v653
      %v688 = vperm.slane %v396, 0
      %v690 = vadd.f32 %v655, %v688
      %v691 = vadd.f32 %v656, %v688
      %v692 = vadd.f32 %v657, %v688
      %v693 = vadd.f32 %v658, %v688
      %v694 = vadd.f32 %v659, %v688
      %v695 = vadd.f32 %v660, %v688
      %v696 = vadd.f32 %v661, %v688
      %v697 = vadd.f32 %v662, %v688
      %v698 = vadd.f32 %v663, %v688
      %v699 = vadd.f32 %v664, %v688
      %v700 = vadd.f32 %v665, %v688
      %v701 = vadd.f32 %v666, %v688
      %v702 = vadd.f32 %v667, %v688
      %v703 = vadd.f32 %v668, %v688
      %v704 = vadd.f32 %v669, %v688
      %v705 = vadd.f32 %v670, %v688
      %v706 = vadd.f32 %v671, %v688
      %v707 = vadd.f32 %v672, %v688
      %v708 = vadd.f32 %v673, %v688
      %v709 = vadd.f32 %v674, %v688
      %v710 = vadd.f32 %v675, %v688
      %v711 = vadd.f32 %v676, %v688
      %v712 = vadd.f32 %v677, %v688
      %v713 = vadd.f32 %v678, %v688
      %v714 = vadd.f32 %v679, %v688
      %v715 = vadd.f32 %v680, %v688
      %v716 = vadd.f32 %v681, %v688
      %v717 = vadd.f32 %v682, %v688
      %v718 = vadd.f32 %v683, %v688
      %v719 = vadd.f32 %v684, %v688
      %v720 = vadd.f32 %v685, %v688
      %v721 = vadd.f32 %v686, %v688
      %v722 = vlaneseq
      %v723 = vshrl.u32 %v722, 7
      %v724 = vadd.s32 %v723, 8
      %vm725 = vcmp.ge.s32.totalorder %v723, 1
      %vm726 = vcmp.ge.s32.totalorder %v724, 1
      %vm727 = vcmp.ge.s32.totalorder %v723, 2
      %vm728 = vcmp.ge.s32.totalorder %v724, 2
      %vm729 = vcmp.lt.s32.totalorder %v723, 15
      %vm730 = vcmp.lt.s32.totalorder %v724, 15
      %vm731 = vcmp.lt.s32.totalorder %v723, 14
      %vm732 = vcmp.lt.s32.totalorder %v724, 14
      %s733 = scalar_lea.vmem [#allocation3], 32
      %734 = vst.msk [vmem:[%s733] sm:$0xff] %vm397, %v690
      %735 = vst.msk [vmem:[%s733 + $0x8] sm:$0xff] %vm397, %v691
      %736 = vst.msk [vmem:[%s733 + $0x10] sm:$0xff] %vm397, %v692
      %737 = vst.msk [vmem:[%s733 + $0x18] sm:$0xff] %vm397, %v693
      %738 = vst.msk [vmem:[%s733 + $0x20] sm:$0xff] %vm397, %v694
      %739 = vst.msk [vmem:[%s733 + $0x28] sm:$0xff] %vm397, %v695
      %740 = vst.msk [vmem:[%s733 + $0x30] sm:$0xff] %vm397, %v696
      %741 = vst.msk [vmem:[%s733 + $0x38] sm:$0xff] %vm397, %v697
      %742 = vst.msk [vmem:[%s733 + $0x40] sm:$0xff] %vm397, %v698
      %743 = vst.msk [vmem:[%s733 + $0x48] sm:$0xff] %vm397, %v699
      %744 = vst.msk [vmem:[%s733 + $0x50] sm:$0xff] %vm397, %v700
      %745 = vst.msk [vmem:[%s733 + $0x58] sm:$0xff] %vm397, %v701
      %746 = vst.msk [vmem:[%s733 + $0x60] sm:$0xff] %vm397, %v702
      %747 = vst.msk [vmem:[%s733 + $0x68] sm:$0xff] %vm397, %v703
      %748 = vst.msk [vmem:[%s733 + $0x70] sm:$0xff] %vm397, %v704
      %749 = vst.msk [vmem:[%s733 + $0x78] sm:$0xff] %vm397, %v705
      %750 = vst.msk [vmem:[%s733 + $0x80] sm:$0xff] %vm397, %v706
      %751 = vst.msk [vmem:[%s733 + $0x88] sm:$0xff] %vm397, %v707
      %752 = vst.msk [vmem:[%s733 + $0x90] sm:$0xff] %vm397, %v708
      %753 = vst.msk [vmem:[%s733 + $0x98] sm:$0xff] %vm397, %v709
      %754 = vst.msk [vmem:[%s733 + $0xa0] sm:$0xff] %vm397, %v710
      %755 = vst.msk [vmem:[%s733 + $0xa8] sm:$0xff] %vm397, %v711
      %756 = vst.msk [vmem:[%s733 + $0xb0] sm:$0xff] %vm397, %v712
      %757 = vst.msk [vmem:[%s733 + $0xb8] sm:$0xff] %vm397, %v713
      %758 = vst.msk [vmem:[%s733 + $0xc0] sm:$0xff] %vm397, %v714
      %759 = vst.msk [vmem:[%s733 + $0xc8] sm:$0xff] %vm397, %v715
      %760 = vst.msk [vmem:[%s733 + $0xd0] sm:$0xff] %vm397, %v716
      %761 = vst.msk [vmem:[%s733 + $0xd8] sm:$0xff] %vm397, %v717
      %762 = vst.msk [vmem:[%s733 + $0xe0] sm:$0xff] %vm397, %v718
      %763 = vst.msk [vmem:[%s733 + $0xe8] sm:$0xff] %vm397, %v719
      %764 = vst.msk [vmem:[%s733 + $0xf0] sm:$0xff] %vm397, %v720
      %765 = vst.msk [vmem:[%s733 + $0xf8] sm:$0xff] %vm397, %v721
      %v766 = vld [vmem:[#allocation3] sm:$0xff]
      %v767 = vld [vmem:[#allocation3 + $0x8] sm:$0xff]
      %v768 = vld [vmem:[#allocation3 + $0x10] sm:$0xff]
      %v769 = vld [vmem:[#allocation3 + $0x18] sm:$0xff]
      %v770 = vld [vmem:[#allocation3 + $0x20] sm:$0xff]
      %v771 = vld [vmem:[#allocation3 + $0x28] sm:$0xff]
      %v772 = vld [vmem:[#allocation3 + $0x30] sm:$0xff]
      %v773 = vld [vmem:[#allocation3 + $0x38] sm:$0xff]
      %v774 = vld [vmem:[#allocation3 + $0x40] sm:$0xff]
      %v775 = vld [vmem:[#allocation3 + $0x48] sm:$0xff]
      %v776 = vld [vmem:[#allocation3 + $0x50] sm:$0xff]
      %v777 = vld [vmem:[#allocation3 + $0x58] sm:$0xff]
      %v778 = vld [vmem:[#allocation3 + $0x60] sm:$0xff]
      %v779 = vld [vmem:[#allocation3 + $0x68] sm:$0xff]
      %v780 = vld [vmem:[#allocation3 + $0x70] sm:$0xff]
      %v781 = vld [vmem:[#allocation3 + $0x78] sm:$0xff]
      %v782 = vld [vmem:[#allocation3 + $0x80] sm:$0xff]
      %v783 = vld [vmem:[#allocation3 + $0x88] sm:$0xff]
      %v784 = vld [vmem:[#allocation3 + $0x90] sm:$0xff]
      %v785 = vld [vmem:[#allocation3 + $0x98] sm:$0xff]
      %v786 = vld [vmem:[#allocation3 + $0xa0] sm:$0xff]
      %v787 = vld [vmem:[#allocation3 + $0xa8] sm:$0xff]
      %v788 = vld [vmem:[#allocation3 + $0xb0] sm:$0xff]
      %v789 = vld [vmem:[#allocation3 + $0xb8] sm:$0xff]
      %v790 = vld [vmem:[#allocation3 + $0xc0] sm:$0xff]
      %v791 = vld [vmem:[#allocation3 + $0xc8] sm:$0xff]
      %v792 = vld [vmem:[#allocation3 + $0xd0] sm:$0xff]
      %v793 = vld [vmem:[#allocation3 + $0xd8] sm:$0xff]
      %v794 = vld [vmem:[#allocation3 + $0xe0] sm:$0xff]
      %v795 = vld [vmem:[#allocation3 + $0xe8] sm:$0xff]
      %v796 = vld [vmem:[#allocation3 + $0xf0] sm:$0xff]
      %v797 = vld [vmem:[#allocation3 + $0xf8] sm:$0xff]
      %s798 = scalar_lea.vmem [#allocation3], 16
      %v799 = vld [vmem:[%s798] sm:$0xff]
      %v800 = vld [vmem:[%s798 + $0x8] sm:$0xff]
      %v801 = vld [vmem:[%s798 + $0x10] sm:$0xff]
      %v802 = vld [vmem:[%s798 + $0x18] sm:$0xff]
      %v803 = vld [vmem:[%s798 + $0x20] sm:$0xff]
      %v804 = vld [vmem:[%s798 + $0x28] sm:$0xff]
      %v805 = vld [vmem:[%s798 + $0x30] sm:$0xff]
      %v806 = vld [vmem:[%s798 + $0x38] sm:$0xff]
      %v807 = vld [vmem:[%s798 + $0x40] sm:$0xff]
      %v808 = vld [vmem:[%s798 + $0x48] sm:$0xff]
      %v809 = vld [vmem:[%s798 + $0x50] sm:$0xff]
      %v810 = vld [vmem:[%s798 + $0x58] sm:$0xff]
      %v811 = vld [vmem:[%s798 + $0x60] sm:$0xff]
      %v812 = vld [vmem:[%s798 + $0x68] sm:$0xff]
      %v813 = vld [vmem:[%s798 + $0x70] sm:$0xff]
      %v814 = vld [vmem:[%s798 + $0x78] sm:$0xff]
      %v815 = vld [vmem:[%s798 + $0x80] sm:$0xff]
      %v816 = vld [vmem:[%s798 + $0x88] sm:$0xff]
      %v817 = vld [vmem:[%s798 + $0x90] sm:$0xff]
      %v818 = vld [vmem:[%s798 + $0x98] sm:$0xff]
      %v819 = vld [vmem:[%s798 + $0xa0] sm:$0xff]
      %v820 = vld [vmem:[%s798 + $0xa8] sm:$0xff]
      %v821 = vld [vmem:[%s798 + $0xb0] sm:$0xff]
      %v822 = vld [vmem:[%s798 + $0xb8] sm:$0xff]
      %v823 = vld [vmem:[%s798 + $0xc0] sm:$0xff]
      %v824 = vld [vmem:[%s798 + $0xc8] sm:$0xff]
      %v825 = vld [vmem:[%s798 + $0xd0] sm:$0xff]
      %v826 = vld [vmem:[%s798 + $0xd8] sm:$0xff]
      %v827 = vld [vmem:[%s798 + $0xe0] sm:$0xff]
      %v828 = vld [vmem:[%s798 + $0xe8] sm:$0xff]
      %v829 = vld [vmem:[%s798 + $0xf0] sm:$0xff]
      %v830 = vld [vmem:[%s798 + $0xf8] sm:$0xff]
      %v831 = vadd.f32 %v766, %v799
      %v832 = vadd.f32 %v767, %v800
      %v833 = vadd.f32 %v768, %v801
      %v834 = vadd.f32 %v769, %v802
      %v835 = vadd.f32 %v770, %v803
      %v836 = vadd.f32 %v771, %v804
      %v837 = vadd.f32 %v772, %v805
      %v838 = vadd.f32 %v773, %v806
      %v839 = vadd.f32 %v774, %v807
      %v840 = vadd.f32 %v775, %v808
      %v841 = vadd.f32 %v776, %v809
      %v842 = vadd.f32 %v777, %v810
      %v843 = vadd.f32 %v778, %v811
      %v844 = vadd.f32 %v779, %v812
      %v845 = vadd.f32 %v780, %v813
      %v846 = vadd.f32 %v781, %v814
      %v847 = vadd.f32 %v782, %v815
      %v848 = vadd.f32 %v783, %v816
      %v849 = vadd.f32 %v784, %v817
      %v850 = vadd.f32 %v785, %v818
      %v851 = vadd.f32 %v786, %v819
      %v852 = vadd.f32 %v787, %v820
      %v853 = vadd.f32 %v788, %v821
      %v854 = vadd.f32 %v789, %v822
      %v855 = vadd.f32 %v790, %v823
      %v856 = vadd.f32 %v791, %v824
      %v857 = vadd.f32 %v792, %v825
      %v858 = vadd.f32 %v793, %v826
      %v859 = vadd.f32 %v794, %v827
      %v860 = vadd.f32 %v795, %v828
      %v861 = vadd.f32 %v796, %v829
      %v862 = vadd.f32 %v797, %v830
      %v863 = vld [vmem:[%s733] sm:$0xff]
      %v864 = vld [vmem:[%s733 + $0x8] sm:$0xff]
      %v865 = vld [vmem:[%s733 + $0x10] sm:$0xff]
      %v866 = vld [vmem:[%s733 + $0x18] sm:$0xff]
      %v867 = vld [vmem:[%s733 + $0x20] sm:$0xff]
      %v868 = vld [vmem:[%s733 + $0x28] sm:$0xff]
      %v869 = vld [vmem:[%s733 + $0x30] sm:$0xff]
      %v870 = vld [vmem:[%s733 + $0x38] sm:$0xff]
      %v871 = vld [vmem:[%s733 + $0x40] sm:$0xff]
      %v872 = vld [vmem:[%s733 + $0x48] sm:$0xff]
      %v873 = vld [vmem:[%s733 + $0x50] sm:$0xff]
      %v874 = vld [vmem:[%s733 + $0x58] sm:$0xff]
      %v875 = vld [vmem:[%s733 + $0x60] sm:$0xff]
      %v876 = vld [vmem:[%s733 + $0x68] sm:$0xff]
      %v877 = vld [vmem:[%s733 + $0x70] sm:$0xff]
      %v878 = vld [vmem:[%s733 + $0x78] sm:$0xff]
      %v879 = vld [vmem:[%s733 + $0x80] sm:$0xff]
      %v880 = vld [vmem:[%s733 + $0x88] sm:$0xff]
      %v881 = vld [vmem:[%s733 + $0x90] sm:$0xff]
      %v882 = vld [vmem:[%s733 + $0x98] sm:$0xff]
      %v883 = vld [vmem:[%s733 + $0xa0] sm:$0xff]
      %v884 = vld [vmem:[%s733 + $0xa8] sm:$0xff]
      %v885 = vld [vmem:[%s733 + $0xb0] sm:$0xff]
      %v886 = vld [vmem:[%s733 + $0xb8] sm:$0xff]
      %v887 = vld [vmem:[%s733 + $0xc0] sm:$0xff]
      %v888 = vld [vmem:[%s733 + $0xc8] sm:$0xff]
      %v889 = vld [vmem:[%s733 + $0xd0] sm:$0xff]
      %v890 = vld [vmem:[%s733 + $0xd8] sm:$0xff]
      %v891 = vld [vmem:[%s733 + $0xe0] sm:$0xff]
      %v892 = vld [vmem:[%s733 + $0xe8] sm:$0xff]
      %v893 = vld [vmem:[%s733 + $0xf0] sm:$0xff]
      %v894 = vld [vmem:[%s733 + $0xf8] sm:$0xff]
      %v895 = vadd.f32 %v831, %v863
      %v896 = vadd.f32 %v832, %v864
      %v897 = vadd.f32 %v833, %v865
      %v898 = vadd.f32 %v834, %v866
      %v899 = vadd.f32 %v835, %v867
      %v900 = vadd.f32 %v836, %v868
      %v901 = vadd.f32 %v837, %v869
      %v902 = vadd.f32 %v838, %v870
      %v903 = vadd.f32 %v839, %v871
      %v904 = vadd.f32 %v840, %v872
      %v905 = vadd.f32 %v841, %v873
      %v906 = vadd.f32 %v842, %v874
      %v907 = vadd.f32 %v843, %v875
      %v908 = vadd.f32 %v844, %v876
      %v909 = vadd.f32 %v845, %v877
      %v910 = vadd.f32 %v846, %v878
      %v911 = vadd.f32 %v847, %v879
      %v912 = vadd.f32 %v848, %v880
      %v913 = vadd.f32 %v849, %v881
      %v914 = vadd.f32 %v850, %v882
      %v915 = vadd.f32 %v851, %v883
      %v916 = vadd.f32 %v852, %v884
      %v917 = vadd.f32 %v853, %v885
      %v918 = vadd.f32 %v854, %v886
      %v919 = vadd.f32 %v855, %v887
      %v920 = vadd.f32 %v856, %v888
      %v921 = vadd.f32 %v857, %v889
      %v922 = vadd.f32 %v858, %v890
      %v923 = vadd.f32 %v859, %v891
      %v924 = vadd.f32 %v860, %v892
      %v925 = vadd.f32 %v861, %v893
      %v926 = vadd.f32 %v862, %v894
      %s927 = scalar_lea.vmem [#allocation3], 48
      %v928 = vld [vmem:[%s927] sm:$0xff]
      %v929 = vld [vmem:[%s927 + $0x8] sm:$0xff]
      %v930 = vld [vmem:[%s927 + $0x10] sm:$0xff]
      %v931 = vld [vmem:[%s927 + $0x18] sm:$0xff]
      %v932 = vld [vmem:[%s927 + $0x20] sm:$0xff]
      %v933 = vld [vmem:[%s927 + $0x28] sm:$0xff]
      %v934 = vld [vmem:[%s927 + $0x30] sm:$0xff]
      %v935 = vld [vmem:[%s927 + $0x38] sm:$0xff]
      %v936 = vld [vmem:[%s927 + $0x40] sm:$0xff]
      %v937 = vld [vmem:[%s927 + $0x48] sm:$0xff]
      %v938 = vld [vmem:[%s927 + $0x50] sm:$0xff]
      %v939 = vld [vmem:[%s927 + $0x58] sm:$0xff]
      %v940 = vld [vmem:[%s927 + $0x60] sm:$0xff]
      %v941 = vld [vmem:[%s927 + $0x68] sm:$0xff]
      %v942 = vld [vmem:[%s927 + $0x70] sm:$0xff]
      %v943 = vld [vmem:[%s927 + $0x78] sm:$0xff]
      %v944 = vld [vmem:[%s927 + $0x80] sm:$0xff]
      %v945 = vld [vmem:[%s927 + $0x88] sm:$0xff]
      %v946 = vld [vmem:[%s927 + $0x90] sm:$0xff]
      %v947 = vld [vmem:[%s927 + $0x98] sm:$0xff]
      %v948 = vld [vmem:[%s927 + $0xa0] sm:$0xff]
      %v949 = vld [vmem:[%s927 + $0xa8] sm:$0xff]
      %v950 = vld [vmem:[%s927 + $0xb0] sm:$0xff]
      %v951 = vld [vmem:[%s927 + $0xb8] sm:$0xff]
      %v952 = vld [vmem:[%s927 + $0xc0] sm:$0xff]
      %v953 = vld [vmem:[%s927 + $0xc8] sm:$0xff]
      %v954 = vld [vmem:[%s927 + $0xd0] sm:$0xff]
      %v955 = vld [vmem:[%s927 + $0xd8] sm:$0xff]
      %v956 = vld [vmem:[%s927 + $0xe0] sm:$0xff]
      %v957 = vld [vmem:[%s927 + $0xe8] sm:$0xff]
      %v958 = vld [vmem:[%s927 + $0xf0] sm:$0xff]
      %v959 = vld [vmem:[%s927 + $0xf8] sm:$0xff]
      %v960 = vadd.f32 %v895, %v928
      %v961 = vadd.f32 %v896, %v929
      %v962 = vadd.f32 %v897, %v930
      %v963 = vadd.f32 %v898, %v931
      %v964 = vadd.f32 %v899, %v932
      %v965 = vadd.f32 %v900, %v933
      %v966 = vadd.f32 %v901, %v934
      %v967 = vadd.f32 %v902, %v935
      %v968 = vadd.f32 %v903, %v936
      %v969 = vadd.f32 %v904, %v937
      %v970 = vadd.f32 %v905, %v938
      %v971 = vadd.f32 %v906, %v939
      %v972 = vadd.f32 %v907, %v940
      %v973 = vadd.f32 %v908, %v941
      %v974 = vadd.f32 %v909, %v942
      %v975 = vadd.f32 %v910, %v943
      %v976 = vadd.f32 %v911, %v944
      %v977 = vadd.f32 %v912, %v945
      %v978 = vadd.f32 %v913, %v946
      %v979 = vadd.f32 %v914, %v947
      %v980 = vadd.f32 %v915, %v948
      %v981 = vadd.f32 %v916, %v949
      %v982 = vadd.f32 %v917, %v950
      %v983 = vadd.f32 %v918, %v951
      %v984 = vadd.f32 %v919, %v952
      %v985 = vadd.f32 %v920, %v953
      %v986 = vadd.f32 %v921, %v954
      %v987 = vadd.f32 %v922, %v955
      %v988 = vadd.f32 %v923, %v956
      %v989 = vadd.f32 %v924, %v957
      %v990 = vadd.f32 %v925, %v958
      %v991 = vadd.f32 %v926, %v959
      %s992 = scalar_lea.vmem [#allocation3], 64
      %v993 = vld [vmem:[%s992] sm:$0xff]
      %v994 = vld [vmem:[%s992 + $0x8] sm:$0xff]
      %v995 = vld [vmem:[%s992 + $0x10] sm:$0xff]
      %v996 = vld [vmem:[%s992 + $0x18] sm:$0xff]
      %v997 = vld [vmem:[%s992 + $0x20] sm:$0xff]
      %v998 = vld [vmem:[%s992 + $0x28] sm:$0xff]
      %v999 = vld [vmem:[%s992 + $0x30] sm:$0xff]
      %v1000 = vld [vmem:[%s992 + $0x38] sm:$0xff]
      %v1001 = vld [vmem:[%s992 + $0x40] sm:$0xff]
      %v1002 = vld [vmem:[%s992 + $0x48] sm:$0xff]
      %v1003 = vld [vmem:[%s992 + $0x50] sm:$0xff]
      %v1004 = vld [vmem:[%s992 + $0x58] sm:$0xff]
      %v1005 = vld [vmem:[%s992 + $0x60] sm:$0xff]
      %v1006 = vld [vmem:[%s992 + $0x68] sm:$0xff]
      %v1007 = vld [vmem:[%s992 + $0x70] sm:$0xff]
      %v1008 = vld [vmem:[%s992 + $0x78] sm:$0xff]
      %v1009 = vld [vmem:[%s992 + $0x80] sm:$0xff]
      %v1010 = vld [vmem:[%s992 + $0x88] sm:$0xff]
      %v1011 = vld [vmem:[%s992 + $0x90] sm:$0xff]
      %v1012 = vld [vmem:[%s992 + $0x98] sm:$0xff]
      %v1013 = vld [vmem:[%s992 + $0xa0] sm:$0xff]
      %v1014 = vld [vmem:[%s992 + $0xa8] sm:$0xff]
      %v1015 = vld [vmem:[%s992 + $0xb0] sm:$0xff]
      %v1016 = vld [vmem:[%s992 + $0xb8] sm:$0xff]
      %v1017 = vld [vmem:[%s992 + $0xc0] sm:$0xff]
      %v1018 = vld [vmem:[%s992 + $0xc8] sm:$0xff]
      %v1019 = vld [vmem:[%s992 + $0xd0] sm:$0xff]
      %v1020 = vld [vmem:[%s992 + $0xd8] sm:$0xff]
      %v1021 = vld [vmem:[%s992 + $0xe0] sm:$0xff]
      %v1022 = vld [vmem:[%s992 + $0xe8] sm:$0xff]
      %v1023 = vld [vmem:[%s992 + $0xf0] sm:$0xff]
      %v1024 = vld [vmem:[%s992 + $0xf8] sm:$0xff]
      %v1025 = vadd.f32 %v960, %v993
      %v1026 = vadd.f32 %v961, %v994
      %v1027 = vadd.f32 %v962, %v995
      %v1028 = vadd.f32 %v963, %v996
      %v1029 = vadd.f32 %v964, %v997
      %v1030 = vadd.f32 %v965, %v998
      %v1031 = vadd.f32 %v966, %v999
      %v1032 = vadd.f32 %v967, %v1000
      %v1033 = vadd.f32 %v968, %v1001
      %v1034 = vadd.f32 %v969, %v1002
      %v1035 = vadd.f32 %v970, %v1003
      %v1036 = vadd.f32 %v971, %v1004
      %v1037 = vadd.f32 %v972, %v1005
      %v1038 = vadd.f32 %v973, %v1006
      %v1039 = vadd.f32 %v974, %v1007
      %v1040 = vadd.f32 %v975, %v1008
      %v1041 = vadd.f32 %v976, %v1009
      %v1042 = vadd.f32 %v977, %v1010
      %v1043 = vadd.f32 %v978, %v1011
      %v1044 = vadd.f32 %v979, %v1012
      %v1045 = vadd.f32 %v980, %v1013
      %v1046 = vadd.f32 %v981, %v1014
      %v1047 = vadd.f32 %v982, %v1015
      %v1048 = vadd.f32 %v983, %v1016
      %v1049 = vadd.f32 %v984, %v1017
      %v1050 = vadd.f32 %v985, %v1018
      %v1051 = vadd.f32 %v986, %v1019
      %v1052 = vadd.f32 %v987, %v1020
      %v1053 = vadd.f32 %v988, %v1021
      %v1054 = vadd.f32 %v989, %v1022
      %v1055 = vadd.f32 %v990, %v1023
      %v1056 = vadd.f32 %v991, %v1024
      %v1057 = vrot.slane %v1025, 7
      %v1058 = vrot.slane %v1027, 7
      %v1059 = vrot.slane %v1029, 7
      %v1060 = vrot.slane %v1031, 7
      %v1061 = vrot.slane %v1033, 7
      %v1062 = vrot.slane %v1035, 7
      %v1063 = vrot.slane %v1037, 7
      %v1064 = vrot.slane %v1039, 7
      %v1065 = vrot.slane %v1041, 7
      %v1066 = vrot.slane %v1043, 7
      %v1067 = vrot.slane %v1045, 7
      %v1068 = vrot.slane %v1047, 7
      %v1069 = vrot.slane %v1049, 7
      %v1070 = vrot.slane %v1051, 7
      %v1071 = vrot.slane %v1053, 7
      %v1072 = vrot.slane %v1055, 7
      %v1073 = vrot.slane %v1026, 7
      %v1074 = vrot.slane %v1028, 7
      %v1075 = vrot.slane %v1030, 7
      %v1076 = vrot.slane %v1032, 7
      %v1077 = vrot.slane %v1034, 7
      %v1078 = vrot.slane %v1036, 7
      %v1079 = vrot.slane %v1038, 7
      %v1080 = vrot.slane %v1040, 7
      %v1081 = vrot.slane %v1042, 7
      %v1082 = vrot.slane %v1044, 7
      %v1083 = vrot.slane %v1046, 7
      %v1084 = vrot.slane %v1048, 7
      %v1085 = vrot.slane %v1050, 7
      %v1086 = vrot.slane %v1052, 7
      %v1087 = vrot.slane %v1054, 7
      %v1088 = vrot.slane %v1056, 7
      %vm1089 = vcmp.lt.s32.totalorder %v723, 1
      %v1090 = vsel %vm1089, %v1057, %v1073
      %v1091 = vsel %vm1089, %v1058, %v1074
      %v1092 = vsel %vm1089, %v1059, %v1075
      %v1093 = vsel %vm1089, %v1060, %v1076
      %v1094 = vsel %vm1089, %v1061, %v1077
      %v1095 = vsel %vm1089, %v1062, %v1078
      %v1096 = vsel %vm1089, %v1063, %v1079
      %v1097 = vsel %vm1089, %v1064, %v1080
      %v1098 = vsel %vm1089, %v1065, %v1081
      %v1099 = vsel %vm1089, %v1066, %v1082
      %v1100 = vsel %vm1089, %v1067, %v1083
      %v1101 = vsel %vm1089, %v1068, %v1084
      %v1102 = vsel %vm1089, %v1069, %v1085
      %v1103 = vsel %vm1089, %v1070, %v1086
      %v1104 = vsel %vm1089, %v1071, %v1087
      %v1105 = vsel %vm1089, %v1072, %v1088
      %v1106 = vsel %vm1089, %v1073, %v1057
      %v1107 = vsel %vm1089, %v1074, %v1058
      %v1108 = vsel %vm1089, %v1075, %v1059
      %v1109 = vsel %vm1089, %v1076, %v1060
      %v1110 = vsel %vm1089, %v1077, %v1061
      %v1111 = vsel %vm1089, %v1078, %v1062
      %v1112 = vsel %vm1089, %v1079, %v1063
      %v1113 = vsel %vm1089, %v1080, %v1064
      %v1114 = vsel %vm1089, %v1081, %v1065
      %v1115 = vsel %vm1089, %v1082, %v1066
      %v1116 = vsel %vm1089, %v1083, %v1067
      %v1117 = vsel %vm1089, %v1084, %v1068
      %v1118 = vsel %vm1089, %v1085, %v1069
      %v1119 = vsel %vm1089, %v1086, %v1070
      %v1120 = vsel %vm1089, %v1087, %v1071
      %v1121 = vsel %vm1089, %v1088, %v1072
      %v1122 = vsel %vm725, 1, 0
      %v1123 = vsel %vm726, 1, 0
      %vm1124 = vcmp.eq.s32.totalorder %v1122, 1
      %vm1125 = vcmp.eq.s32.totalorder %v1123, 1
      %v1126 = vsel %vm1124, %v1106, 0.0
      %v1127 = vsel %vm1125, %v1090, 0.0
      %v1128 = vsel %vm1124, %v1107, 0.0
      %v1129 = vsel %vm1125, %v1091, 0.0
      %v1130 = vsel %vm1124, %v1108, 0.0
      %v1131 = vsel %vm1125, %v1092, 0.0
      %v1132 = vsel %vm1124, %v1109, 0.0
      %v1133 = vsel %vm1125, %v1093, 0.0
      %v1134 = vsel %vm1124, %v1110, 0.0
      %v1135 = vsel %vm1125, %v1094, 0.0
      %v1136 = vsel %vm1124, %v1111, 0.0
      %v1137 = vsel %vm1125, %v1095, 0.0
      %v1138 = vsel %vm1124, %v1112, 0.0
      %v1139 = vsel %vm1125, %v1096, 0.0
      %v1140 = vsel %vm1124, %v1113, 0.0
      %v1141 = vsel %vm1125, %v1097, 0.0
      %v1142 = vsel %vm1124, %v1114, 0.0
      %v1143 = vsel %vm1125, %v1098, 0.0
      %v1144 = vsel %vm1124, %v1115, 0.0
      %v1145 = vsel %vm1125, %v1099, 0.0
      %v1146 = vsel %vm1124, %v1116, 0.0
      %v1147 = vsel %vm1125, %v1100, 0.0
      %v1148 = vsel %vm1124, %v1117, 0.0
      %v1149 = vsel %vm1125, %v1101, 0.0
      %v1150 = vsel %vm1124, %v1118, 0.0
      %v1151 = vsel %vm1125, %v1102, 0.0
      %v1152 = vsel %vm1124, %v1119, 0.0
      %v1153 = vsel %vm1125, %v1103, 0.0
      %v1154 = vsel %vm1124, %v1120, 0.0
      %v1155 = vsel %vm1125, %v1104, 0.0
      %v1156 = vsel %vm1124, %v1121, 0.0
      %v1157 = vsel %vm1125, %v1105, 0.0
      %v1158 = vadd.f32 %v1025, %v1126
      %v1159 = vadd.f32 %v1026, %v1127
      %v1160 = vadd.f32 %v1027, %v1128
      %v1161 = vadd.f32 %v1028, %v1129
      %v1162 = vadd.f32 %v1029, %v1130
      %v1163 = vadd.f32 %v1030, %v1131
      %v1164 = vadd.f32 %v1031, %v1132
      %v1165 = vadd.f32 %v1032, %v1133
      %v1166 = vadd.f32 %v1033, %v1134
      %v1167 = vadd.f32 %v1034, %v1135
      %v1168 = vadd.f32 %v1035, %v1136
      %v1169 = vadd.f32 %v1036, %v1137
      %v1170 = vadd.f32 %v1037, %v1138
      %v1171 = vadd.f32 %v1038, %v1139
      %v1172 = vadd.f32 %v1039, %v1140
      %v1173 = vadd.f32 %v1040, %v1141
      %v1174 = vadd.f32 %v1041, %v1142
      %v1175 = vadd.f32 %v1042, %v1143
      %v1176 = vadd.f32 %v1043, %v1144
      %v1177 = vadd.f32 %v1044, %v1145
      %v1178 = vadd.f32 %v1045, %v1146
      %v1179 = vadd.f32 %v1046, %v1147
      %v1180 = vadd.f32 %v1047, %v1148
      %v1181 = vadd.f32 %v1048, %v1149
      %v1182 = vadd.f32 %v1049, %v1150
      %v1183 = vadd.f32 %v1050, %v1151
      %v1184 = vadd.f32 %v1051, %v1152
      %v1185 = vadd.f32 %v1052, %v1153
      %v1186 = vadd.f32 %v1053, %v1154
      %v1187 = vadd.f32 %v1054, %v1155
      %v1188 = vadd.f32 %v1055, %v1156
      %v1189 = vadd.f32 %v1056, %v1157
      %v1190 = vrot.slane %v1025, 1
      %v1191 = vrot.slane %v1027, 1
      %v1192 = vrot.slane %v1029, 1
      %v1193 = vrot.slane %v1031, 1
      %v1194 = vrot.slane %v1033, 1
      %v1195 = vrot.slane %v1035, 1
      %v1196 = vrot.slane %v1037, 1
      %v1197 = vrot.slane %v1039, 1
      %v1198 = vrot.slane %v1041, 1
      %v1199 = vrot.slane %v1043, 1
      %v1200 = vrot.slane %v1045, 1
      %v1201 = vrot.slane %v1047, 1
      %v1202 = vrot.slane %v1049, 1
      %v1203 = vrot.slane %v1051, 1
      %v1204 = vrot.slane %v1053, 1
      %v1205 = vrot.slane %v1055, 1
      %v1206 = vrot.slane %v1026, 1
      %v1207 = vrot.slane %v1028, 1
      %v1208 = vrot.slane %v1030, 1
      %v1209 = vrot.slane %v1032, 1
      %v1210 = vrot.slane %v1034, 1
      %v1211 = vrot.slane %v1036, 1
      %v1212 = vrot.slane %v1038, 1
      %v1213 = vrot.slane %v1040, 1
      %v1214 = vrot.slane %v1042, 1
      %v1215 = vrot.slane %v1044, 1
      %v1216 = vrot.slane %v1046, 1
      %v1217 = vrot.slane %v1048, 1
      %v1218 = vrot.slane %v1050, 1
      %v1219 = vrot.slane %v1052, 1
      %v1220 = vrot.slane %v1054, 1
      %v1221 = vrot.slane %v1056, 1
      %vm1222 = vcmp.lt.s32.totalorder %v723, 7
      %v1223 = vsel %vm1222, %v1190, %v1206
      %v1224 = vsel %vm1222, %v1191, %v1207
      %v1225 = vsel %vm1222, %v1192, %v1208
      %v1226 = vsel %vm1222, %v1193, %v1209
      %v1227 = vsel %vm1222, %v1194, %v1210
      %v1228 = vsel %vm1222, %v1195, %v1211
      %v1229 = vsel %vm1222, %v1196, %v1212
      %v1230 = vsel %vm1222, %v1197, %v1213
      %v1231 = vsel %vm1222, %v1198, %v1214
      %v1232 = vsel %vm1222, %v1199, %v1215
      %v1233 = vsel %vm1222, %v1200, %v1216
      %v1234 = vsel %vm1222, %v1201, %v1217
      %v1235 = vsel %vm1222, %v1202, %v1218
      %v1236 = vsel %vm1222, %v1203, %v1219
      %v1237 = vsel %vm1222, %v1204, %v1220
      %v1238 = vsel %vm1222, %v1205, %v1221
      %v1239 = vsel %vm1222, %v1206, %v1190
      %v1240 = vsel %vm1222, %v1207, %v1191
      %v1241 = vsel %vm1222, %v1208, %v1192
      %v1242 = vsel %vm1222, %v1209, %v1193
      %v1243 = vsel %vm1222, %v1210, %v1194
      %v1244 = vsel %vm1222, %v1211, %v1195
      %v1245 = vsel %vm1222, %v1212, %v1196
      %v1246 = vsel %vm1222, %v1213, %v1197
      %v1247 = vsel %vm1222, %v1214, %v1198
      %v1248 = vsel %vm1222, %v1215, %v1199
      %v1249 = vsel %vm1222, %v1216, %v1200
      %v1250 = vsel %vm1222, %v1217, %v1201
      %v1251 = vsel %vm1222, %v1218, %v1202
      %v1252 = vsel %vm1222, %v1219, %v1203
      %v1253 = vsel %vm1222, %v1220, %v1204
      %v1254 = vsel %vm1222, %v1221, %v1205
      %v1255 = vsel %vm729, 1, 0
      %v1256 = vsel %vm730, 1, 0
      %vm1257 = vcmp.eq.s32.totalorder %v1255, 1
      %vm1258 = vcmp.eq.s32.totalorder %v1256, 1
      %v1259 = vsel %vm1257, %v1223, 0.0
      %v1260 = vsel %vm1258, %v1239, 0.0
      %v1261 = vsel %vm1257, %v1224, 0.0
      %v1262 = vsel %vm1258, %v1240, 0.0
      %v1263 = vsel %vm1257, %v1225, 0.0
      %v1264 = vsel %vm1258, %v1241, 0.0
      %v1265 = vsel %vm1257, %v1226, 0.0
      %v1266 = vsel %vm1258, %v1242, 0.0
      %v1267 = vsel %vm1257, %v1227, 0.0
      %v1268 = vsel %vm1258, %v1243, 0.0
      %v1269 = vsel %vm1257, %v1228, 0.0
      %v1270 = vsel %vm1258, %v1244, 0.0
      %v1271 = vsel %vm1257, %v1229, 0.0
      %v1272 = vsel %vm1258, %v1245, 0.0
      %v1273 = vsel %vm1257, %v1230, 0.0
      %v1274 = vsel %vm1258, %v1246, 0.0
      %v1275 = vsel %vm1257, %v1231, 0.0
      %v1276 = vsel %vm1258, %v1247, 0.0
      %v1277 = vsel %vm1257, %v1232, 0.0
      %v1278 = vsel %vm1258, %v1248, 0.0
      %v1279 = vsel %vm1257, %v1233, 0.0
      %v1280 = vsel %vm1258, %v1249, 0.0
      %v1281 = vsel %vm1257, %v1234, 0.0
      %v1282 = vsel %vm1258, %v1250, 0.0
      %v1283 = vsel %vm1257, %v1235, 0.0
      %v1284 = vsel %vm1258, %v1251, 0.0
      %v1285 = vsel %vm1257, %v1236, 0.0
      %v1286 = vsel %vm1258, %v1252, 0.0
      %v1287 = vsel %vm1257, %v1237, 0.0
      %v1288 = vsel %vm1258, %v1253, 0.0
      %v1289 = vsel %vm1257, %v1238, 0.0
      %v1290 = vsel %vm1258, %v1254, 0.0
      %v1291 = vadd.f32 %v1158, %v1259
      %v1292 = vadd.f32 %v1159, %v1260
      %v1293 = vadd.f32 %v1160, %v1261
      %v1294 = vadd.f32 %v1161, %v1262
      %v1295 = vadd.f32 %v1162, %v1263
      %v1296 = vadd.f32 %v1163, %v1264
      %v1297 = vadd.f32 %v1164, %v1265
      %v1298 = vadd.f32 %v1165, %v1266
      %v1299 = vadd.f32 %v1166, %v1267
      %v1300 = vadd.f32 %v1167, %v1268
      %v1301 = vadd.f32 %v1168, %v1269
      %v1302 = vadd.f32 %v1169, %v1270
      %v1303 = vadd.f32 %v1170, %v1271
      %v1304 = vadd.f32 %v1171, %v1272
      %v1305 = vadd.f32 %v1172, %v1273
      %v1306 = vadd.f32 %v1173, %v1274
      %v1307 = vadd.f32 %v1174, %v1275
      %v1308 = vadd.f32 %v1175, %v1276
      %v1309 = vadd.f32 %v1176, %v1277
      %v1310 = vadd.f32 %v1177, %v1278
      %v1311 = vadd.f32 %v1178, %v1279
      %v1312 = vadd.f32 %v1179, %v1280
      %v1313 = vadd.f32 %v1180, %v1281
      %v1314 = vadd.f32 %v1181, %v1282
      %v1315 = vadd.f32 %v1182, %v1283
      %v1316 = vadd.f32 %v1183, %v1284
      %v1317 = vadd.f32 %v1184, %v1285
      %v1318 = vadd.f32 %v1185, %v1286
      %v1319 = vadd.f32 %v1186, %v1287
      %v1320 = vadd.f32 %v1187, %v1288
      %v1321 = vadd.f32 %v1188, %v1289
      %v1322 = vadd.f32 %v1189, %v1290
      %v1323 = vrot.slane %v1025, 6
      %v1324 = vrot.slane %v1027, 6
      %v1325 = vrot.slane %v1029, 6
      %v1326 = vrot.slane %v1031, 6
      %v1327 = vrot.slane %v1033, 6
      %v1328 = vrot.slane %v1035, 6
      %v1329 = vrot.slane %v1037, 6
      %v1330 = vrot.slane %v1039, 6
      %v1331 = vrot.slane %v1041, 6
      %v1332 = vrot.slane %v1043, 6
      %v1333 = vrot.slane %v1045, 6
      %v1334 = vrot.slane %v1047, 6
      %v1335 = vrot.slane %v1049, 6
      %v1336 = vrot.slane %v1051, 6
      %v1337 = vrot.slane %v1053, 6
      %v1338 = vrot.slane %v1055, 6
      %v1339 = vrot.slane %v1026, 6
      %v1340 = vrot.slane %v1028, 6
      %v1341 = vrot.slane %v1030, 6
      %v1342 = vrot.slane %v1032, 6
      %v1343 = vrot.slane %v1034, 6
      %v1344 = vrot.slane %v1036, 6
      %v1345 = vrot.slane %v1038, 6
      %v1346 = vrot.slane %v1040, 6
      %v1347 = vrot.slane %v1042, 6
      %v1348 = vrot.slane %v1044, 6
      %v1349 = vrot.slane %v1046, 6
      %v1350 = vrot.slane %v1048, 6
      %v1351 = vrot.slane %v1050, 6
      %v1352 = vrot.slane %v1052, 6
      %v1353 = vrot.slane %v1054, 6
      %v1354 = vrot.slane %v1056, 6
      %vm1355 = vcmp.lt.s32.totalorder %v723, 2
      %v1356 = vsel %vm1355, %v1323, %v1339
      %v1357 = vsel %vm1355, %v1324, %v1340
      %v1358 = vsel %vm1355, %v1325, %v1341
      %v1359 = vsel %vm1355, %v1326, %v1342
      %v1360 = vsel %vm1355, %v1327, %v1343
      %v1361 = vsel %vm1355, %v1328, %v1344
      %v1362 = vsel %vm1355, %v1329, %v1345
      %v1363 = vsel %vm1355, %v1330, %v1346
      %v1364 = vsel %vm1355, %v1331, %v1347
      %v1365 = vsel %vm1355, %v1332, %v1348
      %v1366 = vsel %vm1355, %v1333, %v1349
      %v1367 = vsel %vm1355, %v1334, %v1350
      %v1368 = vsel %vm1355, %v1335, %v1351
      %v1369 = vsel %vm1355, %v1336, %v1352
      %v1370 = vsel %vm1355, %v1337, %v1353
      %v1371 = vsel %vm1355, %v1338, %v1354
      %v1372 = vsel %vm1355, %v1339, %v1323
      %v1373 = vsel %vm1355, %v1340, %v1324
      %v1374 = vsel %vm1355, %v1341, %v1325
      %v1375 = vsel %vm1355, %v1342, %v1326
      %v1376 = vsel %vm1355, %v1343, %v1327
      %v1377 = vsel %vm1355, %v1344, %v1328
      %v1378 = vsel %vm1355, %v1345, %v1329
      %v1379 = vsel %vm1355, %v1346, %v1330
      %v1380 = vsel %vm1355, %v1347, %v1331
      %v1381 = vsel %vm1355, %v1348, %v1332
      %v1382 = vsel %vm1355, %v1349, %v1333
      %v1383 = vsel %vm1355, %v1350, %v1334
      %v1384 = vsel %vm1355, %v1351, %v1335
      %v1385 = vsel %vm1355, %v1352, %v1336
      %v1386 = vsel %vm1355, %v1353, %v1337
      %v1387 = vsel %vm1355, %v1354, %v1338
      %v1388 = vsel %vm727, 1, 0
      %v1389 = vsel %vm728, 1, 0
      %vm1390 = vcmp.eq.s32.totalorder %v1388, 1
      %vm1391 = vcmp.eq.s32.totalorder %v1389, 1
      %v1392 = vsel %vm1390, %v1372, 0.0
      %v1393 = vsel %vm1391, %v1356, 0.0
      %v1394 = vsel %vm1390, %v1373, 0.0
      %v1395 = vsel %vm1391, %v1357, 0.0
      %v1396 = vsel %vm1390, %v1374, 0.0
      %v1397 = vsel %vm1391, %v1358, 0.0
      %v1398 = vsel %vm1390, %v1375, 0.0
      %v1399 = vsel %vm1391, %v1359, 0.0
      %v1400 = vsel %vm1390, %v1376, 0.0
      %v1401 = vsel %vm1391, %v1360, 0.0
      %v1402 = vsel %vm1390, %v1377, 0.0
      %v1403 = vsel %vm1391, %v1361, 0.0
      %v1404 = vsel %vm1390, %v1378, 0.0
      %v1405 = vsel %vm1391, %v1362, 0.0
      %v1406 = vsel %vm1390, %v1379, 0.0
      %v1407 = vsel %vm1391, %v1363, 0.0
      %v1408 = vsel %vm1390, %v1380, 0.0
      %v1409 = vsel %vm1391, %v1364, 0.0
      %v1410 = vsel %vm1390, %v1381, 0.0
      %v1411 = vsel %vm1391, %v1365, 0.0
      %v1412 = vsel %vm1390, %v1382, 0.0
      %v1413 = vsel %vm1391, %v1366, 0.0
      %v1414 = vsel %vm1390, %v1383, 0.0
      %v1415 = vsel %vm1391, %v1367, 0.0
      %v1416 = vsel %vm1390, %v1384, 0.0
      %v1417 = vsel %vm1391, %v1368, 0.0
      %v1418 = vsel %vm1390, %v1385, 0.0
      %v1419 = vsel %vm1391, %v1369, 0.0
      %v1420 = vsel %vm1390, %v1386, 0.0
      %v1421 = vsel %vm1391, %v1370, 0.0
      %v1422 = vsel %vm1390, %v1387, 0.0
      %v1423 = vsel %vm1391, %v1371, 0.0
      %v1424 = vadd.f32 %v1291, %v1392
      %v1425 = vadd.f32 %v1292, %v1393
      %v1426 = vadd.f32 %v1293, %v1394
      %v1427 = vadd.f32 %v1294, %v1395
      %v1428 = vadd.f32 %v1295, %v1396
      %v1429 = vadd.f32 %v1296, %v1397
      %v1430 = vadd.f32 %v1297, %v1398
      %v1431 = vadd.f32 %v1298, %v1399
      %v1432 = vadd.f32 %v1299, %v1400
      %v1433 = vadd.f32 %v1300, %v1401
      %v1434 = vadd.f32 %v1301, %v1402
      %v1435 = vadd.f32 %v1302, %v1403
      %v1436 = vadd.f32 %v1303, %v1404
      %v1437 = vadd.f32 %v1304, %v1405
      %v1438 = vadd.f32 %v1305, %v1406
      %v1439 = vadd.f32 %v1306, %v1407
      %v1440 = vadd.f32 %v1307, %v1408
      %v1441 = vadd.f32 %v1308, %v1409
      %v1442 = vadd.f32 %v1309, %v1410
      %v1443 = vadd.f32 %v1310, %v1411
      %v1444 = vadd.f32 %v1311, %v1412
      %v1445 = vadd.f32 %v1312, %v1413
      %v1446 = vadd.f32 %v1313, %v1414
      %v1447 = vadd.f32 %v1314, %v1415
      %v1448 = vadd.f32 %v1315, %v1416
      %v1449 = vadd.f32 %v1316, %v1417
      %v1450 = vadd.f32 %v1317, %v1418
      %v1451 = vadd.f32 %v1318, %v1419
      %v1452 = vadd.f32 %v1319, %v1420
      %v1453 = vadd.f32 %v1320, %v1421
      %v1454 = vadd.f32 %v1321, %v1422
      %v1455 = vadd.f32 %v1322, %v1423
      %v1456 = vrot.slane %v1025, 2
      %v1457 = vrot.slane %v1027, 2
      %v1458 = vrot.slane %v1029, 2
      %v1459 = vrot.slane %v1031, 2
      %v1460 = vrot.slane %v1033, 2
      %v1461 = vrot.slane %v1035, 2
      %v1462 = vrot.slane %v1037, 2
      %v1463 = vrot.slane %v1039, 2
      %v1464 = vrot.slane %v1041, 2
      %v1465 = vrot.slane %v1043, 2
      %v1466 = vrot.slane %v1045, 2
      %v1467 = vrot.slane %v1047, 2
      %v1468 = vrot.slane %v1049, 2
      %v1469 = vrot.slane %v1051, 2
      %v1470 = vrot.slane %v1053, 2
      %v1471 = vrot.slane %v1055, 2
      %v1472 = vrot.slane %v1026, 2
      %v1473 = vrot.slane %v1028, 2
      %v1474 = vrot.slane %v1030, 2
      %v1475 = vrot.slane %v1032, 2
      %v1476 = vrot.slane %v1034, 2
      %v1477 = vrot.slane %v1036, 2
      %v1478 = vrot.slane %v1038, 2
      %v1479 = vrot.slane %v1040, 2
      %v1480 = vrot.slane %v1042, 2
      %v1481 = vrot.slane %v1044, 2
      %v1482 = vrot.slane %v1046, 2
      %v1483 = vrot.slane %v1048, 2
      %v1484 = vrot.slane %v1050, 2
      %v1485 = vrot.slane %v1052, 2
      %v1486 = vrot.slane %v1054, 2
      %v1487 = vrot.slane %v1056, 2
      %vm1488 = vcmp.lt.s32.totalorder %v723, 6
      %v1489 = vsel %vm1488, %v1456, %v1472
      %v1490 = vsel %vm1488, %v1457, %v1473
      %v1491 = vsel %vm1488, %v1458, %v1474
      %v1492 = vsel %vm1488, %v1459, %v1475
      %v1493 = vsel %vm1488, %v1460, %v1476
      %v1494 = vsel %vm1488, %v1461, %v1477
      %v1495 = vsel %vm1488, %v1462, %v1478
      %v1496 = vsel %vm1488, %v1463, %v1479
      %v1497 = vsel %vm1488, %v1464, %v1480
      %v1498 = vsel %vm1488, %v1465, %v1481
      %v1499 = vsel %vm1488, %v1466, %v1482
      %v1500 = vsel %vm1488, %v1467, %v1483
      %v1501 = vsel %vm1488, %v1468, %v1484
      %v1502 = vsel %vm1488, %v1469, %v1485
      %v1503 = vsel %vm1488, %v1470, %v1486
      %v1504 = vsel %vm1488, %v1471, %v1487
      %v1505 = vsel %vm1488, %v1472, %v1456
      %v1506 = vsel %vm1488, %v1473, %v1457
      %v1507 = vsel %vm1488, %v1474, %v1458
      %v1508 = vsel %vm1488, %v1475, %v1459
      %v1509 = vsel %vm1488, %v1476, %v1460
      %v1510 = vsel %vm1488, %v1477, %v1461
      %v1511 = vsel %vm1488, %v1478, %v1462
      %v1512 = vsel %vm1488, %v1479, %v1463
      %v1513 = vsel %vm1488, %v1480, %v1464
      %v1514 = vsel %vm1488, %v1481, %v1465
      %v1515 = vsel %vm1488, %v1482, %v1466
      %v1516 = vsel %vm1488, %v1483, %v1467
      %v1517 = vsel %vm1488, %v1484, %v1468
      %v1518 = vsel %vm1488, %v1485, %v1469
      %v1519 = vsel %vm1488, %v1486, %v1470
      %v1520 = vsel %vm1488, %v1487, %v1471
      %v1521 = vsel %vm731, 1, 0
      %v1522 = vsel %vm732, 1, 0
      %vm1523 = vcmp.eq.s32.totalorder %v1521, 1
      %vm1524 = vcmp.eq.s32.totalorder %v1522, 1
      %v1525 = vsel %vm1523, %v1489, 0.0
      %v1526 = vsel %vm1524, %v1505, 0.0
      %v1527 = vsel %vm1523, %v1490, 0.0
      %v1528 = vsel %vm1524, %v1506, 0.0
      %v1529 = vsel %vm1523, %v1491, 0.0
      %v1530 = vsel %vm1524, %v1507, 0.0
      %v1531 = vsel %vm1523, %v1492, 0.0
      %v1532 = vsel %vm1524, %v1508, 0.0
      %v1533 = vsel %vm1523, %v1493, 0.0
      %v1534 = vsel %vm1524, %v1509, 0.0
      %v1535 = vsel %vm1523, %v1494, 0.0
      %v1536 = vsel %vm1524, %v1510, 0.0
      %v1537 = vsel %vm1523, %v1495, 0.0
      %v1538 = vsel %vm1524, %v1511, 0.0
      %v1539 = vsel %vm1523, %v1496, 0.0
      %v1540 = vsel %vm1524, %v1512, 0.0
      %v1541 = vsel %vm1523, %v1497, 0.0
      %v1542 = vsel %vm1524, %v1513, 0.0
      %v1543 = vsel %vm1523, %v1498, 0.0
      %v1544 = vsel %vm1524, %v1514, 0.0
      %v1545 = vsel %vm1523, %v1499, 0.0
      %v1546 = vsel %vm1524, %v1515, 0.0
      %v1547 = vsel %vm1523, %v1500, 0.0
      %v1548 = vsel %vm1524, %v1516, 0.0
      %v1549 = vsel %vm1523, %v1501, 0.0
      %v1550 = vsel %vm1524, %v1517, 0.0
      %v1551 = vsel %vm1523, %v1502, 0.0
      %v1552 = vsel %vm1524, %v1518, 0.0
      %v1553 = vsel %vm1523, %v1503, 0.0
      %v1554 = vsel %vm1524, %v1519, 0.0
      %v1555 = vsel %vm1523, %v1504, 0.0
      %v1556 = vsel %vm1524, %v1520, 0.0
      %v1557 = vadd.f32 %v1424, %v1525
      %v1558 = vadd.f32 %v1425, %v1526
      %v1559 = vadd.f32 %v1426, %v1527
      %v1560 = vadd.f32 %v1427, %v1528
      %v1561 = vadd.f32 %v1428, %v1529
      %v1562 = vadd.f32 %v1429, %v1530
      %v1563 = vadd.f32 %v1430, %v1531
      %v1564 = vadd.f32 %v1431, %v1532
      %v1565 = vadd.f32 %v1432, %v1533
      %v1566 = vadd.f32 %v1433, %v1534
      %v1567 = vadd.f32 %v1434, %v1535
      %v1568 = vadd.f32 %v1435, %v1536
      %v1569 = vadd.f32 %v1436, %v1537
      %v1570 = vadd.f32 %v1437, %v1538
      %v1571 = vadd.f32 %v1438, %v1539
      %v1572 = vadd.f32 %v1439, %v1540
      %v1573 = vadd.f32 %v1440, %v1541
      %v1574 = vadd.f32 %v1441, %v1542
      %v1575 = vadd.f32 %v1442, %v1543
      %v1576 = vadd.f32 %v1443, %v1544
      %v1577 = vadd.f32 %v1444, %v1545
      %v1578 = vadd.f32 %v1445, %v1546
      %v1579 = vadd.f32 %v1446, %v1547
      %v1580 = vadd.f32 %v1447, %v1548
      %v1581 = vadd.f32 %v1448, %v1549
      %v1582 = vadd.f32 %v1449, %v1550
      %v1583 = vadd.f32 %v1450, %v1551
      %v1584 = vadd.f32 %v1451, %v1552
      %v1585 = vadd.f32 %v1452, %v1553
      %v1586 = vadd.f32 %v1453, %v1554
      %v1587 = vadd.f32 %v1454, %v1555
      %v1588 = vadd.f32 %v1455, %v1556
      %v1589 = vmul.f32 %v1557, 0.04
      %v1590 = vmul.f32 %v1558, 0.04
      %v1591 = vmul.f32 %v1559, 0.04
      %v1592 = vmul.f32 %v1560, 0.04
      %v1593 = vmul.f32 %v1561, 0.04
      %v1594 = vmul.f32 %v1562, 0.04
      %v1595 = vmul.f32 %v1563, 0.04
      %v1596 = vmul.f32 %v1564, 0.04
      %v1597 = vmul.f32 %v1565, 0.04
      %v1598 = vmul.f32 %v1566, 0.04
      %v1599 = vmul.f32 %v1567, 0.04
      %v1600 = vmul.f32 %v1568, 0.04
      %v1601 = vmul.f32 %v1569, 0.04
      %v1602 = vmul.f32 %v1570, 0.04
      %v1603 = vmul.f32 %v1571, 0.04
      %v1604 = vmul.f32 %v1572, 0.04
      %v1605 = vmul.f32 %v1573, 0.04
      %v1606 = vmul.f32 %v1574, 0.04
      %v1607 = vmul.f32 %v1575, 0.04
      %v1608 = vmul.f32 %v1576, 0.04
      %v1609 = vmul.f32 %v1577, 0.04
      %v1610 = vmul.f32 %v1578, 0.04
      %v1611 = vmul.f32 %v1579, 0.04
      %v1612 = vmul.f32 %v1580, 0.04
      %v1613 = vmul.f32 %v1581, 0.04
      %v1614 = vmul.f32 %v1582, 0.04
      %v1615 = vmul.f32 %v1583, 0.04
      %v1616 = vmul.f32 %v1584, 0.04
      %v1617 = vmul.f32 %v1585, 0.04
      %v1618 = vmul.f32 %v1586, 0.04
      %v1619 = vmul.f32 %v1587, 0.04
      %v1620 = vmul.f32 %v1588, 0.04
      %v1621 = vrot.slane %v1589, 7
      %v1622 = vrot.slane %v1591, 7
      %v1623 = vrot.slane %v1593, 7
      %v1624 = vrot.slane %v1595, 7
      %v1625 = vrot.slane %v1597, 7
      %v1626 = vrot.slane %v1599, 7
      %v1627 = vrot.slane %v1601, 7
      %v1628 = vrot.slane %v1603, 7
      %v1629 = vrot.slane %v1605, 7
      %v1630 = vrot.slane %v1607, 7
      %v1631 = vrot.slane %v1609, 7
      %v1632 = vrot.slane %v1611, 7
      %v1633 = vrot.slane %v1613, 7
      %v1634 = vrot.slane %v1615, 7
      %v1635 = vrot.slane %v1617, 7
      %v1636 = vrot.slane %v1619, 7
      %v1637 = vrot.slane %v1590, 7
      %v1638 = vrot.slane %v1592, 7
      %v1639 = vrot.slane %v1594, 7
      %v1640 = vrot.slane %v1596, 7
      %v1641 = vrot.slane %v1598, 7
      %v1642 = vrot.slane %v1600, 7
      %v1643 = vrot.slane %v1602, 7
      %v1644 = vrot.slane %v1604, 7
      %v1645 = vrot.slane %v1606, 7
      %v1646 = vrot.slane %v1608, 7
      %v1647 = vrot.slane %v1610, 7
      %v1648 = vrot.slane %v1612, 7
      %v1649 = vrot.slane %v1614, 7
      %v1650 = vrot.slane %v1616, 7
      %v1651 = vrot.slane %v1618, 7
      %v1652 = vrot.slane %v1620, 7
      %v1653 = vsel %vm1089, %v1621, %v1637
      %v1654 = vsel %vm1089, %v1622, %v1638
      %v1655 = vsel %vm1089, %v1623, %v1639
      %v1656 = vsel %vm1089, %v1624, %v1640
      %v1657 = vsel %vm1089, %v1625, %v1641
      %v1658 = vsel %vm1089, %v1626, %v1642
      %v1659 = vsel %vm1089, %v1627, %v1643
      %v1660 = vsel %vm1089, %v1628, %v1644
      %v1661 = vsel %vm1089, %v1629, %v1645
      %v1662 = vsel %vm1089, %v1630, %v1646
      %v1663 = vsel %vm1089, %v1631, %v1647
      %v1664 = vsel %vm1089, %v1632, %v1648
      %v1665 = vsel %vm1089, %v1633, %v1649
      %v1666 = vsel %vm1089, %v1634, %v1650
      %v1667 = vsel %vm1089, %v1635, %v1651
      %v1668 = vsel %vm1089, %v1636, %v1652
      %v1669 = vsel %vm1089, %v1637, %v1621
      %v1670 = vsel %vm1089, %v1638, %v1622
      %v1671 = vsel %vm1089, %v1639, %v1623
      %v1672 = vsel %vm1089, %v1640, %v1624
      %v1673 = vsel %vm1089, %v1641, %v1625
      %v1674 = vsel %vm1089, %v1642, %v1626
      %v1675 = vsel %vm1089, %v1643, %v1627
      %v1676 = vsel %vm1089, %v1644, %v1628
      %v1677 = vsel %vm1089, %v1645, %v1629
      %v1678 = vsel %vm1089, %v1646, %v1630
      %v1679 = vsel %vm1089, %v1647, %v1631
      %v1680 = vsel %vm1089, %v1648, %v1632
      %v1681 = vsel %vm1089, %v1649, %v1633
      %v1682 = vsel %vm1089, %v1650, %v1634
      %v1683 = vsel %vm1089, %v1651, %v1635
      %v1684 = vsel %vm1089, %v1652, %v1636
      %v1685 = vsel %vm1124, %v1669, 0.0
      %v1686 = vsel %vm1125, %v1653, 0.0
      %v1687 = vsel %vm1124, %v1670, 0.0
      %v1688 = vsel %vm1125, %v1654, 0.0
      %v1689 = vsel %vm1124, %v1671, 0.0
      %v1690 = vsel %vm1125, %v1655, 0.0
      %v1691 = vsel %vm1124, %v1672, 0.0
      %v1692 = vsel %vm1125, %v1656, 0.0
      %v1693 = vsel %vm1124, %v1673, 0.0
      %v1694 = vsel %vm1125, %v1657, 0.0
      %v1695 = vsel %vm1124, %v1674, 0.0
      %v1696 = vsel %vm1125, %v1658, 0.0
      %v1697 = vsel %vm1124, %v1675, 0.0
      %v1698 = vsel %vm1125, %v1659, 0.0
      %v1699 = vsel %vm1124, %v1676, 0.0
      %v1700 = vsel %vm1125, %v1660, 0.0
      %v1701 = vsel %vm1124, %v1677, 0.0
      %v1702 = vsel %vm1125, %v1661, 0.0
      %v1703 = vsel %vm1124, %v1678, 0.0
      %v1704 = vsel %vm1125, %v1662, 0.0
      %v1705 = vsel %vm1124, %v1679, 0.0
      %v1706 = vsel %vm1125, %v1663, 0.0
      %v1707 = vsel %vm1124, %v1680, 0.0
      %v1708 = vsel %vm1125, %v1664, 0.0
      %v1709 = vsel %vm1124, %v1681, 0.0
      %v1710 = vsel %vm1125, %v1665, 0.0
      %v1711 = vsel %vm1124, %v1682, 0.0
      %v1712 = vsel %vm1125, %v1666, 0.0
      %v1713 = vsel %vm1124, %v1683, 0.0
      %v1714 = vsel %vm1125, %v1667, 0.0
      %v1715 = vsel %vm1124, %v1684, 0.0
      %v1716 = vsel %vm1125, %v1668, 0.0
      %v1717 = vrot.slane %v1589, 1
      %v1718 = vrot.slane %v1591, 1
      %v1719 = vrot.slane %v1593, 1
      %v1720 = vrot.slane %v1595, 1
      %v1721 = vrot.slane %v1597, 1
      %v1722 = vrot.slane %v1599, 1
      %v1723 = vrot.slane %v1601, 1
      %v1724 = vrot.slane %v1603, 1
      %v1725 = vrot.slane %v1605, 1
      %v1726 = vrot.slane %v1607, 1
      %v1727 = vrot.slane %v1609, 1
      %v1728 = vrot.slane %v1611, 1
      %v1729 = vrot.slane %v1613, 1
      %v1730 = vrot.slane %v1615, 1
      %v1731 = vrot.slane %v1617, 1
      %v1732 = vrot.slane %v1619, 1
      %v1733 = vrot.slane %v1590, 1
      %v1734 = vrot.slane %v1592, 1
      %v1735 = vrot.slane %v1594, 1
      %v1736 = vrot.slane %v1596, 1
      %v1737 = vrot.slane %v1598, 1
      %v1738 = vrot.slane %v1600, 1
      %v1739 = vrot.slane %v1602, 1
      %v1740 = vrot.slane %v1604, 1
      %v1741 = vrot.slane %v1606, 1
      %v1742 = vrot.slane %v1608, 1
      %v1743 = vrot.slane %v1610, 1
      %v1744 = vrot.slane %v1612, 1
      %v1745 = vrot.slane %v1614, 1
      %v1746 = vrot.slane %v1616, 1
      %v1747 = vrot.slane %v1618, 1
      %v1748 = vrot.slane %v1620, 1
      %v1749 = vsel %vm1222, %v1717, %v1733
      %v1750 = vsel %vm1222, %v1718, %v1734
      %v1751 = vsel %vm1222, %v1719, %v1735
      %v1752 = vsel %vm1222, %v1720, %v1736
      %v1753 = vsel %vm1222, %v1721, %v1737
      %v1754 = vsel %vm1222, %v1722, %v1738
      %v1755 = vsel %vm1222, %v1723, %v1739
      %v1756 = vsel %vm1222, %v1724, %v1740
      %v1757 = vsel %vm1222, %v1725, %v1741
      %v1758 = vsel %vm1222, %v1726, %v1742
      %v1759 = vsel %vm1222, %v1727, %v1743
      %v1760 = vsel %vm1222, %v1728, %v1744
      %v1761 = vsel %vm1222, %v1729, %v1745
      %v1762 = vsel %vm1222, %v1730, %v1746
      %v1763 = vsel %vm1222, %v1731, %v1747
      %v1764 = vsel %vm1222, %v1732, %v1748
      %v1765 = vsel %vm1222, %v1733, %v1717
      %v1766 = vsel %vm1222, %v1734, %v1718
      %v1767 = vsel %vm1222, %v1735, %v1719
      %v1768 = vsel %vm1222, %v1736, %v1720
      %v1769 = vsel %vm1222, %v1737, %v1721
      %v1770 = vsel %vm1222, %v1738, %v1722
      %v1771 = vsel %vm1222, %v1739, %v1723
      %v1772 = vsel %vm1222, %v1740, %v1724
      %v1773 = vsel %vm1222, %v1741, %v1725
      %v1774 = vsel %vm1222, %v1742, %v1726
      %v1775 = vsel %vm1222, %v1743, %v1727
      %v1776 = vsel %vm1222, %v1744, %v1728
      %v1777 = vsel %vm1222, %v1745, %v1729
      %v1778 = vsel %vm1222, %v1746, %v1730
      %v1779 = vsel %vm1222, %v1747, %v1731
      %v1780 = vsel %vm1222, %v1748, %v1732
      %v1781 = vsel %vm1257, %v1749, 0.0
      %v1782 = vsel %vm1258, %v1765, 0.0
      %v1783 = vsel %vm1257, %v1750, 0.0
      %v1784 = vsel %vm1258, %v1766, 0.0
      %v1785 = vsel %vm1257, %v1751, 0.0
      %v1786 = vsel %vm1258, %v1767, 0.0
      %v1787 = vsel %vm1257, %v1752, 0.0
      %v1788 = vsel %vm1258, %v1768, 0.0
      %v1789 = vsel %vm1257, %v1753, 0.0
      %v1790 = vsel %vm1258, %v1769, 0.0
      %v1791 = vsel %vm1257, %v1754, 0.0
      %v1792 = vsel %vm1258, %v1770, 0.0
      %v1793 = vsel %vm1257, %v1755, 0.0
      %v1794 = vsel %vm1258, %v1771, 0.0
      %v1795 = vsel %vm1257, %v1756, 0.0
      %v1796 = vsel %vm1258, %v1772, 0.0
      %v1797 = vsel %vm1257, %v1757, 0.0
      %v1798 = vsel %vm1258, %v1773, 0.0
      %v1799 = vsel %vm1257, %v1758, 0.0
      %v1800 = vsel %vm1258, %v1774, 0.0
      %v1801 = vsel %vm1257, %v1759, 0.0
      %v1802 = vsel %vm1258, %v1775, 0.0
      %v1803 = vsel %vm1257, %v1760, 0.0
      %v1804 = vsel %vm1258, %v1776, 0.0
      %v1805 = vsel %vm1257, %v1761, 0.0
      %v1806 = vsel %vm1258, %v1777, 0.0
      %v1807 = vsel %vm1257, %v1762, 0.0
      %v1808 = vsel %vm1258, %v1778, 0.0
      %v1809 = vsel %vm1257, %v1763, 0.0
      %v1810 = vsel %vm1258, %v1779, 0.0
      %v1811 = vsel %vm1257, %v1764, 0.0
      %v1812 = vsel %vm1258, %v1780, 0.0
      %v1813 = vpack.c.bf16 %v1685, %v1685
      %v1814 = vpack.c.bf16 %v1686, %v1686
      %v1815 = vpack.c.bf16 %v1687, %v1687
      %v1816 = vpack.c.bf16 %v1688, %v1688
      %v1817 = vpack.c.bf16 %v1689, %v1689
      %v1818 = vpack.c.bf16 %v1690, %v1690
      %v1819 = vpack.c.bf16 %v1691, %v1691
      %v1820 = vpack.c.bf16 %v1692, %v1692
      %v1821 = vpack.c.bf16 %v1693, %v1693
      %v1822 = vpack.c.bf16 %v1694, %v1694
      %v1823 = vpack.c.bf16 %v1695, %v1695
      %v1824 = vpack.c.bf16 %v1696, %v1696
      %v1825 = vpack.c.bf16 %v1697, %v1697
      %v1826 = vpack.c.bf16 %v1698, %v1698
      %v1827 = vpack.c.bf16 %v1699, %v1699
      %v1828 = vpack.c.bf16 %v1700, %v1700
      %v1829 = vpack.c.bf16 %v1701, %v1701
      %v1830 = vpack.c.bf16 %v1702, %v1702
      %v1831 = vpack.c.bf16 %v1703, %v1703
      %v1832 = vpack.c.bf16 %v1704, %v1704
      %v1833 = vpack.c.bf16 %v1705, %v1705
      %v1834 = vpack.c.bf16 %v1706, %v1706
      %v1835 = vpack.c.bf16 %v1707, %v1707
      %v1836 = vpack.c.bf16 %v1708, %v1708
      %v1837 = vpack.c.bf16 %v1709, %v1709
      %v1838 = vpack.c.bf16 %v1710, %v1710
      %v1839 = vpack.c.bf16 %v1711, %v1711
      %v1840 = vpack.c.bf16 %v1712, %v1712
      %v1841 = vpack.c.bf16 %v1713, %v1713
      %v1842 = vpack.c.bf16 %v1714, %v1714
      %v1843 = vpack.c.bf16 %v1715, %v1715
      %v1844 = vpack.c.bf16 %v1716, %v1716
      %v1845 = vpack.c.bf16 %v1589, %v1589
      %v1846 = vpack.c.bf16 %v1590, %v1590
      %v1847 = vpack.c.bf16 %v1591, %v1591
      %v1848 = vpack.c.bf16 %v1592, %v1592
      %v1849 = vpack.c.bf16 %v1593, %v1593
      %v1850 = vpack.c.bf16 %v1594, %v1594
      %v1851 = vpack.c.bf16 %v1595, %v1595
      %v1852 = vpack.c.bf16 %v1596, %v1596
      %v1853 = vpack.c.bf16 %v1597, %v1597
      %v1854 = vpack.c.bf16 %v1598, %v1598
      %v1855 = vpack.c.bf16 %v1599, %v1599
      %v1856 = vpack.c.bf16 %v1600, %v1600
      %v1857 = vpack.c.bf16 %v1601, %v1601
      %v1858 = vpack.c.bf16 %v1602, %v1602
      %v1859 = vpack.c.bf16 %v1603, %v1603
      %v1860 = vpack.c.bf16 %v1604, %v1604
      %v1861 = vpack.c.bf16 %v1605, %v1605
      %v1862 = vpack.c.bf16 %v1606, %v1606
      %v1863 = vpack.c.bf16 %v1607, %v1607
      %v1864 = vpack.c.bf16 %v1608, %v1608
      %v1865 = vpack.c.bf16 %v1609, %v1609
      %v1866 = vpack.c.bf16 %v1610, %v1610
      %v1867 = vpack.c.bf16 %v1611, %v1611
      %v1868 = vpack.c.bf16 %v1612, %v1612
      %v1869 = vpack.c.bf16 %v1613, %v1613
      %v1870 = vpack.c.bf16 %v1614, %v1614
      %v1871 = vpack.c.bf16 %v1615, %v1615
      %v1872 = vpack.c.bf16 %v1616, %v1616
      %v1873 = vpack.c.bf16 %v1617, %v1617
      %v1874 = vpack.c.bf16 %v1618, %v1618
      %v1875 = vpack.c.bf16 %v1619, %v1619
      %v1876 = vpack.c.bf16 %v1620, %v1620
      %v1877 = vpack.c.bf16 %v1781, %v1781
      %v1878 = vpack.c.bf16 %v1782, %v1782
      %v1879 = vpack.c.bf16 %v1783, %v1783
      %v1880 = vpack.c.bf16 %v1784, %v1784
      %v1881 = vpack.c.bf16 %v1785, %v1785
      %v1882 = vpack.c.bf16 %v1786, %v1786
      %v1883 = vpack.c.bf16 %v1787, %v1787
      %v1884 = vpack.c.bf16 %v1788, %v1788
      %v1885 = vpack.c.bf16 %v1789, %v1789
      %v1886 = vpack.c.bf16 %v1790, %v1790
      %v1887 = vpack.c.bf16 %v1791, %v1791
      %v1888 = vpack.c.bf16 %v1792, %v1792
      %v1889 = vpack.c.bf16 %v1793, %v1793
      %v1890 = vpack.c.bf16 %v1794, %v1794
      %v1891 = vpack.c.bf16 %v1795, %v1795
      %v1892 = vpack.c.bf16 %v1796, %v1796
      %v1893 = vpack.c.bf16 %v1797, %v1797
      %v1894 = vpack.c.bf16 %v1798, %v1798
      %v1895 = vpack.c.bf16 %v1799, %v1799
      %v1896 = vpack.c.bf16 %v1800, %v1800
      %v1897 = vpack.c.bf16 %v1801, %v1801
      %v1898 = vpack.c.bf16 %v1802, %v1802
      %v1899 = vpack.c.bf16 %v1803, %v1803
      %v1900 = vpack.c.bf16 %v1804, %v1804
      %v1901 = vpack.c.bf16 %v1805, %v1805
      %v1902 = vpack.c.bf16 %v1806, %v1806
      %v1903 = vpack.c.bf16 %v1807, %v1807
      %v1904 = vpack.c.bf16 %v1808, %v1808
      %v1905 = vpack.c.bf16 %v1809, %v1809
      %v1906 = vpack.c.bf16 %v1810, %v1810
      %v1907 = vpack.c.bf16 %v1811, %v1811
      %v1908 = vpack.c.bf16 %v1812, %v1812
      %v1941 = vunpack.c.l.b16 %v1813
      %v1942 = vunpack.c.l.b16 %v1814
      %v1943 = vunpack.c.l.b16 %v1815
      %v1944 = vunpack.c.l.b16 %v1816
      %v1945 = vunpack.c.l.b16 %v1817
      %v1946 = vunpack.c.l.b16 %v1818
      %v1947 = vunpack.c.l.b16 %v1819
      %v1948 = vunpack.c.l.b16 %v1820
      %v1949 = vunpack.c.l.b16 %v1821
      %v1950 = vunpack.c.l.b16 %v1822
      %v1951 = vunpack.c.l.b16 %v1823
      %v1952 = vunpack.c.l.b16 %v1824
      %v1953 = vunpack.c.l.b16 %v1825
      %v1954 = vunpack.c.l.b16 %v1826
      %v1955 = vunpack.c.l.b16 %v1827
      %v1956 = vunpack.c.l.b16 %v1828
      %v1957 = vunpack.c.l.b16 %v1829
      %v1958 = vunpack.c.l.b16 %v1830
      %v1959 = vunpack.c.l.b16 %v1831
      %v1960 = vunpack.c.l.b16 %v1832
      %v1961 = vunpack.c.l.b16 %v1833
      %v1962 = vunpack.c.l.b16 %v1834
      %v1963 = vunpack.c.l.b16 %v1835
      %v1964 = vunpack.c.l.b16 %v1836
      %v1965 = vunpack.c.l.b16 %v1837
      %v1966 = vunpack.c.l.b16 %v1838
      %v1967 = vunpack.c.l.b16 %v1839
      %v1968 = vunpack.c.l.b16 %v1840
      %v1969 = vunpack.c.l.b16 %v1841
      %v1970 = vunpack.c.l.b16 %v1842
      %v1971 = vunpack.c.l.b16 %v1843
      %v1972 = vunpack.c.l.b16 %v1844
      %v1973 = vpack.c.b16 %v1942, %v1941
      %v1974 = vpack.c.b16 %v1944, %v1943
      %v1975 = vpack.c.b16 %v1946, %v1945
      %v1976 = vpack.c.b16 %v1948, %v1947
      %v1977 = vpack.c.b16 %v1950, %v1949
      %v1978 = vpack.c.b16 %v1952, %v1951
      %v1979 = vpack.c.b16 %v1954, %v1953
      %v1980 = vpack.c.b16 %v1956, %v1955
      %v1981 = vpack.c.b16 %v1958, %v1957
      %v1982 = vpack.c.b16 %v1960, %v1959
      %v1983 = vpack.c.b16 %v1962, %v1961
      %v1984 = vpack.c.b16 %v1964, %v1963
      %v1985 = vpack.c.b16 %v1966, %v1965
      %v1986 = vpack.c.b16 %v1968, %v1967
      %v1987 = vpack.c.b16 %v1970, %v1969
      %v1988 = vpack.c.b16 %v1972, %v1971
      %v2021 = vunpack.c.l.b16 %v1845
      %v2022 = vunpack.c.l.b16 %v1846
      %v2023 = vunpack.c.l.b16 %v1847
      %v2024 = vunpack.c.l.b16 %v1848
      %v2025 = vunpack.c.l.b16 %v1849
      %v2026 = vunpack.c.l.b16 %v1850
      %v2027 = vunpack.c.l.b16 %v1851
      %v2028 = vunpack.c.l.b16 %v1852
      %v2029 = vunpack.c.l.b16 %v1853
      %v2030 = vunpack.c.l.b16 %v1854
      %v2031 = vunpack.c.l.b16 %v1855
      %v2032 = vunpack.c.l.b16 %v1856
      %v2033 = vunpack.c.l.b16 %v1857
      %v2034 = vunpack.c.l.b16 %v1858
      %v2035 = vunpack.c.l.b16 %v1859
      %v2036 = vunpack.c.l.b16 %v1860
      %v2037 = vunpack.c.l.b16 %v1861
      %v2038 = vunpack.c.l.b16 %v1862
      %v2039 = vunpack.c.l.b16 %v1863
      %v2040 = vunpack.c.l.b16 %v1864
      %v2041 = vunpack.c.l.b16 %v1865
      %v2042 = vunpack.c.l.b16 %v1866
      %v2043 = vunpack.c.l.b16 %v1867
      %v2044 = vunpack.c.l.b16 %v1868
      %v2045 = vunpack.c.l.b16 %v1869
      %v2046 = vunpack.c.l.b16 %v1870
      %v2047 = vunpack.c.l.b16 %v1871
      %v2048 = vunpack.c.l.b16 %v1872
      %v2049 = vunpack.c.l.b16 %v1873
      %v2050 = vunpack.c.l.b16 %v1874
      %v2051 = vunpack.c.l.b16 %v1875
      %v2052 = vunpack.c.l.b16 %v1876
      %v2053 = vpack.c.b16 %v2022, %v2021
      %v2054 = vpack.c.b16 %v2024, %v2023
      %v2055 = vpack.c.b16 %v2026, %v2025
      %v2056 = vpack.c.b16 %v2028, %v2027
      %v2057 = vpack.c.b16 %v2030, %v2029
      %v2058 = vpack.c.b16 %v2032, %v2031
      %v2059 = vpack.c.b16 %v2034, %v2033
      %v2060 = vpack.c.b16 %v2036, %v2035
      %v2061 = vpack.c.b16 %v2038, %v2037
      %v2062 = vpack.c.b16 %v2040, %v2039
      %v2063 = vpack.c.b16 %v2042, %v2041
      %v2064 = vpack.c.b16 %v2044, %v2043
      %v2065 = vpack.c.b16 %v2046, %v2045
      %v2066 = vpack.c.b16 %v2048, %v2047
      %v2067 = vpack.c.b16 %v2050, %v2049
      %v2068 = vpack.c.b16 %v2052, %v2051
      %2069 = vrot.lane.b32.xlu0 %v2053, 4
      %v2070 = vpop.permute.xlu0 %2069
      %2071 = vrot.lane.b32.xlu0 %v2054, 4
      %v2072 = vpop.permute.xlu0 %2071
      %2073 = vrot.lane.b32.xlu0 %v2055, 4
      %v2074 = vpop.permute.xlu0 %2073
      %2075 = vrot.lane.b32.xlu0 %v2056, 4
      %v2076 = vpop.permute.xlu0 %2075
      %2077 = vrot.lane.b32.xlu0 %v2057, 4
      %v2078 = vpop.permute.xlu0 %2077
      %2079 = vrot.lane.b32.xlu0 %v2058, 4
      %v2080 = vpop.permute.xlu0 %2079
      %2081 = vrot.lane.b32.xlu0 %v2059, 4
      %v2082 = vpop.permute.xlu0 %2081
      %2083 = vrot.lane.b32.xlu0 %v2060, 4
      %v2084 = vpop.permute.xlu0 %2083
      %2085 = vrot.lane.b32.xlu0 %v2061, 4
      %v2086 = vpop.permute.xlu0 %2085
      %2087 = vrot.lane.b32.xlu0 %v2062, 4
      %v2088 = vpop.permute.xlu0 %2087
      %2089 = vrot.lane.b32.xlu0 %v2063, 4
      %v2090 = vpop.permute.xlu0 %2089
      %2091 = vrot.lane.b32.xlu0 %v2064, 4
      %v2092 = vpop.permute.xlu0 %2091
      %2093 = vrot.lane.b32.xlu0 %v2065, 4
      %v2094 = vpop.permute.xlu0 %2093
      %2095 = vrot.lane.b32.xlu0 %v2066, 4
      %v2096 = vpop.permute.xlu0 %2095
      %2097 = vrot.lane.b32.xlu0 %v2067, 4
      %v2098 = vpop.permute.xlu0 %2097
      %2099 = vrot.lane.b32.xlu0 %v2068, 4
      %v2100 = vpop.permute.xlu0 %2099
      %v2133 = vunpack.c.l.b16 %v1877
      %v2134 = vunpack.c.l.b16 %v1878
      %v2135 = vunpack.c.l.b16 %v1879
      %v2136 = vunpack.c.l.b16 %v1880
      %v2137 = vunpack.c.l.b16 %v1881
      %v2138 = vunpack.c.l.b16 %v1882
      %v2139 = vunpack.c.l.b16 %v1883
      %v2140 = vunpack.c.l.b16 %v1884
      %v2141 = vunpack.c.l.b16 %v1885
      %v2142 = vunpack.c.l.b16 %v1886
      %v2143 = vunpack.c.l.b16 %v1887
      %v2144 = vunpack.c.l.b16 %v1888
      %v2145 = vunpack.c.l.b16 %v1889
      %v2146 = vunpack.c.l.b16 %v1890
      %v2147 = vunpack.c.l.b16 %v1891
      %v2148 = vunpack.c.l.b16 %v1892
      %v2149 = vunpack.c.l.b16 %v1893
      %v2150 = vunpack.c.l.b16 %v1894
      %v2151 = vunpack.c.l.b16 %v1895
      %v2152 = vunpack.c.l.b16 %v1896
      %v2153 = vunpack.c.l.b16 %v1897
      %v2154 = vunpack.c.l.b16 %v1898
      %v2155 = vunpack.c.l.b16 %v1899
      %v2156 = vunpack.c.l.b16 %v1900
      %v2157 = vunpack.c.l.b16 %v1901
      %v2158 = vunpack.c.l.b16 %v1902
      %v2159 = vunpack.c.l.b16 %v1903
      %v2160 = vunpack.c.l.b16 %v1904
      %v2161 = vunpack.c.l.b16 %v1905
      %v2162 = vunpack.c.l.b16 %v1906
      %v2163 = vunpack.c.l.b16 %v1907
      %v2164 = vunpack.c.l.b16 %v1908
      %v2165 = vpack.c.b16 %v2134, %v2133
      %v2166 = vpack.c.b16 %v2136, %v2135
      %v2167 = vpack.c.b16 %v2138, %v2137
      %v2168 = vpack.c.b16 %v2140, %v2139
      %v2169 = vpack.c.b16 %v2142, %v2141
      %v2170 = vpack.c.b16 %v2144, %v2143
      %v2171 = vpack.c.b16 %v2146, %v2145
      %v2172 = vpack.c.b16 %v2148, %v2147
      %v2173 = vpack.c.b16 %v2150, %v2149
      %v2174 = vpack.c.b16 %v2152, %v2151
      %v2175 = vpack.c.b16 %v2154, %v2153
      %v2176 = vpack.c.b16 %v2156, %v2155
      %v2177 = vpack.c.b16 %v2158, %v2157
      %v2178 = vpack.c.b16 %v2160, %v2159
      %v2179 = vpack.c.b16 %v2162, %v2161
      %v2180 = vpack.c.b16 %v2164, %v2163
      %2181 = vrot.lane.b32.xlu0 %v2165, 8
      %v2182 = vpop.permute.xlu0 %2181
      %2183 = vrot.lane.b32.xlu0 %v2166, 8
      %v2184 = vpop.permute.xlu0 %2183
      %2185 = vrot.lane.b32.xlu0 %v2167, 8
      %v2186 = vpop.permute.xlu0 %2185
      %2187 = vrot.lane.b32.xlu0 %v2168, 8
      %v2188 = vpop.permute.xlu0 %2187
      %2189 = vrot.lane.b32.xlu0 %v2169, 8
      %v2190 = vpop.permute.xlu0 %2189
      %2191 = vrot.lane.b32.xlu0 %v2170, 8
      %v2192 = vpop.permute.xlu0 %2191
      %2193 = vrot.lane.b32.xlu0 %v2171, 8
      %v2194 = vpop.permute.xlu0 %2193
      %2195 = vrot.lane.b32.xlu0 %v2172, 8
      %v2196 = vpop.permute.xlu0 %2195
      %2197 = vrot.lane.b32.xlu0 %v2173, 8
      %v2198 = vpop.permute.xlu0 %2197
      %2199 = vrot.lane.b32.xlu0 %v2174, 8
      %v2200 = vpop.permute.xlu0 %2199
      %2201 = vrot.lane.b32.xlu0 %v2175, 8
      %v2202 = vpop.permute.xlu0 %2201
      %2203 = vrot.lane.b32.xlu0 %v2176, 8
      %v2204 = vpop.permute.xlu0 %2203
      %2205 = vrot.lane.b32.xlu0 %v2177, 8
      %v2206 = vpop.permute.xlu0 %2205
      %2207 = vrot.lane.b32.xlu0 %v2178, 8
      %v2208 = vpop.permute.xlu0 %2207
      %2209 = vrot.lane.b32.xlu0 %v2179, 8
      %v2210 = vpop.permute.xlu0 %2209
      %2211 = vrot.lane.b32.xlu0 %v2180, 8
      %v2212 = vpop.permute.xlu0 %2211
      %v2215 = vsel %vm397, %v1973, %v2070
      %v2218 = vsel %vm397, %v1974, %v2072
      %v2221 = vsel %vm397, %v1975, %v2074
      %v2224 = vsel %vm397, %v1976, %v2076
      %v2227 = vsel %vm397, %v1977, %v2078
      %v2230 = vsel %vm397, %v1978, %v2080
      %v2233 = vsel %vm397, %v1979, %v2082
      %v2236 = vsel %vm397, %v1980, %v2084
      %v2239 = vsel %vm397, %v1981, %v2086
      %v2242 = vsel %vm397, %v1982, %v2088
      %v2245 = vsel %vm397, %v1983, %v2090
      %v2248 = vsel %vm397, %v1984, %v2092
      %v2251 = vsel %vm397, %v1985, %v2094
      %v2254 = vsel %vm397, %v1986, %v2096
      %v2257 = vsel %vm397, %v1987, %v2098
      %v2260 = vsel %vm397, %v1988, %v2100
      %vm2261 = vcmask 64512
      %v2263 = vsel %vm2261, %v2215, %v2182
      %v2265 = vsel %vm2261, %v2218, %v2184
      %v2267 = vsel %vm2261, %v2221, %v2186
      %v2269 = vsel %vm2261, %v2224, %v2188
      %v2271 = vsel %vm2261, %v2227, %v2190
      %v2273 = vsel %vm2261, %v2230, %v2192
      %v2275 = vsel %vm2261, %v2233, %v2194
      %v2277 = vsel %vm2261, %v2236, %v2196
      %v2279 = vsel %vm2261, %v2239, %v2198
      %v2281 = vsel %vm2261, %v2242, %v2200
      %v2283 = vsel %vm2261, %v2245, %v2202
      %v2285 = vsel %vm2261, %v2248, %v2204
      %v2287 = vsel %vm2261, %v2251, %v2206
      %v2289 = vsel %vm2261, %v2254, %v2208
      %v2291 = vsel %vm2261, %v2257, %v2210
      %v2293 = vsel %vm2261, %v2260, %v2212
      %v2310 = vunpack.c.l.b16 %v2263
      %v2311 = vunpack.c.h.b16 %v2263
      %v2312 = vunpack.c.l.b16 %v2265
      %v2313 = vunpack.c.h.b16 %v2265
      %v2314 = vunpack.c.l.b16 %v2267
      %v2315 = vunpack.c.h.b16 %v2267
      %v2316 = vunpack.c.l.b16 %v2269
      %v2317 = vunpack.c.h.b16 %v2269
      %v2318 = vunpack.c.l.b16 %v2271
      %v2319 = vunpack.c.h.b16 %v2271
      %v2320 = vunpack.c.l.b16 %v2273
      %v2321 = vunpack.c.h.b16 %v2273
      %v2322 = vunpack.c.l.b16 %v2275
      %v2323 = vunpack.c.h.b16 %v2275
      %v2324 = vunpack.c.l.b16 %v2277
      %v2325 = vunpack.c.h.b16 %v2277
      %v2326 = vunpack.c.l.b16 %v2279
      %v2327 = vunpack.c.h.b16 %v2279
      %v2328 = vunpack.c.l.b16 %v2281
      %v2329 = vunpack.c.h.b16 %v2281
      %v2330 = vunpack.c.l.b16 %v2283
      %v2331 = vunpack.c.h.b16 %v2283
      %v2332 = vunpack.c.l.b16 %v2285
      %v2333 = vunpack.c.h.b16 %v2285
      %v2334 = vunpack.c.l.b16 %v2287
      %v2335 = vunpack.c.h.b16 %v2287
      %v2336 = vunpack.c.l.b16 %v2289
      %v2337 = vunpack.c.h.b16 %v2289
      %v2338 = vunpack.c.l.b16 %v2291
      %v2339 = vunpack.c.h.b16 %v2291
      %v2340 = vunpack.c.l.b16 %v2293
      %v2341 = vunpack.c.h.b16 %v2293
      %v2342 = vpack.c.b16 %v2310, %v2310
      %v2343 = vpack.c.b16 %v2311, %v2311
      %v2344 = vpack.c.b16 %v2312, %v2312
      %v2345 = vpack.c.b16 %v2313, %v2313
      %v2346 = vpack.c.b16 %v2314, %v2314
      %v2347 = vpack.c.b16 %v2315, %v2315
      %v2348 = vpack.c.b16 %v2316, %v2316
      %v2349 = vpack.c.b16 %v2317, %v2317
      %v2350 = vpack.c.b16 %v2318, %v2318
      %v2351 = vpack.c.b16 %v2319, %v2319
      %v2352 = vpack.c.b16 %v2320, %v2320
      %v2353 = vpack.c.b16 %v2321, %v2321
      %v2354 = vpack.c.b16 %v2322, %v2322
      %v2355 = vpack.c.b16 %v2323, %v2323
      %v2356 = vpack.c.b16 %v2324, %v2324
      %v2357 = vpack.c.b16 %v2325, %v2325
      %v2358 = vpack.c.b16 %v2326, %v2326
      %v2359 = vpack.c.b16 %v2327, %v2327
      %v2360 = vpack.c.b16 %v2328, %v2328
      %v2361 = vpack.c.b16 %v2329, %v2329
      %v2362 = vpack.c.b16 %v2330, %v2330
      %v2363 = vpack.c.b16 %v2331, %v2331
      %v2364 = vpack.c.b16 %v2332, %v2332
      %v2365 = vpack.c.b16 %v2333, %v2333
      %v2366 = vpack.c.b16 %v2334, %v2334
      %v2367 = vpack.c.b16 %v2335, %v2335
      %v2368 = vpack.c.b16 %v2336, %v2336
      %v2369 = vpack.c.b16 %v2337, %v2337
      %v2370 = vpack.c.b16 %v2338, %v2338
      %v2371 = vpack.c.b16 %v2339, %v2339
      %v2372 = vpack.c.b16 %v2340, %v2340
      %v2373 = vpack.c.b16 %v2341, %v2341
      %s2406 = scalar_lea.vmem [#allocation4], 8
      %vm2407 = vcmask 93184
      %2408 = vst.msk [vmem:[%s2406] sm:$0xf] %vm2407, %v2342
      %2409 = vst.msk [vmem:[%s2406 + $0x4] sm:$0xf] %vm2407, %v2343
      %2410 = vst.msk [vmem:[%s2406 + $0x8] sm:$0xf] %vm2407, %v2344
      %2411 = vst.msk [vmem:[%s2406 + $0xc] sm:$0xf] %vm2407, %v2345
      %2412 = vst.msk [vmem:[%s2406 + $0x10] sm:$0xf] %vm2407, %v2346
      %2413 = vst.msk [vmem:[%s2406 + $0x14] sm:$0xf] %vm2407, %v2347
      %2414 = vst.msk [vmem:[%s2406 + $0x18] sm:$0xf] %vm2407, %v2348
      %2415 = vst.msk [vmem:[%s2406 + $0x1c] sm:$0xf] %vm2407, %v2349
      %2416 = vst.msk [vmem:[%s2406 + $0x20] sm:$0xf] %vm2407, %v2350
      %2417 = vst.msk [vmem:[%s2406 + $0x24] sm:$0xf] %vm2407, %v2351
      %2418 = vst.msk [vmem:[%s2406 + $0x28] sm:$0xf] %vm2407, %v2352
      %2419 = vst.msk [vmem:[%s2406 + $0x2c] sm:$0xf] %vm2407, %v2353
      %2420 = vst.msk [vmem:[%s2406 + $0x30] sm:$0xf] %vm2407, %v2354
      %2421 = vst.msk [vmem:[%s2406 + $0x34] sm:$0xf] %vm2407, %v2355
      %2422 = vst.msk [vmem:[%s2406 + $0x38] sm:$0xf] %vm2407, %v2356
      %2423 = vst.msk [vmem:[%s2406 + $0x3c] sm:$0xf] %vm2407, %v2357
      %2424 = vst.msk [vmem:[%s2406 + $0x40] sm:$0xf] %vm2407, %v2358
      %2425 = vst.msk [vmem:[%s2406 + $0x44] sm:$0xf] %vm2407, %v2359
      %2426 = vst.msk [vmem:[%s2406 + $0x48] sm:$0xf] %vm2407, %v2360
      %2427 = vst.msk [vmem:[%s2406 + $0x4c] sm:$0xf] %vm2407, %v2361
      %2428 = vst.msk [vmem:[%s2406 + $0x50] sm:$0xf] %vm2407, %v2362
      %2429 = vst.msk [vmem:[%s2406 + $0x54] sm:$0xf] %vm2407, %v2363
      %2430 = vst.msk [vmem:[%s2406 + $0x58] sm:$0xf] %vm2407, %v2364
      %2431 = vst.msk [vmem:[%s2406 + $0x5c] sm:$0xf] %vm2407, %v2365
      %2432 = vst.msk [vmem:[%s2406 + $0x60] sm:$0xf] %vm2407, %v2366
      %2433 = vst.msk [vmem:[%s2406 + $0x64] sm:$0xf] %vm2407, %v2367
      %2434 = vst.msk [vmem:[%s2406 + $0x68] sm:$0xf] %vm2407, %v2368
      %2435 = vst.msk [vmem:[%s2406 + $0x6c] sm:$0xf] %vm2407, %v2369
      %2436 = vst.msk [vmem:[%s2406 + $0x70] sm:$0xf] %vm2407, %v2370
      %2437 = vst.msk [vmem:[%s2406 + $0x74] sm:$0xf] %vm2407, %v2371
      %2438 = vst.msk [vmem:[%s2406 + $0x78] sm:$0xf] %vm2407, %v2372
      %2439 = vst.msk [vmem:[%s2406 + $0x7c] sm:$0xf] %vm2407, %v2373
      %s2440 = smul.u32 %s20, 6
      %s2441 = smul.addr %s2440, 4
      %s2442 = scalar_lea.vmem %s1, %s2441
      %v2443 = vld [vmem:[%s2442] sm:$0xf]
      %v2444 = vld [vmem:[%s2442 + $0x4] sm:$0x3]
      %v2445 = vld [vmem:[%s2442 + $0x8] sm:$0xf]
      %v2446 = vld [vmem:[%s2442 + $0xc] sm:$0x3]
      %v2447 = vld [vmem:[%s2442 + $0x10] sm:$0xf]
      %v2448 = vld [vmem:[%s2442 + $0x14] sm:$0x3]
      %v2449 = vld [vmem:[#allocation4] sm:$0xf]
      %v2450 = vld [vmem:[#allocation4 + $0x4] sm:$0xf]
      %v2451 = vld [vmem:[#allocation4 + $0x8] sm:$0xf]
      %v2452 = vld [vmem:[#allocation4 + $0xc] sm:$0xf]
      %v2453 = vld [vmem:[#allocation4 + $0x10] sm:$0xf]
      %v2454 = vld [vmem:[#allocation4 + $0x14] sm:$0xf]
      %v2455 = vld [vmem:[#allocation4 + $0x18] sm:$0xf]
      %v2456 = vld [vmem:[#allocation4 + $0x1c] sm:$0xf]
      %v2457 = vld [vmem:[#allocation4 + $0x20] sm:$0xf]
      %v2458 = vld [vmem:[#allocation4 + $0x24] sm:$0xf]
      %v2459 = vld [vmem:[#allocation4 + $0x28] sm:$0xf]
      %v2460 = vld [vmem:[#allocation4 + $0x2c] sm:$0xf]
      %v2461 = vld [vmem:[#allocation4 + $0x30] sm:$0xf]
      %v2462 = vld [vmem:[#allocation4 + $0x34] sm:$0xf]
      %v2463 = vld [vmem:[#allocation4 + $0x38] sm:$0xf]
      %v2464 = vld [vmem:[#allocation4 + $0x3c] sm:$0xf]
      %v2465 = vld [vmem:[#allocation4 + $0x40] sm:$0xf]
      %v2466 = vld [vmem:[#allocation4 + $0x44] sm:$0xf]
      %v2467 = vld [vmem:[#allocation4 + $0x48] sm:$0xf]
      %v2468 = vld [vmem:[#allocation4 + $0x4c] sm:$0xf]
      %v2469 = vld [vmem:[#allocation4 + $0x50] sm:$0xf]
      %v2470 = vld [vmem:[#allocation4 + $0x54] sm:$0xf]
      %v2471 = vld [vmem:[#allocation4 + $0x58] sm:$0xf]
      %v2472 = vld [vmem:[#allocation4 + $0x5c] sm:$0xf]
      %v2473 = vld [vmem:[#allocation4 + $0x60] sm:$0xf]
      %v2474 = vld [vmem:[#allocation4 + $0x64] sm:$0xf]
      %v2475 = vld [vmem:[#allocation4 + $0x68] sm:$0xf]
      %v2476 = vld [vmem:[#allocation4 + $0x6c] sm:$0xf]
      %v2477 = vld [vmem:[#allocation4 + $0x70] sm:$0xf]
      %v2478 = vld [vmem:[#allocation4 + $0x74] sm:$0xf]
      %v2479 = vld [vmem:[#allocation4 + $0x78] sm:$0xf]
      %v2480 = vld [vmem:[#allocation4 + $0x7c] sm:$0xf]
      %v2481 = vld [vmem:[%s2406] sm:$0xf]
      %v2482 = vld [vmem:[%s2406 + $0x4] sm:$0xf]
      %v2483 = vld [vmem:[%s2406 + $0x8] sm:$0xf]
      %v2484 = vld [vmem:[%s2406 + $0xc] sm:$0xf]
      %v2485 = vld [vmem:[%s2406 + $0x10] sm:$0xf]
      %v2486 = vld [vmem:[%s2406 + $0x14] sm:$0xf]
      %v2487 = vld [vmem:[%s2406 + $0x18] sm:$0xf]
      %v2488 = vld [vmem:[%s2406 + $0x1c] sm:$0xf]
      %v2489 = vld [vmem:[%s2406 + $0x20] sm:$0xf]
      %v2490 = vld [vmem:[%s2406 + $0x24] sm:$0xf]
      %v2491 = vld [vmem:[%s2406 + $0x28] sm:$0xf]
      %v2492 = vld [vmem:[%s2406 + $0x2c] sm:$0xf]
      %v2493 = vld [vmem:[%s2406 + $0x30] sm:$0xf]
      %v2494 = vld [vmem:[%s2406 + $0x34] sm:$0xf]
      %v2495 = vld [vmem:[%s2406 + $0x38] sm:$0xf]
      %v2496 = vld [vmem:[%s2406 + $0x3c] sm:$0xf]
      %v2497 = vld [vmem:[%s2406 + $0x40] sm:$0xf]
      %v2498 = vld [vmem:[%s2406 + $0x44] sm:$0xf]
      %v2499 = vld [vmem:[%s2406 + $0x48] sm:$0xf]
      %v2500 = vld [vmem:[%s2406 + $0x4c] sm:$0xf]
      %v2501 = vld [vmem:[%s2406 + $0x50] sm:$0xf]
      %v2502 = vld [vmem:[%s2406 + $0x54] sm:$0xf]
      %v2503 = vld [vmem:[%s2406 + $0x58] sm:$0xf]
      %v2504 = vld [vmem:[%s2406 + $0x5c] sm:$0xf]
      %v2505 = vld [vmem:[%s2406 + $0x60] sm:$0xf]
      %v2506 = vld [vmem:[%s2406 + $0x64] sm:$0xf]
      %v2507 = vld [vmem:[%s2406 + $0x68] sm:$0xf]
      %v2508 = vld [vmem:[%s2406 + $0x6c] sm:$0xf]
      %v2509 = vld [vmem:[%s2406 + $0x70] sm:$0xf]
      %v2510 = vld [vmem:[%s2406 + $0x74] sm:$0xf]
      %v2511 = vld [vmem:[%s2406 + $0x78] sm:$0xf]
      %v2512 = vld [vmem:[%s2406 + $0x7c] sm:$0xf]
      %v2545 = vunpack.c.l.b16 %v2481
      %v2546 = vunpack.c.l.b16 %v2482
      %v2547 = vunpack.c.l.b16 %v2483
      %v2548 = vunpack.c.l.b16 %v2484
      %v2549 = vunpack.c.l.b16 %v2485
      %v2550 = vunpack.c.l.b16 %v2486
      %v2551 = vunpack.c.l.b16 %v2487
      %v2552 = vunpack.c.l.b16 %v2488
      %v2553 = vunpack.c.l.b16 %v2489
      %v2554 = vunpack.c.l.b16 %v2490
      %v2555 = vunpack.c.l.b16 %v2491
      %v2556 = vunpack.c.l.b16 %v2492
      %v2557 = vunpack.c.l.b16 %v2493
      %v2558 = vunpack.c.l.b16 %v2494
      %v2559 = vunpack.c.l.b16 %v2495
      %v2560 = vunpack.c.l.b16 %v2496
      %v2561 = vunpack.c.l.b16 %v2497
      %v2562 = vunpack.c.l.b16 %v2498
      %v2563 = vunpack.c.l.b16 %v2499
      %v2564 = vunpack.c.l.b16 %v2500
      %v2565 = vunpack.c.l.b16 %v2501
      %v2566 = vunpack.c.l.b16 %v2502
      %v2567 = vunpack.c.l.b16 %v2503
      %v2568 = vunpack.c.l.b16 %v2504
      %v2569 = vunpack.c.l.b16 %v2505
      %v2570 = vunpack.c.l.b16 %v2506
      %v2571 = vunpack.c.l.b16 %v2507
      %v2572 = vunpack.c.l.b16 %v2508
      %v2573 = vunpack.c.l.b16 %v2509
      %v2574 = vunpack.c.l.b16 %v2510
      %v2575 = vunpack.c.l.b16 %v2511
      %v2576 = vunpack.c.l.b16 %v2512
      %v2577 = vpack.c.b16 %v2546, %v2545
      %v2578 = vpack.c.b16 %v2548, %v2547
      %v2579 = vpack.c.b16 %v2550, %v2549
      %v2580 = vpack.c.b16 %v2552, %v2551
      %v2581 = vpack.c.b16 %v2554, %v2553
      %v2582 = vpack.c.b16 %v2556, %v2555
      %v2583 = vpack.c.b16 %v2558, %v2557
      %v2584 = vpack.c.b16 %v2560, %v2559
      %v2585 = vpack.c.b16 %v2562, %v2561
      %v2586 = vpack.c.b16 %v2564, %v2563
      %v2587 = vpack.c.b16 %v2566, %v2565
      %v2588 = vpack.c.b16 %v2568, %v2567
      %v2589 = vpack.c.b16 %v2570, %v2569
      %v2590 = vpack.c.b16 %v2572, %v2571
      %v2591 = vpack.c.b16 %v2574, %v2573
      %v2592 = vpack.c.b16 %v2576, %v2575
      %v2595 = vunpack.c.l.b16 %v2445
      %v2596 = vunpack.c.l.b16 %v2446
      %v2597 = vpack.c.b16 %v2596, %v2595
      %vm2598 = vcmask 97280
      %v2600 = vsel %vm2598, %v2577, 0
      %v2603 = vsel %vm2598, %v2578, 0
      %v2606 = vsel %vm2598, %v2579, 0
      %v2609 = vsel %vm2598, %v2580, 0
      %v2612 = vsel %vm2598, %v2581, 0
      %v2615 = vsel %vm2598, %v2582, 0
      %v2618 = vsel %vm2598, %v2583, 0
      %v2621 = vsel %vm2598, %v2584, 0
      %v2624 = vsel %vm2598, %v2585, 0
      %v2627 = vsel %vm2598, %v2586, 0
      %v2630 = vsel %vm2598, %v2587, 0
      %v2633 = vsel %vm2598, %v2588, 0
      %v2636 = vsel %vm2598, %v2589, 0
      %v2639 = vsel %vm2598, %v2590, 0
      %v2642 = vsel %vm2598, %v2591, 0
      %v2645 = vsel %vm2598, %v2592, 0
      %vm2647 = vcmask 1045504
      %v2649 = vsel %vm2647, %v2597, 0
      %2651 = vmatpush.bf16.msra.mxu0 0
      %2652 = vmatpush.bf16.msra.mxu0 0
      %2653 = vmatpush.bf16.msra.mxu0 0
      %2654 = vmatpush.bf16.msra.mxu0 0
      %2655 = vmatpush.bf16.msra.mxu0 0
      %2656 = vmatpush.bf16.msra.mxu0 0
      %2657 = vmatpush.bf16.msra.mxu0 0
      %2658 = vmatpush.bf16.msra.mxu0 %v2649
      %2659 = vmatmul.bf16.gmra.mxu0 %v2600
      %v2660 = vpop.f32.mrf.mxu0
      %v2661 = vadd.f32 0.0, %v2660
      %v2662 = vpop.f32.mrf.mxu0
      %v2663 = vadd.f32 0.0, %v2662
      %2664 = vmatmul.bf16.gmra.mxu0 %v2603
      %v2665 = vpop.f32.mrf.mxu0
      %v2666 = vadd.f32 0.0, %v2665
      %v2667 = vpop.f32.mrf.mxu0
      %v2668 = vadd.f32 0.0, %v2667
      %2669 = vmatmul.bf16.gmra.mxu0 %v2606
      %v2670 = vpop.f32.mrf.mxu0
      %v2671 = vadd.f32 0.0, %v2670
      %v2672 = vpop.f32.mrf.mxu0
      %v2673 = vadd.f32 0.0, %v2672
      %2674 = vmatmul.bf16.gmra.mxu0 %v2609
      %v2675 = vpop.f32.mrf.mxu0
      %v2676 = vadd.f32 0.0, %v2675
      %v2677 = vpop.f32.mrf.mxu0
      %v2678 = vadd.f32 0.0, %v2677
      %2679 = vmatmul.bf16.gmra.mxu0 %v2612
      %v2680 = vpop.f32.mrf.mxu0
      %v2681 = vadd.f32 0.0, %v2680
      %v2682 = vpop.f32.mrf.mxu0
      %v2683 = vadd.f32 0.0, %v2682
      %2684 = vmatmul.bf16.gmra.mxu0 %v2615
      %v2685 = vpop.f32.mrf.mxu0
      %v2686 = vadd.f32 0.0, %v2685
      %v2687 = vpop.f32.mrf.mxu0
      %v2688 = vadd.f32 0.0, %v2687
      %2689 = vmatmul.bf16.gmra.mxu0 %v2618
      %v2690 = vpop.f32.mrf.mxu0
      %v2691 = vadd.f32 0.0, %v2690
      %v2692 = vpop.f32.mrf.mxu0
      %v2693 = vadd.f32 0.0, %v2692
      %2694 = vmatmul.bf16.gmra.mxu0 %v2621
      %v2695 = vpop.f32.mrf.mxu0
      %v2696 = vadd.f32 0.0, %v2695
      %v2697 = vpop.f32.mrf.mxu0
      %v2698 = vadd.f32 0.0, %v2697
      %2699 = vmatmul.bf16.gmra.mxu0 %v2624
      %v2700 = vpop.f32.mrf.mxu0
      %v2701 = vadd.f32 0.0, %v2700
      %v2702 = vpop.f32.mrf.mxu0
      %v2703 = vadd.f32 0.0, %v2702
      %2704 = vmatmul.bf16.gmra.mxu0 %v2627
      %v2705 = vpop.f32.mrf.mxu0
      %v2706 = vadd.f32 0.0, %v2705
      %v2707 = vpop.f32.mrf.mxu0
      %v2708 = vadd.f32 0.0, %v2707
      %2709 = vmatmul.bf16.gmra.mxu0 %v2630
      %v2710 = vpop.f32.mrf.mxu0
      %v2711 = vadd.f32 0.0, %v2710
      %v2712 = vpop.f32.mrf.mxu0
      %v2713 = vadd.f32 0.0, %v2712
      %2714 = vmatmul.bf16.gmra.mxu0 %v2633
      %v2715 = vpop.f32.mrf.mxu0
      %v2716 = vadd.f32 0.0, %v2715
      %v2717 = vpop.f32.mrf.mxu0
      %v2718 = vadd.f32 0.0, %v2717
      %2719 = vmatmul.bf16.gmra.mxu0 %v2636
      %v2720 = vpop.f32.mrf.mxu0
      %v2721 = vadd.f32 0.0, %v2720
      %v2722 = vpop.f32.mrf.mxu0
      %v2723 = vadd.f32 0.0, %v2722
      %2724 = vmatmul.bf16.gmra.mxu0 %v2639
      %v2725 = vpop.f32.mrf.mxu0
      %v2726 = vadd.f32 0.0, %v2725
      %v2727 = vpop.f32.mrf.mxu0
      %v2728 = vadd.f32 0.0, %v2727
      %2729 = vmatmul.bf16.gmra.mxu0 %v2642
      %v2730 = vpop.f32.mrf.mxu0
      %v2731 = vadd.f32 0.0, %v2730
      %v2732 = vpop.f32.mrf.mxu0
      %v2733 = vadd.f32 0.0, %v2732
      %2734 = vmatmul.bf16.gmra.mxu0 %v2645
      %v2735 = vpop.f32.mrf.mxu0
      %v2736 = vadd.f32 0.0, %v2735
      %v2737 = vpop.f32.mrf.mxu0
      %v2738 = vadd.f32 0.0, %v2737
      %2739 = vdwg.mxu0
      %v2772 = vunpack.c.l.b16 %v2449
      %v2773 = vunpack.c.l.b16 %v2450
      %v2774 = vunpack.c.l.b16 %v2451
      %v2775 = vunpack.c.l.b16 %v2452
      %v2776 = vunpack.c.l.b16 %v2453
      %v2777 = vunpack.c.l.b16 %v2454
      %v2778 = vunpack.c.l.b16 %v2455
      %v2779 = vunpack.c.l.b16 %v2456
      %v2780 = vunpack.c.l.b16 %v2457
      %v2781 = vunpack.c.l.b16 %v2458
      %v2782 = vunpack.c.l.b16 %v2459
      %v2783 = vunpack.c.l.b16 %v2460
      %v2784 = vunpack.c.l.b16 %v2461
      %v2785 = vunpack.c.l.b16 %v2462
      %v2786 = vunpack.c.l.b16 %v2463
      %v2787 = vunpack.c.l.b16 %v2464
      %v2788 = vunpack.c.l.b16 %v2465
      %v2789 = vunpack.c.l.b16 %v2466
      %v2790 = vunpack.c.l.b16 %v2467
      %v2791 = vunpack.c.l.b16 %v2468
      %v2792 = vunpack.c.l.b16 %v2469
      %v2793 = vunpack.c.l.b16 %v2470
      %v2794 = vunpack.c.l.b16 %v2471
      %v2795 = vunpack.c.l.b16 %v2472
      %v2796 = vunpack.c.l.b16 %v2473
      %v2797 = vunpack.c.l.b16 %v2474
      %v2798 = vunpack.c.l.b16 %v2475
      %v2799 = vunpack.c.l.b16 %v2476
      %v2800 = vunpack.c.l.b16 %v2477
      %v2801 = vunpack.c.l.b16 %v2478
      %v2802 = vunpack.c.l.b16 %v2479
      %v2803 = vunpack.c.l.b16 %v2480
      %v2804 = vpack.c.b16 %v2773, %v2772
      %v2805 = vpack.c.b16 %v2775, %v2774
      %v2806 = vpack.c.b16 %v2777, %v2776
      %v2807 = vpack.c.b16 %v2779, %v2778
      %v2808 = vpack.c.b16 %v2781, %v2780
      %v2809 = vpack.c.b16 %v2783, %v2782
      %v2810 = vpack.c.b16 %v2785, %v2784
      %v2811 = vpack.c.b16 %v2787, %v2786
      %v2812 = vpack.c.b16 %v2789, %v2788
      %v2813 = vpack.c.b16 %v2791, %v2790
      %v2814 = vpack.c.b16 %v2793, %v2792
      %v2815 = vpack.c.b16 %v2795, %v2794
      %v2816 = vpack.c.b16 %v2797, %v2796
      %v2817 = vpack.c.b16 %v2799, %v2798
      %v2818 = vpack.c.b16 %v2801, %v2800
      %v2819 = vpack.c.b16 %v2803, %v2802
      %v2822 = vunpack.c.l.b16 %v2443
      %v2823 = vunpack.c.l.b16 %v2444
      %v2824 = vpack.c.b16 %v2823, %v2822
      %v2826 = vsel %vm2598, %v2804, 0
      %v2829 = vsel %vm2598, %v2805, 0
      %v2832 = vsel %vm2598, %v2806, 0
      %v2835 = vsel %vm2598, %v2807, 0
      %v2838 = vsel %vm2598, %v2808, 0
      %v2841 = vsel %vm2598, %v2809, 0
      %v2844 = vsel %vm2598, %v2810, 0
      %v2847 = vsel %vm2598, %v2811, 0
      %v2850 = vsel %vm2598, %v2812, 0
      %v2853 = vsel %vm2598, %v2813, 0
      %v2856 = vsel %vm2598, %v2814, 0
      %v2859 = vsel %vm2598, %v2815, 0
      %v2862 = vsel %vm2598, %v2816, 0
      %v2865 = vsel %vm2598, %v2817, 0
      %v2868 = vsel %vm2598, %v2818, 0
      %v2871 = vsel %vm2598, %v2819, 0
      %v2874 = vsel %vm2647, %v2824, 0
      %2876 = vmatpush.bf16.msra.mxu0 0
      %2877 = vmatpush.bf16.msra.mxu0 0
      %2878 = vmatpush.bf16.msra.mxu0 0
      %2879 = vmatpush.bf16.msra.mxu0 0
      %2880 = vmatpush.bf16.msra.mxu0 0
      %2881 = vmatpush.bf16.msra.mxu0 0
      %2882 = vmatpush.bf16.msra.mxu0 0
      %2883 = vmatpush.bf16.msra.mxu0 %v2874
      %2884 = vmatmul.bf16.gmra.mxu0 %v2826
      %v2885 = vpop.f32.mrf.mxu0
      %v2886 = vadd.f32 %v2661, %v2885
      %v2887 = vpop.f32.mrf.mxu0
      %v2888 = vadd.f32 %v2663, %v2887
      %2889 = vmatmul.bf16.gmra.mxu0 %v2829
      %v2890 = vpop.f32.mrf.mxu0
      %v2891 = vadd.f32 %v2666, %v2890
      %v2892 = vpop.f32.mrf.mxu0
      %v2893 = vadd.f32 %v2668, %v2892
      %2894 = vmatmul.bf16.gmra.mxu0 %v2832
      %v2895 = vpop.f32.mrf.mxu0
      %v2896 = vadd.f32 %v2671, %v2895
      %v2897 = vpop.f32.mrf.mxu0
      %v2898 = vadd.f32 %v2673, %v2897
      %2899 = vmatmul.bf16.gmra.mxu0 %v2835
      %v2900 = vpop.f32.mrf.mxu0
      %v2901 = vadd.f32 %v2676, %v2900
      %v2902 = vpop.f32.mrf.mxu0
      %v2903 = vadd.f32 %v2678, %v2902
      %2904 = vmatmul.bf16.gmra.mxu0 %v2838
      %v2905 = vpop.f32.mrf.mxu0
      %v2906 = vadd.f32 %v2681, %v2905
      %v2907 = vpop.f32.mrf.mxu0
      %v2908 = vadd.f32 %v2683, %v2907
      %2909 = vmatmul.bf16.gmra.mxu0 %v2841
      %v2910 = vpop.f32.mrf.mxu0
      %v2911 = vadd.f32 %v2686, %v2910
      %v2912 = vpop.f32.mrf.mxu0
      %v2913 = vadd.f32 %v2688, %v2912
      %2914 = vmatmul.bf16.gmra.mxu0 %v2844
      %v2915 = vpop.f32.mrf.mxu0
      %v2916 = vadd.f32 %v2691, %v2915
      %v2917 = vpop.f32.mrf.mxu0
      %v2918 = vadd.f32 %v2693, %v2917
      %2919 = vmatmul.bf16.gmra.mxu0 %v2847
      %v2920 = vpop.f32.mrf.mxu0
      %v2921 = vadd.f32 %v2696, %v2920
      %v2922 = vpop.f32.mrf.mxu0
      %v2923 = vadd.f32 %v2698, %v2922
      %2924 = vmatmul.bf16.gmra.mxu0 %v2850
      %v2925 = vpop.f32.mrf.mxu0
      %v2926 = vadd.f32 %v2701, %v2925
      %v2927 = vpop.f32.mrf.mxu0
      %v2928 = vadd.f32 %v2703, %v2927
      %2929 = vmatmul.bf16.gmra.mxu0 %v2853
      %v2930 = vpop.f32.mrf.mxu0
      %v2931 = vadd.f32 %v2706, %v2930
      %v2932 = vpop.f32.mrf.mxu0
      %v2933 = vadd.f32 %v2708, %v2932
      %2934 = vmatmul.bf16.gmra.mxu0 %v2856
      %v2935 = vpop.f32.mrf.mxu0
      %v2936 = vadd.f32 %v2711, %v2935
      %v2937 = vpop.f32.mrf.mxu0
      %v2938 = vadd.f32 %v2713, %v2937
      %2939 = vmatmul.bf16.gmra.mxu0 %v2859
      %v2940 = vpop.f32.mrf.mxu0
      %v2941 = vadd.f32 %v2716, %v2940
      %v2942 = vpop.f32.mrf.mxu0
      %v2943 = vadd.f32 %v2718, %v2942
      %2944 = vmatmul.bf16.gmra.mxu0 %v2862
      %v2945 = vpop.f32.mrf.mxu0
      %v2946 = vadd.f32 %v2721, %v2945
      %v2947 = vpop.f32.mrf.mxu0
      %v2948 = vadd.f32 %v2723, %v2947
      %2949 = vmatmul.bf16.gmra.mxu0 %v2865
      %v2950 = vpop.f32.mrf.mxu0
      %v2951 = vadd.f32 %v2726, %v2950
      %v2952 = vpop.f32.mrf.mxu0
      %v2953 = vadd.f32 %v2728, %v2952
      %2954 = vmatmul.bf16.gmra.mxu0 %v2868
      %v2955 = vpop.f32.mrf.mxu0
      %v2956 = vadd.f32 %v2731, %v2955
      %v2957 = vpop.f32.mrf.mxu0
      %v2958 = vadd.f32 %v2733, %v2957
      %2959 = vmatmul.bf16.gmra.mxu0 %v2871
      %v2960 = vpop.f32.mrf.mxu0
      %v2961 = vadd.f32 %v2736, %v2960
      %v2962 = vpop.f32.mrf.mxu0
      %v2963 = vadd.f32 %v2738, %v2962
      %2964 = vdwg.mxu0
      %s2965 = scalar_lea.vmem [#allocation4], 16
      %v2966 = vld [vmem:[%s2965] sm:$0xf]
      %v2967 = vld [vmem:[%s2965 + $0x4] sm:$0xf]
      %v2968 = vld [vmem:[%s2965 + $0x8] sm:$0xf]
      %v2969 = vld [vmem:[%s2965 + $0xc] sm:$0xf]
      %v2970 = vld [vmem:[%s2965 + $0x10] sm:$0xf]
      %v2971 = vld [vmem:[%s2965 + $0x14] sm:$0xf]
      %v2972 = vld [vmem:[%s2965 + $0x18] sm:$0xf]
      %v2973 = vld [vmem:[%s2965 + $0x1c] sm:$0xf]
      %v2974 = vld [vmem:[%s2965 + $0x20] sm:$0xf]
      %v2975 = vld [vmem:[%s2965 + $0x24] sm:$0xf]
      %v2976 = vld [vmem:[%s2965 + $0x28] sm:$0xf]
      %v2977 = vld [vmem:[%s2965 + $0x2c] sm:$0xf]
      %v2978 = vld [vmem:[%s2965 + $0x30] sm:$0xf]
      %v2979 = vld [vmem:[%s2965 + $0x34] sm:$0xf]
      %v2980 = vld [vmem:[%s2965 + $0x38] sm:$0xf]
      %v2981 = vld [vmem:[%s2965 + $0x3c] sm:$0xf]
      %v2982 = vld [vmem:[%s2965 + $0x40] sm:$0xf]
      %v2983 = vld [vmem:[%s2965 + $0x44] sm:$0xf]
      %v2984 = vld [vmem:[%s2965 + $0x48] sm:$0xf]
      %v2985 = vld [vmem:[%s2965 + $0x4c] sm:$0xf]
      %v2986 = vld [vmem:[%s2965 + $0x50] sm:$0xf]
      %v2987 = vld [vmem:[%s2965 + $0x54] sm:$0xf]
      %v2988 = vld [vmem:[%s2965 + $0x58] sm:$0xf]
      %v2989 = vld [vmem:[%s2965 + $0x5c] sm:$0xf]
      %v2990 = vld [vmem:[%s2965 + $0x60] sm:$0xf]
      %v2991 = vld [vmem:[%s2965 + $0x64] sm:$0xf]
      %v2992 = vld [vmem:[%s2965 + $0x68] sm:$0xf]
      %v2993 = vld [vmem:[%s2965 + $0x6c] sm:$0xf]
      %v2994 = vld [vmem:[%s2965 + $0x70] sm:$0xf]
      %v2995 = vld [vmem:[%s2965 + $0x74] sm:$0xf]
      %v2996 = vld [vmem:[%s2965 + $0x78] sm:$0xf]
      %v2997 = vld [vmem:[%s2965 + $0x7c] sm:$0xf]
      %v3030 = vunpack.c.l.b16 %v2966
      %v3031 = vunpack.c.l.b16 %v2967
      %v3032 = vunpack.c.l.b16 %v2968
      %v3033 = vunpack.c.l.b16 %v2969
      %v3034 = vunpack.c.l.b16 %v2970
      %v3035 = vunpack.c.l.b16 %v2971
      %v3036 = vunpack.c.l.b16 %v2972
      %v3037 = vunpack.c.l.b16 %v2973
      %v3038 = vunpack.c.l.b16 %v2974
      %v3039 = vunpack.c.l.b16 %v2975
      %v3040 = vunpack.c.l.b16 %v2976
      %v3041 = vunpack.c.l.b16 %v2977
      %v3042 = vunpack.c.l.b16 %v2978
      %v3043 = vunpack.c.l.b16 %v2979
      %v3044 = vunpack.c.l.b16 %v2980
      %v3045 = vunpack.c.l.b16 %v2981
      %v3046 = vunpack.c.l.b16 %v2982
      %v3047 = vunpack.c.l.b16 %v2983
      %v3048 = vunpack.c.l.b16 %v2984
      %v3049 = vunpack.c.l.b16 %v2985
      %v3050 = vunpack.c.l.b16 %v2986
      %v3051 = vunpack.c.l.b16 %v2987
      %v3052 = vunpack.c.l.b16 %v2988
      %v3053 = vunpack.c.l.b16 %v2989
      %v3054 = vunpack.c.l.b16 %v2990
      %v3055 = vunpack.c.l.b16 %v2991
      %v3056 = vunpack.c.l.b16 %v2992
      %v3057 = vunpack.c.l.b16 %v2993
      %v3058 = vunpack.c.l.b16 %v2994
      %v3059 = vunpack.c.l.b16 %v2995
      %v3060 = vunpack.c.l.b16 %v2996
      %v3061 = vunpack.c.l.b16 %v2997
      %v3062 = vpack.c.b16 %v3031, %v3030
      %v3063 = vpack.c.b16 %v3033, %v3032
      %v3064 = vpack.c.b16 %v3035, %v3034
      %v3065 = vpack.c.b16 %v3037, %v3036
      %v3066 = vpack.c.b16 %v3039, %v3038
      %v3067 = vpack.c.b16 %v3041, %v3040
      %v3068 = vpack.c.b16 %v3043, %v3042
      %v3069 = vpack.c.b16 %v3045, %v3044
      %v3070 = vpack.c.b16 %v3047, %v3046
      %v3071 = vpack.c.b16 %v3049, %v3048
      %v3072 = vpack.c.b16 %v3051, %v3050
      %v3073 = vpack.c.b16 %v3053, %v3052
      %v3074 = vpack.c.b16 %v3055, %v3054
      %v3075 = vpack.c.b16 %v3057, %v3056
      %v3076 = vpack.c.b16 %v3059, %v3058
      %v3077 = vpack.c.b16 %v3061, %v3060
      %v3080 = vunpack.c.l.b16 %v2447
      %v3081 = vunpack.c.l.b16 %v2448
      %v3082 = vpack.c.b16 %v3081, %v3080
      %v3084 = vsel %vm2598, %v3062, 0
      %v3087 = vsel %vm2598, %v3063, 0
      %v3090 = vsel %vm2598, %v3064, 0
      %v3093 = vsel %vm2598, %v3065, 0
      %v3096 = vsel %vm2598, %v3066, 0
      %v3099 = vsel %vm2598, %v3067, 0
      %v3102 = vsel %vm2598, %v3068, 0
      %v3105 = vsel %vm2598, %v3069, 0
      %v3108 = vsel %vm2598, %v3070, 0
      %v3111 = vsel %vm2598, %v3071, 0
      %v3114 = vsel %vm2598, %v3072, 0
      %v3117 = vsel %vm2598, %v3073, 0
      %v3120 = vsel %vm2598, %v3074, 0
      %v3123 = vsel %vm2598, %v3075, 0
      %v3126 = vsel %vm2598, %v3076, 0
      %v3129 = vsel %vm2598, %v3077, 0
      %v3132 = vsel %vm2647, %v3082, 0
      %3134 = vmatpush.bf16.msra.mxu0 0
      %3135 = vmatpush.bf16.msra.mxu0 0
      %3136 = vmatpush.bf16.msra.mxu0 0
      %3137 = vmatpush.bf16.msra.mxu0 0
      %3138 = vmatpush.bf16.msra.mxu0 0
      %3139 = vmatpush.bf16.msra.mxu0 0
      %3140 = vmatpush.bf16.msra.mxu0 0
      %3141 = vmatpush.bf16.msra.mxu0 %v3132
      %3142 = vmatmul.bf16.gmra.mxu0 %v3084
      %v3143 = vpop.f32.mrf.mxu0
      %v3144 = vadd.f32 0.0, %v3143
      %v3145 = vpop.f32.mrf.mxu0
      %v3146 = vadd.f32 0.0, %v3145
      %3147 = vmatmul.bf16.gmra.mxu0 %v3087
      %v3148 = vpop.f32.mrf.mxu0
      %v3149 = vadd.f32 0.0, %v3148
      %v3150 = vpop.f32.mrf.mxu0
      %v3151 = vadd.f32 0.0, %v3150
      %3152 = vmatmul.bf16.gmra.mxu0 %v3090
      %v3153 = vpop.f32.mrf.mxu0
      %v3154 = vadd.f32 0.0, %v3153
      %v3155 = vpop.f32.mrf.mxu0
      %v3156 = vadd.f32 0.0, %v3155
      %3157 = vmatmul.bf16.gmra.mxu0 %v3093
      %v3158 = vpop.f32.mrf.mxu0
      %v3159 = vadd.f32 0.0, %v3158
      %v3160 = vpop.f32.mrf.mxu0
      %v3161 = vadd.f32 0.0, %v3160
      %3162 = vmatmul.bf16.gmra.mxu0 %v3096
      %v3163 = vpop.f32.mrf.mxu0
      %v3164 = vadd.f32 0.0, %v3163
      %v3165 = vpop.f32.mrf.mxu0
      %v3166 = vadd.f32 0.0, %v3165
      %3167 = vmatmul.bf16.gmra.mxu0 %v3099
      %v3168 = vpop.f32.mrf.mxu0
      %v3169 = vadd.f32 0.0, %v3168
      %v3170 = vpop.f32.mrf.mxu0
      %v3171 = vadd.f32 0.0, %v3170
      %3172 = vmatmul.bf16.gmra.mxu0 %v3102
      %v3173 = vpop.f32.mrf.mxu0
      %v3174 = vadd.f32 0.0, %v3173
      %v3175 = vpop.f32.mrf.mxu0
      %v3176 = vadd.f32 0.0, %v3175
      %3177 = vmatmul.bf16.gmra.mxu0 %v3105
      %v3178 = vpop.f32.mrf.mxu0
      %v3179 = vadd.f32 0.0, %v3178
      %v3180 = vpop.f32.mrf.mxu0
      %v3181 = vadd.f32 0.0, %v3180
      %3182 = vmatmul.bf16.gmra.mxu0 %v3108
      %v3183 = vpop.f32.mrf.mxu0
      %v3184 = vadd.f32 0.0, %v3183
      %v3185 = vpop.f32.mrf.mxu0
      %v3186 = vadd.f32 0.0, %v3185
      %3187 = vmatmul.bf16.gmra.mxu0 %v3111
      %v3188 = vpop.f32.mrf.mxu0
      %v3189 = vadd.f32 0.0, %v3188
      %v3190 = vpop.f32.mrf.mxu0
      %v3191 = vadd.f32 0.0, %v3190
      %3192 = vmatmul.bf16.gmra.mxu0 %v3114
      %v3193 = vpop.f32.mrf.mxu0
      %v3194 = vadd.f32 0.0, %v3193
      %v3195 = vpop.f32.mrf.mxu0
      %v3196 = vadd.f32 0.0, %v3195
      %3197 = vmatmul.bf16.gmra.mxu0 %v3117
      %v3198 = vpop.f32.mrf.mxu0
      %v3199 = vadd.f32 0.0, %v3198
      %v3200 = vpop.f32.mrf.mxu0
      %v3201 = vadd.f32 0.0, %v3200
      %3202 = vmatmul.bf16.gmra.mxu0 %v3120
      %v3203 = vpop.f32.mrf.mxu0
      %v3204 = vadd.f32 0.0, %v3203
      %v3205 = vpop.f32.mrf.mxu0
      %v3206 = vadd.f32 0.0, %v3205
      %3207 = vmatmul.bf16.gmra.mxu0 %v3123
      %v3208 = vpop.f32.mrf.mxu0
      %v3209 = vadd.f32 0.0, %v3208
      %v3210 = vpop.f32.mrf.mxu0
      %v3211 = vadd.f32 0.0, %v3210
      %3212 = vmatmul.bf16.gmra.mxu0 %v3126
      %v3213 = vpop.f32.mrf.mxu0
      %v3214 = vadd.f32 0.0, %v3213
      %v3215 = vpop.f32.mrf.mxu0
      %v3216 = vadd.f32 0.0, %v3215
      %3217 = vmatmul.bf16.gmra.mxu0 %v3129
      %v3218 = vpop.f32.mrf.mxu0
      %v3219 = vadd.f32 0.0, %v3218
      %v3220 = vpop.f32.mrf.mxu0
      %v3221 = vadd.f32 0.0, %v3220
      %3222 = vdwg.mxu0
      %v3223 = vadd.f32 %v2886, %v3144
      %v3224 = vadd.f32 %v2888, %v3146
      %v3225 = vadd.f32 %v2891, %v3149
      %v3226 = vadd.f32 %v2893, %v3151
      %v3227 = vadd.f32 %v2896, %v3154
      %v3228 = vadd.f32 %v2898, %v3156
      %v3229 = vadd.f32 %v2901, %v3159
      %v3230 = vadd.f32 %v2903, %v3161
      %v3231 = vadd.f32 %v2906, %v3164
      %v3232 = vadd.f32 %v2908, %v3166
      %v3233 = vadd.f32 %v2911, %v3169
      %v3234 = vadd.f32 %v2913, %v3171
      %v3235 = vadd.f32 %v2916, %v3174
      %v3236 = vadd.f32 %v2918, %v3176
      %v3237 = vadd.f32 %v2921, %v3179
      %v3238 = vadd.f32 %v2923, %v3181
      %v3239 = vadd.f32 %v2926, %v3184
      %v3240 = vadd.f32 %v2928, %v3186
      %v3241 = vadd.f32 %v2931, %v3189
      %v3242 = vadd.f32 %v2933, %v3191
      %v3243 = vadd.f32 %v2936, %v3194
      %v3244 = vadd.f32 %v2938, %v3196
      %v3245 = vadd.f32 %v2941, %v3199
      %v3246 = vadd.f32 %v2943, %v3201
      %v3247 = vadd.f32 %v2946, %v3204
      %v3248 = vadd.f32 %v2948, %v3206
      %v3249 = vadd.f32 %v2951, %v3209
      %v3250 = vadd.f32 %v2953, %v3211
      %v3251 = vadd.f32 %v2956, %v3214
      %v3252 = vadd.f32 %v2958, %v3216
      %v3253 = vadd.f32 %v2961, %v3219
      %v3254 = vadd.f32 %v2963, %v3221
      %3255 = vst.msk [vmem:[#allocation2] sm:$0xff] %vm397, %v3223
      %3256 = vst.msk [vmem:[#allocation2 + $0x8] sm:$0xff] %vm397, %v3224
      %3257 = vst.msk [vmem:[#allocation2 + $0x10] sm:$0xff] %vm397, %v3225
      %3258 = vst.msk [vmem:[#allocation2 + $0x18] sm:$0xff] %vm397, %v3226
      %3259 = vst.msk [vmem:[#allocation2 + $0x20] sm:$0xff] %vm397, %v3227
      %3260 = vst.msk [vmem:[#allocation2 + $0x28] sm:$0xff] %vm397, %v3228
      %3261 = vst.msk [vmem:[#allocation2 + $0x30] sm:$0xff] %vm397, %v3229
      %3262 = vst.msk [vmem:[#allocation2 + $0x38] sm:$0xff] %vm397, %v3230
      %3263 = vst.msk [vmem:[#allocation2 + $0x40] sm:$0xff] %vm397, %v3231
      %3264 = vst.msk [vmem:[#allocation2 + $0x48] sm:$0xff] %vm397, %v3232
      %3265 = vst.msk [vmem:[#allocation2 + $0x50] sm:$0xff] %vm397, %v3233
      %3266 = vst.msk [vmem:[#allocation2 + $0x58] sm:$0xff] %vm397, %v3234
      %3267 = vst.msk [vmem:[#allocation2 + $0x60] sm:$0xff] %vm397, %v3235
      %3268 = vst.msk [vmem:[#allocation2 + $0x68] sm:$0xff] %vm397, %v3236
      %3269 = vst.msk [vmem:[#allocation2 + $0x70] sm:$0xff] %vm397, %v3237
      %3270 = vst.msk [vmem:[#allocation2 + $0x78] sm:$0xff] %vm397, %v3238
      %3271 = vst.msk [vmem:[#allocation2 + $0x80] sm:$0xff] %vm397, %v3239
      %3272 = vst.msk [vmem:[#allocation2 + $0x88] sm:$0xff] %vm397, %v3240
      %3273 = vst.msk [vmem:[#allocation2 + $0x90] sm:$0xff] %vm397, %v3241
      %3274 = vst.msk [vmem:[#allocation2 + $0x98] sm:$0xff] %vm397, %v3242
      %3275 = vst.msk [vmem:[#allocation2 + $0xa0] sm:$0xff] %vm397, %v3243
      %3276 = vst.msk [vmem:[#allocation2 + $0xa8] sm:$0xff] %vm397, %v3244
      %3277 = vst.msk [vmem:[#allocation2 + $0xb0] sm:$0xff] %vm397, %v3245
      %3278 = vst.msk [vmem:[#allocation2 + $0xb8] sm:$0xff] %vm397, %v3246
      %3279 = vst.msk [vmem:[#allocation2 + $0xc0] sm:$0xff] %vm397, %v3247
      %3280 = vst.msk [vmem:[#allocation2 + $0xc8] sm:$0xff] %vm397, %v3248
      %3281 = vst.msk [vmem:[#allocation2 + $0xd0] sm:$0xff] %vm397, %v3249
      %3282 = vst.msk [vmem:[#allocation2 + $0xd8] sm:$0xff] %vm397, %v3250
      %3283 = vst.msk [vmem:[#allocation2 + $0xe0] sm:$0xff] %vm397, %v3251
      %3284 = vst.msk [vmem:[#allocation2 + $0xe8] sm:$0xff] %vm397, %v3252
      %3285 = vst.msk [vmem:[#allocation2 + $0xf0] sm:$0xff] %vm397, %v3253
      %3286 = vst.msk [vmem:[#allocation2 + $0xf8] sm:$0xff] %vm397, %v3254
      %v3287 = vld [vmem:[%s209] sm:$0xff]
      %v3288 = vld [vmem:[%s209 + $0x8] sm:$0xff]
      %v3289 = vld [vmem:[%s209 + $0x10] sm:$0xff]
      %v3290 = vld [vmem:[%s209 + $0x18] sm:$0xff]
      %v3291 = vld [vmem:[%s209 + $0x20] sm:$0xff]
      %v3292 = vld [vmem:[%s209 + $0x28] sm:$0xff]
      %v3293 = vld [vmem:[%s209 + $0x30] sm:$0xff]
      %v3294 = vld [vmem:[%s209 + $0x38] sm:$0xff]
      %v3295 = vld [vmem:[%s209 + $0x40] sm:$0xff]
      %v3296 = vld [vmem:[%s209 + $0x48] sm:$0xff]
      %v3297 = vld [vmem:[%s209 + $0x50] sm:$0xff]
      %v3298 = vld [vmem:[%s209 + $0x58] sm:$0xff]
      %v3299 = vld [vmem:[%s209 + $0x60] sm:$0xff]
      %v3300 = vld [vmem:[%s209 + $0x68] sm:$0xff]
      %v3301 = vld [vmem:[%s209 + $0x70] sm:$0xff]
      %v3302 = vld [vmem:[%s209 + $0x78] sm:$0xff]
      %v3303 = vld [vmem:[%s209 + $0x80] sm:$0xff]
      %v3304 = vld [vmem:[%s209 + $0x88] sm:$0xff]
      %v3305 = vld [vmem:[%s209 + $0x90] sm:$0xff]
      %v3306 = vld [vmem:[%s209 + $0x98] sm:$0xff]
      %v3307 = vld [vmem:[%s209 + $0xa0] sm:$0xff]
      %v3308 = vld [vmem:[%s209 + $0xa8] sm:$0xff]
      %v3309 = vld [vmem:[%s209 + $0xb0] sm:$0xff]
      %v3310 = vld [vmem:[%s209 + $0xb8] sm:$0xff]
      %v3311 = vld [vmem:[%s209 + $0xc0] sm:$0xff]
      %v3312 = vld [vmem:[%s209 + $0xc8] sm:$0xff]
      %v3313 = vld [vmem:[%s209 + $0xd0] sm:$0xff]
      %v3314 = vld [vmem:[%s209 + $0xd8] sm:$0xff]
      %v3315 = vld [vmem:[%s209 + $0xe0] sm:$0xff]
      %v3316 = vld [vmem:[%s209 + $0xe8] sm:$0xff]
      %v3317 = vld [vmem:[%s209 + $0xf0] sm:$0xff]
      %v3318 = vld [vmem:[%s209 + $0xf8] sm:$0xff]
      %v3319 = vadd.f32 %v3223, %v3287
      %v3320 = vadd.f32 %v3224, %v3288
      %v3321 = vadd.f32 %v3225, %v3289
      %v3322 = vadd.f32 %v3226, %v3290
      %v3323 = vadd.f32 %v3227, %v3291
      %v3324 = vadd.f32 %v3228, %v3292
      %v3325 = vadd.f32 %v3229, %v3293
      %v3326 = vadd.f32 %v3230, %v3294
      %v3327 = vadd.f32 %v3231, %v3295
      %v3328 = vadd.f32 %v3232, %v3296
      %v3329 = vadd.f32 %v3233, %v3297
      %v3330 = vadd.f32 %v3234, %v3298
      %v3331 = vadd.f32 %v3235, %v3299
      %v3332 = vadd.f32 %v3236, %v3300
      %v3333 = vadd.f32 %v3237, %v3301
      %v3334 = vadd.f32 %v3238, %v3302
      %v3335 = vadd.f32 %v3239, %v3303
      %v3336 = vadd.f32 %v3240, %v3304
      %v3337 = vadd.f32 %v3241, %v3305
      %v3338 = vadd.f32 %v3242, %v3306
      %v3339 = vadd.f32 %v3243, %v3307
      %v3340 = vadd.f32 %v3244, %v3308
      %v3341 = vadd.f32 %v3245, %v3309
      %v3342 = vadd.f32 %v3246, %v3310
      %v3343 = vadd.f32 %v3247, %v3311
      %v3344 = vadd.f32 %v3248, %v3312
      %v3345 = vadd.f32 %v3249, %v3313
      %v3346 = vadd.f32 %v3250, %v3314
      %v3347 = vadd.f32 %v3251, %v3315
      %v3348 = vadd.f32 %v3252, %v3316
      %v3349 = vadd.f32 %v3253, %v3317
      %v3350 = vadd.f32 %v3254, %v3318
      %3351 = vst.msk [vmem:[%s209] sm:$0xff] %vm397, %v3319
      %3352 = vst.msk [vmem:[%s209 + $0x8] sm:$0xff] %vm397, %v3320
      %3353 = vst.msk [vmem:[%s209 + $0x10] sm:$0xff] %vm397, %v3321
      %3354 = vst.msk [vmem:[%s209 + $0x18] sm:$0xff] %vm397, %v3322
      %3355 = vst.msk [vmem:[%s209 + $0x20] sm:$0xff] %vm397, %v3323
      %3356 = vst.msk [vmem:[%s209 + $0x28] sm:$0xff] %vm397, %v3324
      %3357 = vst.msk [vmem:[%s209 + $0x30] sm:$0xff] %vm397, %v3325
      %3358 = vst.msk [vmem:[%s209 + $0x38] sm:$0xff] %vm397, %v3326
      %3359 = vst.msk [vmem:[%s209 + $0x40] sm:$0xff] %vm397, %v3327
      %3360 = vst.msk [vmem:[%s209 + $0x48] sm:$0xff] %vm397, %v3328
      %3361 = vst.msk [vmem:[%s209 + $0x50] sm:$0xff] %vm397, %v3329
      %3362 = vst.msk [vmem:[%s209 + $0x58] sm:$0xff] %vm397, %v3330
      %3363 = vst.msk [vmem:[%s209 + $0x60] sm:$0xff] %vm397, %v3331
      %3364 = vst.msk [vmem:[%s209 + $0x68] sm:$0xff] %vm397, %v3332
      %3365 = vst.msk [vmem:[%s209 + $0x70] sm:$0xff] %vm397, %v3333
      %3366 = vst.msk [vmem:[%s209 + $0x78] sm:$0xff] %vm397, %v3334
      %3367 = vst.msk [vmem:[%s209 + $0x80] sm:$0xff] %vm397, %v3335
      %3368 = vst.msk [vmem:[%s209 + $0x88] sm:$0xff] %vm397, %v3336
      %3369 = vst.msk [vmem:[%s209 + $0x90] sm:$0xff] %vm397, %v3337
      %3370 = vst.msk [vmem:[%s209 + $0x98] sm:$0xff] %vm397, %v3338
      %3371 = vst.msk [vmem:[%s209 + $0xa0] sm:$0xff] %vm397, %v3339
      %3372 = vst.msk [vmem:[%s209 + $0xa8] sm:$0xff] %vm397, %v3340
      %3373 = vst.msk [vmem:[%s209 + $0xb0] sm:$0xff] %vm397, %v3341
      %3374 = vst.msk [vmem:[%s209 + $0xb8] sm:$0xff] %vm397, %v3342
      %3375 = vst.msk [vmem:[%s209 + $0xc0] sm:$0xff] %vm397, %v3343
      %3376 = vst.msk [vmem:[%s209 + $0xc8] sm:$0xff] %vm397, %v3344
      %3377 = vst.msk [vmem:[%s209 + $0xd0] sm:$0xff] %vm397, %v3345
      %3378 = vst.msk [vmem:[%s209 + $0xd8] sm:$0xff] %vm397, %v3346
      %3379 = vst.msk [vmem:[%s209 + $0xe0] sm:$0xff] %vm397, %v3347
      %3380 = vst.msk [vmem:[%s209 + $0xe8] sm:$0xff] %vm397, %v3348
      %3381 = vst.msk [vmem:[%s209 + $0xf0] sm:$0xff] %vm397, %v3349
      %3382 = vst.msk [vmem:[%s209 + $0xf8] sm:$0xff] %vm397, %v3350
      %p3383 = scmp.lt.s32.totalorder %s19, 1
      %s3384 = scalar_select %p3383, %s19, 1
      %s3385 = smul.addr %s3384, 32
      %s3386 = smul.addr %s3385, 8
      %s3387 = scalar_lea.vmem %s4, %s3386
      // Predicated region
      $region41: #{cond_crp_block.1} parent=35 // pred_check
        %p3388 = pneg %p134
      $region42: #{cond_crp_block.1} parent=35 // pred_check_branch
        %3390 = sbr.rel (%p3388) target = $region44
      $region43: #{cond_crp_block.1} parent=35 // pred_region
        _
      $region44: #{cond_crp_block.1} parent=35 // pred_fallthru
        _
    $region36: #{cond_crp_block.1} parent=5 // pred_fallthru
      _
    %p3391 = scmp.le.s32.totalorder 2, %s10
    // Predicated region
    $region45: #{cond_crp_block.1} parent=5 // pred_check
      %p3392 = pneg %p3391
    $region46: #{cond_crp_block.1} parent=5 // pred_check_branch
      %3394 = sbr.rel (%p3392) target = $region48
    $region47: #{cond_crp_block.1} parent=5 // pred_region
      %s3395 = ssub.s32 %s10, 2
      // Predicated region
      $region49: #{cond_crp_block.1} parent=47 // pred_check
        %p3396 = pneg %p140
      $region50: #{cond_crp_block.1} parent=47 // pred_check_branch
        %3398 = sbr.rel (%p3396) target = $region52
      $region51: #{cond_crp_block.1} parent=47 // pred_region
        %p3399 = scmp.lt.s32.totalorder %s21, 1
        %s3400 = scalar_select %p3399, %s21, 1
        %s3401 = smul.addr %s3400, 32
        %s3402 = smul.addr %s3401, 8
        %s3403 = scalar_lea.vmem %s4, %s3402
      $region52: #{cond_crp_block.1} parent=47 // pred_fallthru
        _
    $region48: #{cond_crp_block.1} parent=5 // pred_fallthru
      _
  $region6: #{cond_crp_block.1} parent=0 // loop_footer
    %s14 = sadd.s32 1, %s10
  $region7: #{cond_crp_block.1} parent=0 // loop_footer_branch
    %9 = sbr.rel target = $region3
  $region8: #{cond_crp_block.1} parent=0 // loop_exit
    _

</llo_original>
